<compile_context>
chip_gen: v7x
topology: tpu7x:2x2x1
jax: 0.10.0
libtpu: 0.0.40
codegen_flags: <defaults>
</compile_context>

<pallas_src>
import functools

import jax
import jax.numpy as jnp
from jax.experimental import pallas as pl
from jax.experimental.pallas import tpu as pltpu

NEG_SLOPE = 0.01     # F.leaky_relu default
OUT_LANES = 128      # lane-dense padded width of the 3-wide output layer


def _round_up(x, m):
    return int(pl.cdiv(x, m) * m)


def _leaky_relu(x):
    return jnp.where(x > 0, x, NEG_SLOPE * x)


def _mlp_kernel(x_ref, w1_ref, b1_ref, w2_ref, b2_ref, w3_ref, b3_ref, o_ref):
    x = x_ref[...]                                           # (tm, Din) bf16
    h1 = jnp.dot(x, w1_ref[...],
                 preferred_element_type=jnp.float32) + b1_ref[...]
    h1 = _leaky_relu(h1)                                     # f32
    h2 = jnp.dot(h1.astype(jnp.bfloat16), w2_ref[...],
                 preferred_element_type=jnp.float32) + b2_ref[...]
    h2 = _leaky_relu(h2)                                     # f32
    o = jnp.dot(h2.astype(jnp.bfloat16), w3_ref[...],
                preferred_element_type=jnp.float32) + b3_ref[...]
    o_ref[...] = o.astype(o_ref.dtype)                       # (tm, 128) f32


def mlp_pallas(x, w1, b1, w2, b2, w3, b3, *, tm=512):
    """x: (M, Din) bf16 -> (M, OUT_LANES) f32 through the 3-layer MLP."""
    M, Din = x.shape
    H = w1.shape[1]
    Dout = w3.shape[1]                                       # 128 (lane-padded)

    # Clamp the row tile so small problems don't pad all the way to 512 rows;
    # keep it a multiple of 16 (bf16 sublane packing).
    tm = min(tm, _round_up(M, 16))
    m_pad = _round_up(M, tm)
    if m_pad != M:
        x = jnp.pad(x, ((0, m_pad - M), (0, 0)))

    out = pl.pallas_call(
        _mlp_kernel,
        out_shape=jax.ShapeDtypeStruct((m_pad, Dout), jnp.float32),
        grid_spec=pltpu.PrefetchScalarGridSpec(
            num_scalar_prefetch=0,
            grid=(m_pad // tm,),
            in_specs=[
                pl.BlockSpec((tm, Din), lambda i: (i, 0)),   # x rows (pipelined)
                pl.BlockSpec((Din, H), lambda i: (0, 0)),    # w1 (constant index)
                pl.BlockSpec((1, H), lambda i: (0, 0)),      # b1
                pl.BlockSpec((H, H), lambda i: (0, 0)),      # w2
                pl.BlockSpec((1, H), lambda i: (0, 0)),      # b2
                pl.BlockSpec((H, Dout), lambda i: (0, 0)),   # w3 (lane-padded)
                pl.BlockSpec((1, Dout), lambda i: (0, 0)),   # b3 (lane-padded)
            ],
            out_specs=pl.BlockSpec((tm, Dout), lambda i: (i, 0)),
        ),
        compiler_params=pltpu.CompilerParams(
            dimension_semantics=("parallel",),
            vmem_limit_bytes=32 * 1024 * 1024,
        ),
    )(x, w1, b1, w2, b2, w3, b3)
    return out[:M]


def _fps_single(points, n_sampling):
    """Deterministic farthest point sampling (random_start=False -> start at 0).

    points: (N, 3). Returns (n_sampling,) int32 indices into points.
    """
    # TODO(synk): torch_cluster.fps tie-breaking may differ; semantics (greedy
    # max-min-distance selection starting at index 0) are reproduced.
    sel0 = jnp.zeros((n_sampling,), jnp.int32)
    d0 = jnp.sum((points - points[0]) ** 2, axis=-1)

    def body(k, state):
        sel, dists = state
        idx = jnp.argmax(dists).astype(jnp.int32)
        sel = sel.at[k].set(idx)
        new_d = jnp.sum((points - points[idx]) ** 2, axis=-1)
        return sel, jnp.minimum(dists, new_d)

    sel, _ = jax.lax.fori_loop(1, n_sampling, body, (sel0, d0))
    return sel


class PartDecoderPallas:
    def __init__(self, feat_len, recon_M=128, key=None):
        self.feat_len = feat_len
        self.recon_M = recon_M
        if key is None:
            key = jax.random.PRNGKey(0)
        k1, k2, k3, k4, k5, k6 = jax.random.split(key, 6)
        din = feat_len + 3
        h = 1024

        # Deterministic init (PyTorch nn.Linear-style uniform bounds).
        def lin(kw, kb, fan_in, fan_out):
            bound = 1.0 / (fan_in ** 0.5)
            w = jax.random.uniform(kw, (fan_in, fan_out), jnp.float32, -bound, bound)
            b = jax.random.uniform(kb, (1, fan_out), jnp.float32, -bound, bound)
            return w, b

        w1, self.b1 = lin(k1, k2, din, h)
        w2, self.b2 = lin(k3, k4, h, h)
        w3, b3 = lin(k5, k6, h, 3)

        # Lane-dense padding of the 3-wide output layer to 128 columns (zeros
        # in the extra columns; wrapper slices [:, :3]).
        w3p = jnp.zeros((h, OUT_LANES), jnp.float32).at[:, :3].set(w3)
        self.b3p = jnp.zeros((1, OUT_LANES), jnp.float32).at[:, :3].set(b3)

        # bf16 weights (f32 biases; f32 accumulation inside the kernel).
        self.w1 = w1.astype(jnp.bfloat16)
        self.w2 = w2.astype(jnp.bfloat16)
        self.w3p = w3p.astype(jnp.bfloat16)

    def _concat_input(self, feat, pc):
        B, F = feat.shape
        N = pc.shape[0]
        # TODO(synk): layer 1 could be split into feat@W1[:F] (per batch row)
        # + pc@W1[F:] (per point) to avoid materializing the (B*N, F+3) concat.
        return jnp.concatenate(
            [
                jnp.broadcast_to(feat[:, None, :], (B, N, F)),
                jnp.broadcast_to(pc[None, :, :], (B, N, 3)),
            ],
            axis=-1,
        )

    def __call__(self, feat, pc):
        B, F = feat.shape
        N = pc.shape[0]
        net_in = (
            self._concat_input(feat, pc)
            .reshape(B * N, F + 3)
            .astype(jnp.bfloat16)
        )

        out = mlp_pallas(
            net_in, self.w1, self.b1, self.w2, self.b2, self.w3p, self.b3p
        )
        net = out[:, :3].reshape(B, N, 3)

        if self.recon_M < N:
            fps_idx = jax.vmap(
                functools.partial(_fps_single, n_sampling=self.recon_M)
            )(net)
            net = jnp.take_along_axis(net, fps_idx[..., None], axis=1)
        return net

    # Pure-JAX reference mirroring the same bf16-weight / f32-accumulate recipe.
    def reference(self, feat, pc):
        N = pc.shape[0]
        net = self._concat_input(feat, pc).astype(jnp.bfloat16)
        h1 = _leaky_relu(
            jnp.dot(net, self.w1, preferred_element_type=jnp.float32) + self.b1
        )
        h2 = _leaky_relu(
            jnp.dot(h1.astype(jnp.bfloat16), self.w2,
                    preferred_element_type=jnp.float32) + self.b2
        )
        o = jnp.dot(h2.astype(jnp.bfloat16), self.w3p,
                    preferred_element_type=jnp.float32) + self.b3p
        net = o[..., :3]
        if self.recon_M < N:
            fps_idx = jax.vmap(
                functools.partial(_fps_single, n_sampling=self.recon_M)
            )(net)
            net = jnp.take_along_axis(net, fps_idx[..., None], axis=1)
        return net


if __name__ == "__main__":
    key = jax.random.PRNGKey(0)
    k_feat, k_pc, k_params = jax.random.split(key, 3)

    # Small shapes consistent with the module: feat (B, feat_len), pc (N, 3).
    B, feat_len, N, recon_M = 2, 13, 16, 8

    feat = jax.random.normal(k_feat, (B, feat_len), jnp.float32)
    pc = jax.random.normal(k_pc, (N, 3), jnp.float32)

    model = PartDecoderPallas(feat_len=feat_len, recon_M=recon_M, key=k_params)

    out = jax.block_until_ready(model(feat, pc))
    ref = jax.block_until_ready(model.reference(feat, pc))

    assert out.shape == (B, recon_M, 3), out.shape
    assert jnp.allclose(out, ref, rtol=1e-3, atol=1e-3), (
        float(jnp.max(jnp.abs(out - ref)))
    )
    print("KERNEL_OK")
</pallas_src>

<mosaic_0001>
module attributes {stable_mosaic.version = 11 : i64} {
  func.func @_mlp_kernel(%arg0: i32, %arg1: memref<32x16xbf16, #tpu.memory_space<vmem>>, %arg2: memref<16x1024xbf16, #tpu.memory_space<vmem>>, %arg3: memref<1x1024xf32, #tpu.memory_space<vmem>>, %arg4: memref<1024x1024xbf16, #tpu.memory_space<vmem>>, %arg5: memref<1x1024xf32, #tpu.memory_space<vmem>>, %arg6: memref<1024x128xbf16, #tpu.memory_space<vmem>>, %arg7: memref<1x128xf32, #tpu.memory_space<vmem>>, %arg8: memref<32x128xf32, #tpu.memory_space<vmem>>) attributes {dimension_semantics = [#tpu.dimension_semantics<parallel>], iteration_bounds = array<i64: 1>, scalar_prefetch = 0 : i64, scratch_operands = 0 : i64, tpu.core_type = #tpu.core_type<tc>, window_params = [{transform_indices = @transform_0, window_bounds = array<i64: 32, 16>}, {pipeline_mode = #tpu.pipeline_mode<synchronous>, transform_indices = @transform_1, window_bounds = array<i64: 16, 1024>}, {pipeline_mode = #tpu.pipeline_mode<synchronous>, transform_indices = @transform_2, window_bounds = array<i64: 1, 1024>}, {pipeline_mode = #tpu.pipeline_mode<synchronous>, transform_indices = @transform_3, window_bounds = array<i64: 1024, 1024>}, {pipeline_mode = #tpu.pipeline_mode<synchronous>, transform_indices = @transform_4, window_bounds = array<i64: 1, 1024>}, {pipeline_mode = #tpu.pipeline_mode<synchronous>, transform_indices = @transform_5, window_bounds = array<i64: 1024, 128>}, {pipeline_mode = #tpu.pipeline_mode<synchronous>, transform_indices = @transform_6, window_bounds = array<i64: 1, 128>}, {transform_indices = @transform_7, window_bounds = array<i64: 32, 128>}]} {
    %c0 = arith.constant 0 : index
    %c0_0 = arith.constant 0 : index
    %0 = vector.load %arg1[%c0, %c0_0] : memref<32x16xbf16, #tpu.memory_space<vmem>>, vector<32x16xbf16>
    %c0_1 = arith.constant 0 : index
    %c0_2 = arith.constant 0 : index
    %1 = vector.load %arg2[%c0_1, %c0_2] : memref<16x1024xbf16, #tpu.memory_space<vmem>>, vector<16x1024xbf16>
    %cst = arith.constant dense<0.000000e+00> : vector<32x1024xf32>
    %2 = tpu.matmul %0, %1, %cst {dimension_numbers = #tpu.dot_dimension_numbers<[1], [0], [0], [1], [0, 0, 1, 1], [], []>} : vector<32x16xbf16>, vector<16x1024xbf16>, vector<32x1024xf32> -> vector<32x1024xf32>
    %c0_3 = arith.constant 0 : index
    %c0_4 = arith.constant 0 : index
    %3 = vector.load %arg3[%c0_3, %c0_4] : memref<1x1024xf32, #tpu.memory_space<vmem>>, vector<1x1024xf32>
    %4 = vector.broadcast %3 : vector<1x1024xf32> to vector<32x1024xf32>
    %5 = arith.addf %2, %4 : vector<32x1024xf32>
    %cst_5 = arith.constant 0.000000e+00 : f32
    %6 = vector.broadcast %cst_5 : f32 to vector<32x1024xf32>
    %7 = arith.cmpf ogt, %5, %6 : vector<32x1024xf32>
    %cst_6 = arith.constant 0.00999999977 : f32
    %8 = vector.broadcast %cst_6 : f32 to vector<32x1024xf32>
    %9 = arith.mulf %8, %5 : vector<32x1024xf32>
    %10 = arith.select %7, %5, %9 : vector<32x1024xi1>, vector<32x1024xf32>
    %11 = arith.truncf %10 : vector<32x1024xf32> to vector<32x1024xbf16>
    %c0_7 = arith.constant 0 : index
    %c0_8 = arith.constant 0 : index
    %12 = vector.load %arg4[%c0_7, %c0_8] : memref<1024x1024xbf16, #tpu.memory_space<vmem>>, vector<1024x1024xbf16>
    %cst_9 = arith.constant dense<0.000000e+00> : vector<32x1024xf32>
    %13 = tpu.matmul %11, %12, %cst_9 {dimension_numbers = #tpu.dot_dimension_numbers<[1], [0], [0], [1], [0, 0, 1, 1], [], []>} : vector<32x1024xbf16>, vector<1024x1024xbf16>, vector<32x1024xf32> -> vector<32x1024xf32>
    %c0_10 = arith.constant 0 : index
    %c0_11 = arith.constant 0 : index
    %14 = vector.load %arg5[%c0_10, %c0_11] : memref<1x1024xf32, #tpu.memory_space<vmem>>, vector<1x1024xf32>
    %15 = vector.broadcast %14 : vector<1x1024xf32> to vector<32x1024xf32>
    %16 = arith.addf %13, %15 : vector<32x1024xf32>
    %cst_12 = arith.constant 0.000000e+00 : f32
    %17 = vector.broadcast %cst_12 : f32 to vector<32x1024xf32>
    %18 = arith.cmpf ogt, %16, %17 : vector<32x1024xf32>
    %cst_13 = arith.constant 0.00999999977 : f32
    %19 = vector.broadcast %cst_13 : f32 to vector<32x1024xf32>
    %20 = arith.mulf %19, %16 : vector<32x1024xf32>
    %21 = arith.select %18, %16, %20 : vector<32x1024xi1>, vector<32x1024xf32>
    %22 = arith.truncf %21 : vector<32x1024xf32> to vector<32x1024xbf16>
    %c0_14 = arith.constant 0 : index
    %c0_15 = arith.constant 0 : index
    %23 = vector.load %arg6[%c0_14, %c0_15] : memref<1024x128xbf16, #tpu.memory_space<vmem>>, vector<1024x128xbf16>
    %cst_16 = arith.constant dense<0.000000e+00> : vector<32x128xf32>
    %24 = tpu.matmul %22, %23, %cst_16 {dimension_numbers = #tpu.dot_dimension_numbers<[1], [0], [0], [1], [0, 0, 1, 1], [], []>} : vector<32x1024xbf16>, vector<1024x128xbf16>, vector<32x128xf32> -> vector<32x128xf32>
    %c0_17 = arith.constant 0 : index
    %c0_18 = arith.constant 0 : index
    %25 = vector.load %arg7[%c0_17, %c0_18] : memref<1x128xf32, #tpu.memory_space<vmem>>, vector<1x128xf32>
    %26 = vector.broadcast %25 : vector<1x128xf32> to vector<32x128xf32>
    %27 = arith.addf %24, %26 : vector<32x128xf32>
    %c0_19 = arith.constant 0 : index
    %c0_20 = arith.constant 0 : index
    %28 = vector.load %arg8[%c0_19, %c0_20] : memref<32x128xf32, #tpu.memory_space<vmem>>, vector<32x128xf32>
    tpu.vector_store %arg8[%c0_19, %c0_20], %27 {strides = array<i32>} : memref<32x128xf32, #tpu.memory_space<vmem>>, vector<32x128xf32>,
    return
  }
  func.func @transform_0(%arg0: i32) -> (i32, i32) {
    %c0_i32 = arith.constant 0 : i32
    %c0_i32_0 = arith.constant 0 : i32
    return %arg0, %c0_i32 : i32, i32
  }
  func.func @transform_1(%arg0: i32) -> (i32, i32) {
    %c0_i32 = arith.constant 0 : i32
    %c0_i32_0 = arith.constant 0 : i32
    %c0_i32_1 = arith.constant 0 : i32
    return %c0_i32, %c0_i32_0 : i32, i32
  }
  func.func @transform_2(%arg0: i32) -> (i32, i32) {
    %c0_i32 = arith.constant 0 : i32
    %c0_i32_0 = arith.constant 0 : i32
    %c0_i32_1 = arith.constant 0 : i32
    return %c0_i32, %c0_i32_0 : i32, i32
  }
  func.func @transform_3(%arg0: i32) -> (i32, i32) {
    %c0_i32 = arith.constant 0 : i32
    %c0_i32_0 = arith.constant 0 : i32
    %c0_i32_1 = arith.constant 0 : i32
    return %c0_i32, %c0_i32_0 : i32, i32
  }
  func.func @transform_4(%arg0: i32) -> (i32, i32) {
    %c0_i32 = arith.constant 0 : i32
    %c0_i32_0 = arith.constant 0 : i32
    %c0_i32_1 = arith.constant 0 : i32
    return %c0_i32, %c0_i32_0 : i32, i32
  }
  func.func @transform_5(%arg0: i32) -> (i32, i32) {
    %c0_i32 = arith.constant 0 : i32
    %c0_i32_0 = arith.constant 0 : i32
    %c0_i32_1 = arith.constant 0 : i32
    return %c0_i32, %c0_i32_0 : i32, i32
  }
  func.func @transform_6(%arg0: i32) -> (i32, i32) {
    %c0_i32 = arith.constant 0 : i32
    %c0_i32_0 = arith.constant 0 : i32
    %c0_i32_1 = arith.constant 0 : i32
    return %c0_i32, %c0_i32_0 : i32, i32
  }
  func.func @transform_7(%arg0: i32) -> (i32, i32) {
    %c0_i32 = arith.constant 0 : i32
    %c0_i32_0 = arith.constant 0 : i32
    return %arg0, %c0_i32 : i32, i32
  }
}

</mosaic_0001>

<llo_original>
// kernel: tpu_custom_call.1
$region0: #{tpu_custom_call.1}
  #allocation0 [shape = 'u32[]', space=smem, size = 0x4, offset = 0x4, fixed_abs, tag = 'smem constant byte address 0x4 - core index']
  #allocation1 [shape = 'u32[144,128]{1,0:T(1,128)}', space=vmem, size = 0x12000, scoped, tag = 'internal scratch']
  %s0 = inlined_call_operand.vmem [shape: bf16[32,16], index: 0, kind: input, shape index: {}]
  %s1 = inlined_call_operand.hbm [shape: bf16[16,1024], index: 1, kind: input, shape index: {}]
  %s2 = inlined_call_operand.hbm [shape: f32[1,1024], index: 2, kind: input, shape index: {}]
  %s3 = inlined_call_operand.hbm [shape: bf16[1024,1024], index: 3, kind: input, shape index: {}]
  %s4 = inlined_call_operand.hbm [shape: f32[1,1024], index: 4, kind: input, shape index: {}]
  %s5 = inlined_call_operand.hbm [shape: bf16[1024,128], index: 5, kind: input, shape index: {}]
  %s6 = inlined_call_operand.hbm [shape: f32[1,128], index: 6, kind: input, shape index: {}]
  %s7 = inlined_call_operand.hbm [shape: f32[32,128], index: 7, kind: output, shape index: {}]
  %s8 = sld [smem:[#allocation0]]
  $region62: #{tpu_custom_call.1} parent=0
    _
  %s10 = ssub.s32 1, %s8
  %s11 = scalar_select 0, %s10, %s8
  $region1: #{tpu_custom_call.1} parent=0
    #allocation2 [shape = 'u8[32768]{0}', space=vmem, size = 0x8000, scoped, tag = 'input window, operand 1, single buffered']
    #allocation3 [shape = 's32[1]{0}', space=sflag, size = 0x4, scoped, tag = 'scoped memory for tpu_custom_call.1']
    #allocation4 [shape = 's32[1]{0}', space=sflag, size = 0x4, scoped, tag = 'scoped memory for tpu_custom_call.1']
    #allocation5 [shape = 'u8[4096]{0}', space=vmem, size = 0x1000, scoped, tag = 'input window, operand 2, single buffered']
    #allocation6 [shape = 's32[1]{0}', space=sflag, size = 0x4, scoped, tag = 'scoped memory for tpu_custom_call.1']
    #allocation7 [shape = 'u8[2097152]{0}', space=vmem, size = 0x200000, scoped, tag = 'input window, operand 3, single buffered']
    #allocation8 [shape = 'u8[4096]{0}', space=vmem, size = 0x1000, scoped, tag = 'input window, operand 4, single buffered']
    #allocation9 [shape = 's32[1]{0}', space=sflag, size = 0x4, scoped, tag = 'scoped memory for tpu_custom_call.1']
    #allocation10 [shape = 'u8[262144]{0}', space=vmem, size = 0x40000, scoped, tag = 'input window, operand 5, single buffered']
    #allocation11 [shape = 'u8[512]{0}', space=vmem, size = 0x400, scoped, tag = 'input window, operand 6, single buffered']
    #allocation12 [shape = 's32[1]{0}', space=sflag, size = 0x4, scoped, tag = 'scoped memory for tpu_custom_call.1']
    #allocation13 [shape = 'u8[16384]{0}', space=vmem, size = 0x4000, scoped, tag = 'output window, operand 0, single buffered']
    %12 = vsyncpa [#allocation3], 0
    %13 = vsyncpa [#allocation6], 0
    %14 = vsyncpa [#allocation9], 0
    %15 = vsyncpa [#allocation12], 0
    %16 = vsyncpa [#allocation4], 0
    // Predicated region
    $region2: #{tpu_custom_call.1} parent=1 // pred_check
      _
    $region3: #{tpu_custom_call.1} parent=1 // pred_check_branch
      %18 = sbr.rel (0) target = $region5
    $region4: #{tpu_custom_call.1} parent=1 // pred_region
      _
    $region5: #{tpu_custom_call.1} parent=1 // pred_fallthru
      _
    // Predicated region
    $region6: #{tpu_custom_call.1} parent=1 // pred_check
      _
    $region7: #{tpu_custom_call.1} parent=1 // pred_check_branch
      %20 = sbr.rel (0) target = $region9
    $region8: #{tpu_custom_call.1} parent=1 // pred_region
      %s22 = ssub.s32 1024, 1024
      %23 = vsyncadd [#allocation3], %s22
      %s24 = sshll.u32 [#allocation2], 4
      %s25 = int_to_ptr.vmem [resolvable:$true] %s24
      %30 = dma.hbm_to_vmem [thread:$0]  %s1, 1024, %s25, [#allocation3], 512, 512, 32
    $region9: #{tpu_custom_call.1} parent=1 // pred_fallthru
      _
    // Predicated region
    $region10: #{tpu_custom_call.1} parent=1 // pred_check
      _
    $region11: #{tpu_custom_call.1} parent=1 // pred_check_branch
      %32 = sbr.rel (0) target = $region13
    $region12: #{tpu_custom_call.1} parent=1 // pred_region
      %s34 = ssub.s32 128, 128
      %35 = vsyncadd [#allocation6], %s34
      %s37 = sshll.u32 [#allocation5], 4
      %s38 = int_to_ptr.vmem [resolvable:$true] %s37
      %40 = dma.hbm_to_vmem [thread:$0]  %s2, 128, %s38, [#allocation6]
    $region13: #{tpu_custom_call.1} parent=1 // pred_fallthru
      _
    // Predicated region
    $region14: #{tpu_custom_call.1} parent=1 // pred_check
      _
    $region15: #{tpu_custom_call.1} parent=1 // pred_check_branch
      %42 = sbr.rel (0) target = $region17
    $region16: #{tpu_custom_call.1} parent=1 // pred_region
      %s44 = ssub.s32 65536, 65536
      %45 = vsyncadd [#allocation6], %s44
      %s46 = sshll.u32 [#allocation7], 4
      %s47 = int_to_ptr.vmem [resolvable:$true] %s46
      %52 = dma.hbm_to_vmem [thread:$0]  %s3, 65536, %s47, [#allocation6], 512, 512, 32
    $region17: #{tpu_custom_call.1} parent=1 // pred_fallthru
      _
    // Predicated region
    $region18: #{tpu_custom_call.1} parent=1 // pred_check
      _
    $region19: #{tpu_custom_call.1} parent=1 // pred_check_branch
      %54 = sbr.rel (0) target = $region21
    $region20: #{tpu_custom_call.1} parent=1 // pred_region
      %s56 = ssub.s32 128, 128
      %57 = vsyncadd [#allocation9], %s56
      %s59 = sshll.u32 [#allocation8], 4
      %s60 = int_to_ptr.vmem [resolvable:$true] %s59
      %62 = dma.hbm_to_vmem [thread:$0]  %s4, 128, %s60, [#allocation9]
    $region21: #{tpu_custom_call.1} parent=1 // pred_fallthru
      _
    // Predicated region
    $region22: #{tpu_custom_call.1} parent=1 // pred_check
      _
    $region23: #{tpu_custom_call.1} parent=1 // pred_check_branch
      %64 = sbr.rel (0) target = $region25
    $region24: #{tpu_custom_call.1} parent=1 // pred_region
      %s66 = ssub.s32 8192, 8192
      %67 = vsyncadd [#allocation9], %s66
      %s68 = sshll.u32 [#allocation10], 4
      %s69 = int_to_ptr.vmem [resolvable:$true] %s68
      %74 = dma.hbm_to_vmem [thread:$0]  %s5, 8192, %s69, [#allocation9], 64, 64, 4
    $region25: #{tpu_custom_call.1} parent=1 // pred_fallthru
      _
    // Predicated region
    $region26: #{tpu_custom_call.1} parent=1 // pred_check
      _
    $region27: #{tpu_custom_call.1} parent=1 // pred_check_branch
      %76 = sbr.rel (0) target = $region29
    $region28: #{tpu_custom_call.1} parent=1 // pred_region
      %s78 = ssub.s32 16, 16
      %79 = vsyncadd [#allocation12], %s78
      %s81 = sshll.u32 [#allocation11], 4
      %s82 = int_to_ptr.vmem [resolvable:$true] %s81
      %84 = dma.hbm_to_vmem [thread:$0]  %s6, 16, %s82, [#allocation12]
    $region29: #{tpu_custom_call.1} parent=1 // pred_fallthru
      _
    // Predicated region
    $region30: #{tpu_custom_call.1} parent=1 // pred_check
      _
    $region31: #{tpu_custom_call.1} parent=1 // pred_check_branch
      %86 = sbr.rel (0) target = $region33
    $region32: #{tpu_custom_call.1} parent=1 // pred_region
      %87 = dma.done [#allocation3], 1024
    $region33: #{tpu_custom_call.1} parent=1 // pred_fallthru
      _
    // Predicated region
    $region34: #{tpu_custom_call.1} parent=1 // pred_check
      _
    $region35: #{tpu_custom_call.1} parent=1 // pred_check_branch
      %89 = sbr.rel (0) target = $region37
    $region36: #{tpu_custom_call.1} parent=1 // pred_region
      %90 = dma.done [#allocation6], 128
    $region37: #{tpu_custom_call.1} parent=1 // pred_fallthru
      _
    // Predicated region
    $region38: #{tpu_custom_call.1} parent=1 // pred_check
      _
    $region39: #{tpu_custom_call.1} parent=1 // pred_check_branch
      %92 = sbr.rel (0) target = $region41
    $region40: #{tpu_custom_call.1} parent=1 // pred_region
      %93 = dma.done [#allocation6], 65536
    $region41: #{tpu_custom_call.1} parent=1 // pred_fallthru
      _
    // Predicated region
    $region42: #{tpu_custom_call.1} parent=1 // pred_check
      _
    $region43: #{tpu_custom_call.1} parent=1 // pred_check_branch
      %95 = sbr.rel (0) target = $region45
    $region44: #{tpu_custom_call.1} parent=1 // pred_region
      %96 = dma.done [#allocation9], 128
    $region45: #{tpu_custom_call.1} parent=1 // pred_fallthru
      _
    // Predicated region
    $region46: #{tpu_custom_call.1} parent=1 // pred_check
      _
    $region47: #{tpu_custom_call.1} parent=1 // pred_check_branch
      %98 = sbr.rel (0) target = $region49
    $region48: #{tpu_custom_call.1} parent=1 // pred_region
      %99 = dma.done [#allocation9], 8192
    $region49: #{tpu_custom_call.1} parent=1 // pred_fallthru
      _
    // Predicated region
    $region50: #{tpu_custom_call.1} parent=1 // pred_check
      _
    $region51: #{tpu_custom_call.1} parent=1 // pred_check_branch
      %101 = sbr.rel (0) target = $region53
    $region52: #{tpu_custom_call.1} parent=1 // pred_region
      %102 = dma.done [#allocation12], 16
    $region53: #{tpu_custom_call.1} parent=1 // pred_fallthru
      _
    %v104 = vld [vmem:[%s0] sm:$0xf]
    %v105 = vld [vmem:[%s0 + $0x4] sm:$0xf]
    %v106 = vld [vmem:[%s0 + $0x8] sm:$0xf]
    %v107 = vld [vmem:[%s0 + $0xc] sm:$0xf]
    %v108 = vld [vmem:[#allocation2] sm:$0xff]
    %v109 = vld [vmem:[#allocation2 + $0x8] sm:$0xff]
    %v110 = vld [vmem:[#allocation2 + $0x10] sm:$0xff]
    %v111 = vld [vmem:[#allocation2 + $0x18] sm:$0xff]
    %v112 = vld [vmem:[#allocation2 + $0x20] sm:$0xff]
    %v113 = vld [vmem:[#allocation2 + $0x28] sm:$0xff]
    %v114 = vld [vmem:[#allocation2 + $0x30] sm:$0xff]
    %v115 = vld [vmem:[#allocation2 + $0x38] sm:$0xff]
    %v116 = vld [vmem:[#allocation5] sm:$0xff]
    %v118 = vlaneseq
    %v119 = vshrl.u32 %v118, 7
    %v120 = vsub.s32 0, %v119
    %v121 = vrot.slane %v116, %v120
    %v122 = vlaneseq
    %v123 = vshrl.u32 %v122, 7
    %v124 = vsub.s32 1, %v123
    %v125 = vrot.slane %v116, %v124
    %v126 = vlaneseq
    %v127 = vshrl.u32 %v126, 7
    %v128 = vsub.s32 2, %v127
    %v129 = vrot.slane %v116, %v128
    %v130 = vlaneseq
    %v131 = vshrl.u32 %v130, 7
    %v132 = vsub.s32 3, %v131
    %v133 = vrot.slane %v116, %v132
    %v134 = vlaneseq
    %v135 = vshrl.u32 %v134, 7
    %v136 = vsub.s32 4, %v135
    %v137 = vrot.slane %v116, %v136
    %v138 = vlaneseq
    %v139 = vshrl.u32 %v138, 7
    %v140 = vsub.s32 5, %v139
    %v141 = vrot.slane %v116, %v140
    %v142 = vlaneseq
    %v143 = vshrl.u32 %v142, 7
    %v144 = vsub.s32 6, %v143
    %v145 = vrot.slane %v116, %v144
    %v146 = vlaneseq
    %v147 = vshrl.u32 %v146, 7
    %v148 = vsub.s32 7, %v147
    %v149 = vrot.slane %v116, %v148
    %v162 = vunpack.c.l.b16 %v104
    %v163 = vunpack.c.l.b16 %v105
    %v164 = vunpack.c.l.b16 %v106
    %v165 = vunpack.c.l.b16 %v107
    %v166 = vpack.c.b16 %v163, %v162
    %v167 = vpack.c.b16 %v165, %v164
    %v176 = vunpack.c.l.b16 %v108
    %v177 = vunpack.c.h.b16 %v108
    %v178 = vunpack.c.l.b16 %v109
    %v179 = vunpack.c.h.b16 %v109
    %v180 = vunpack.c.l.b16 %v110
    %v181 = vunpack.c.h.b16 %v110
    %v182 = vunpack.c.l.b16 %v111
    %v183 = vunpack.c.h.b16 %v111
    %v184 = vunpack.c.l.b16 %v112
    %v185 = vunpack.c.h.b16 %v112
    %v186 = vunpack.c.l.b16 %v113
    %v187 = vunpack.c.h.b16 %v113
    %v188 = vunpack.c.l.b16 %v114
    %v189 = vunpack.c.h.b16 %v114
    %v190 = vunpack.c.l.b16 %v115
    %v191 = vunpack.c.h.b16 %v115
    %v192 = vpack.c.b16 %v184, %v176
    %v193 = vpack.c.b16 %v185, %v177
    %v194 = vpack.c.b16 %v186, %v178
    %v195 = vpack.c.b16 %v187, %v179
    %v196 = vpack.c.b16 %v188, %v180
    %v197 = vpack.c.b16 %v189, %v181
    %v198 = vpack.c.b16 %v190, %v182
    %v199 = vpack.c.b16 %v191, %v183
    %vm208 = vcmask 130048
    %v210 = vsel %vm208, %v166, 0
    %v213 = vsel %vm208, %v167, 0
    %215 = vmatprep.subr.bf16.mxu0 %v193
    %216 = vmatpush1.bf16.msra.mxu0 %v192
    %217 = vmatprep.subr.bf16.mxu0 0
    %218 = vmatpush1.bf16.msra.mxu0 0
    %219 = vmatprep.subr.bf16.mxu0 0
    %220 = vmatpush1.bf16.msra.mxu0 0
    %221 = vmatprep.subr.bf16.mxu0 0
    %222 = vmatpush1.bf16.msra.mxu0 0
    %223 = vmatprep.subr.bf16.mxu0 0
    %224 = vmatpush1.bf16.msra.mxu0 0
    %225 = vmatprep.subr.bf16.mxu0 0
    %226 = vmatpush1.bf16.msra.mxu0 0
    %227 = vmatprep.subr.bf16.mxu0 0
    %228 = vmatpush1.bf16.msra.mxu0 0
    %229 = vmatprep.subr.bf16.mxu0 0
    %230 = vmatpush1.bf16.msra.mxu0 0
    %231 = vmatprep.subr.bf16.mxu0 0
    %232 = vmatpush1.bf16.msra.mxu0 0
    %233 = vmatprep.subr.bf16.mxu0 0
    %234 = vmatpush1.bf16.msra.mxu0 0
    %235 = vmatprep.subr.bf16.mxu0 0
    %236 = vmatpush1.bf16.msra.mxu0 0
    %237 = vmatprep.subr.bf16.mxu0 0
    %238 = vmatpush1.bf16.msra.mxu0 0
    %239 = vmatprep.subr.bf16.mxu0 0
    %240 = vmatpush1.bf16.msra.mxu0 0
    %241 = vmatprep.subr.bf16.mxu0 0
    %242 = vmatpush1.bf16.msra.mxu0 0
    %243 = vmatprep.subr.bf16.mxu0 0
    %244 = vmatpush1.bf16.msra.mxu0 0
    %245 = vmatprep.subr.bf16.mxu0 0
    %246 = vmatpush1.bf16.msra.mxu0 0
    %247 = vmatprep.mubr.bf16.mxu0 0
    %248 = vmatmul.mubr.bf16.gmra.mrb[0].mxu0 %v210
    %v249 = vpop.f32.mrb[0].mxu0
    %v250 = vadd.f32 %v121, %v249
    %v251 = vpop.f32.mrb[0].mxu0
    %v252 = vadd.f32 %v125, %v251
    %v253 = vpop.f32.mrb[0].mxu0
    %v254 = vadd.f32 %v121, %v253
    %v255 = vpop.f32.mrb[0].mxu0
    %v256 = vadd.f32 %v125, %v255
    %257 = vmatprep.mubr.bf16.mxu0 0
    %258 = vmatmul.mubr.bf16.gmra.mrb[0].mxu0 %v213
    %v259 = vpop.f32.mrb[0].mxu0
    %v260 = vadd.f32 %v121, %v259
    %v261 = vpop.f32.mrb[0].mxu0
    %v262 = vadd.f32 %v125, %v261
    %v263 = vpop.f32.mrb[0].mxu0
    %v264 = vadd.f32 %v121, %v263
    %v265 = vpop.f32.mrb[0].mxu0
    %v266 = vadd.f32 %v125, %v265
    %267 = vdwg.mxu0
    %268 = vmatprep.subr.bf16.mxu0 %v195
    %269 = vmatpush1.bf16.msra.mxu0 %v194
    %270 = vmatprep.subr.bf16.mxu0 0
    %271 = vmatpush1.bf16.msra.mxu0 0
    %272 = vmatprep.subr.bf16.mxu0 0
    %273 = vmatpush1.bf16.msra.mxu0 0
    %274 = vmatprep.subr.bf16.mxu0 0
    %275 = vmatpush1.bf16.msra.mxu0 0
    %276 = vmatprep.subr.bf16.mxu0 0
    %277 = vmatpush1.bf16.msra.mxu0 0
    %278 = vmatprep.subr.bf16.mxu0 0
    %279 = vmatpush1.bf16.msra.mxu0 0
    %280 = vmatprep.subr.bf16.mxu0 0
    %281 = vmatpush1.bf16.msra.mxu0 0
    %282 = vmatprep.subr.bf16.mxu0 0
    %283 = vmatpush1.bf16.msra.mxu0 0
    %284 = vmatprep.subr.bf16.mxu0 0
    %285 = vmatpush1.bf16.msra.mxu0 0
    %286 = vmatprep.subr.bf16.mxu0 0
    %287 = vmatpush1.bf16.msra.mxu0 0
    %288 = vmatprep.subr.bf16.mxu0 0
    %289 = vmatpush1.bf16.msra.mxu0 0
    %290 = vmatprep.subr.bf16.mxu0 0
    %291 = vmatpush1.bf16.msra.mxu0 0
    %292 = vmatprep.subr.bf16.mxu0 0
    %293 = vmatpush1.bf16.msra.mxu0 0
    %294 = vmatprep.subr.bf16.mxu0 0
    %295 = vmatpush1.bf16.msra.mxu0 0
    %296 = vmatprep.subr.bf16.mxu0 0
    %297 = vmatpush1.bf16.msra.mxu0 0
    %298 = vmatprep.subr.bf16.mxu0 0
    %299 = vmatpush1.bf16.msra.mxu0 0
    %300 = vmatprep.mubr.bf16.mxu0 0
    %301 = vmatmul.mubr.bf16.gmra.mrb[0].mxu0 %v210
    %v302 = vpop.f32.mrb[0].mxu0
    %v303 = vadd.f32 %v129, %v302
    %v304 = vpop.f32.mrb[0].mxu0
    %v305 = vadd.f32 %v133, %v304
    %v306 = vpop.f32.mrb[0].mxu0
    %v307 = vadd.f32 %v129, %v306
    %v308 = vpop.f32.mrb[0].mxu0
    %v309 = vadd.f32 %v133, %v308
    %310 = vmatprep.mubr.bf16.mxu0 0
    %311 = vmatmul.mubr.bf16.gmra.mrb[0].mxu0 %v213
    %v312 = vpop.f32.mrb[0].mxu0
    %v313 = vadd.f32 %v129, %v312
    %v314 = vpop.f32.mrb[0].mxu0
    %v315 = vadd.f32 %v133, %v314
    %v316 = vpop.f32.mrb[0].mxu0
    %v317 = vadd.f32 %v129, %v316
    %v318 = vpop.f32.mrb[0].mxu0
    %v319 = vadd.f32 %v133, %v318
    %320 = vdwg.mxu0
    %321 = vmatprep.subr.bf16.mxu0 %v197
    %322 = vmatpush1.bf16.msra.mxu0 %v196
    %323 = vmatprep.subr.bf16.mxu0 0
    %324 = vmatpush1.bf16.msra.mxu0 0
    %325 = vmatprep.subr.bf16.mxu0 0
    %326 = vmatpush1.bf16.msra.mxu0 0
    %327 = vmatprep.subr.bf16.mxu0 0
    %328 = vmatpush1.bf16.msra.mxu0 0
    %329 = vmatprep.subr.bf16.mxu0 0
    %330 = vmatpush1.bf16.msra.mxu0 0
    %331 = vmatprep.subr.bf16.mxu0 0
    %332 = vmatpush1.bf16.msra.mxu0 0
    %333 = vmatprep.subr.bf16.mxu0 0
    %334 = vmatpush1.bf16.msra.mxu0 0
    %335 = vmatprep.subr.bf16.mxu0 0
    %336 = vmatpush1.bf16.msra.mxu0 0
    %337 = vmatprep.subr.bf16.mxu0 0
    %338 = vmatpush1.bf16.msra.mxu0 0
    %339 = vmatprep.subr.bf16.mxu0 0
    %340 = vmatpush1.bf16.msra.mxu0 0
    %341 = vmatprep.subr.bf16.mxu0 0
    %342 = vmatpush1.bf16.msra.mxu0 0
    %343 = vmatprep.subr.bf16.mxu0 0
    %344 = vmatpush1.bf16.msra.mxu0 0
    %345 = vmatprep.subr.bf16.mxu0 0
    %346 = vmatpush1.bf16.msra.mxu0 0
    %347 = vmatprep.subr.bf16.mxu0 0
    %348 = vmatpush1.bf16.msra.mxu0 0
    %349 = vmatprep.subr.bf16.mxu0 0
    %350 = vmatpush1.bf16.msra.mxu0 0
    %351 = vmatprep.subr.bf16.mxu0 0
    %352 = vmatpush1.bf16.msra.mxu0 0
    %353 = vmatprep.mubr.bf16.mxu0 0
    %354 = vmatmul.mubr.bf16.gmra.mrb[0].mxu0 %v210
    %v355 = vpop.f32.mrb[0].mxu0
    %v356 = vadd.f32 %v137, %v355
    %v357 = vpop.f32.mrb[0].mxu0
    %v358 = vadd.f32 %v141, %v357
    %v359 = vpop.f32.mrb[0].mxu0
    %v360 = vadd.f32 %v137, %v359
    %v361 = vpop.f32.mrb[0].mxu0
    %v362 = vadd.f32 %v141, %v361
    %363 = vmatprep.mubr.bf16.mxu0 0
    %364 = vmatmul.mubr.bf16.gmra.mrb[0].mxu0 %v213
    %v365 = vpop.f32.mrb[0].mxu0
    %v366 = vadd.f32 %v137, %v365
    %v367 = vpop.f32.mrb[0].mxu0
    %v368 = vadd.f32 %v141, %v367
    %v369 = vpop.f32.mrb[0].mxu0
    %v370 = vadd.f32 %v137, %v369
    %v371 = vpop.f32.mrb[0].mxu0
    %v372 = vadd.f32 %v141, %v371
    %373 = vdwg.mxu0
    %374 = vmatprep.subr.bf16.mxu0 %v199
    %375 = vmatpush1.bf16.msra.mxu0 %v198
    %376 = vmatprep.subr.bf16.mxu0 0
    %377 = vmatpush1.bf16.msra.mxu0 0
    %378 = vmatprep.subr.bf16.mxu0 0
    %379 = vmatpush1.bf16.msra.mxu0 0
    %380 = vmatprep.subr.bf16.mxu0 0
    %381 = vmatpush1.bf16.msra.mxu0 0
    %382 = vmatprep.subr.bf16.mxu0 0
    %383 = vmatpush1.bf16.msra.mxu0 0
    %384 = vmatprep.subr.bf16.mxu0 0
    %385 = vmatpush1.bf16.msra.mxu0 0
    %386 = vmatprep.subr.bf16.mxu0 0
    %387 = vmatpush1.bf16.msra.mxu0 0
    %388 = vmatprep.subr.bf16.mxu0 0
    %389 = vmatpush1.bf16.msra.mxu0 0
    %390 = vmatprep.subr.bf16.mxu0 0
    %391 = vmatpush1.bf16.msra.mxu0 0
    %392 = vmatprep.subr.bf16.mxu0 0
    %393 = vmatpush1.bf16.msra.mxu0 0
    %394 = vmatprep.subr.bf16.mxu0 0
    %395 = vmatpush1.bf16.msra.mxu0 0
    %396 = vmatprep.subr.bf16.mxu0 0
    %397 = vmatpush1.bf16.msra.mxu0 0
    %398 = vmatprep.subr.bf16.mxu0 0
    %399 = vmatpush1.bf16.msra.mxu0 0
    %400 = vmatprep.subr.bf16.mxu0 0
    %401 = vmatpush1.bf16.msra.mxu0 0
    %402 = vmatprep.subr.bf16.mxu0 0
    %403 = vmatpush1.bf16.msra.mxu0 0
    %404 = vmatprep.subr.bf16.mxu0 0
    %405 = vmatpush1.bf16.msra.mxu0 0
    %406 = vmatprep.mubr.bf16.mxu0 0
    %407 = vmatmul.mubr.bf16.gmra.mrb[0].mxu0 %v210
    %v408 = vpop.f32.mrb[0].mxu0
    %v409 = vadd.f32 %v145, %v408
    %v410 = vpop.f32.mrb[0].mxu0
    %v411 = vadd.f32 %v149, %v410
    %v412 = vpop.f32.mrb[0].mxu0
    %v413 = vadd.f32 %v145, %v412
    %v414 = vpop.f32.mrb[0].mxu0
    %v415 = vadd.f32 %v149, %v414
    %416 = vmatprep.mubr.bf16.mxu0 0
    %417 = vmatmul.mubr.bf16.gmra.mrb[0].mxu0 %v213
    %v418 = vpop.f32.mrb[0].mxu0
    %v419 = vadd.f32 %v145, %v418
    %v420 = vpop.f32.mrb[0].mxu0
    %v421 = vadd.f32 %v149, %v420
    %v422 = vpop.f32.mrb[0].mxu0
    %v423 = vadd.f32 %v145, %v422
    %v424 = vpop.f32.mrb[0].mxu0
    %v425 = vadd.f32 %v149, %v424
    %426 = vdwg.mxu0
    %vm427 = vcmp.gt.f32.partialorder %v250, 0.0
    %vm428 = vcmp.gt.f32.partialorder %v252, 0.0
    %vm429 = vcmp.gt.f32.partialorder %v303, 0.0
    %vm430 = vcmp.gt.f32.partialorder %v305, 0.0
    %vm431 = vcmp.gt.f32.partialorder %v356, 0.0
    %vm432 = vcmp.gt.f32.partialorder %v358, 0.0
    %vm433 = vcmp.gt.f32.partialorder %v409, 0.0
    %vm434 = vcmp.gt.f32.partialorder %v411, 0.0
    %vm435 = vcmp.gt.f32.partialorder %v254, 0.0
    %vm436 = vcmp.gt.f32.partialorder %v256, 0.0
    %vm437 = vcmp.gt.f32.partialorder %v307, 0.0
    %vm438 = vcmp.gt.f32.partialorder %v309, 0.0
    %vm439 = vcmp.gt.f32.partialorder %v360, 0.0
    %vm440 = vcmp.gt.f32.partialorder %v362, 0.0
    %vm441 = vcmp.gt.f32.partialorder %v413, 0.0
    %vm442 = vcmp.gt.f32.partialorder %v415, 0.0
    %vm443 = vcmp.gt.f32.partialorder %v260, 0.0
    %vm444 = vcmp.gt.f32.partialorder %v262, 0.0
    %vm445 = vcmp.gt.f32.partialorder %v313, 0.0
    %vm446 = vcmp.gt.f32.partialorder %v315, 0.0
    %vm447 = vcmp.gt.f32.partialorder %v366, 0.0
    %vm448 = vcmp.gt.f32.partialorder %v368, 0.0
    %vm449 = vcmp.gt.f32.partialorder %v419, 0.0
    %vm450 = vcmp.gt.f32.partialorder %v421, 0.0
    %vm451 = vcmp.gt.f32.partialorder %v264, 0.0
    %vm452 = vcmp.gt.f32.partialorder %v266, 0.0
    %vm453 = vcmp.gt.f32.partialorder %v317, 0.0
    %vm454 = vcmp.gt.f32.partialorder %v319, 0.0
    %vm455 = vcmp.gt.f32.partialorder %v370, 0.0
    %vm456 = vcmp.gt.f32.partialorder %v372, 0.0
    %vm457 = vcmp.gt.f32.partialorder %v423, 0.0
    %vm458 = vcmp.gt.f32.partialorder %v425, 0.0
    %v459 = vmul.f32 %v250, 0.01
    %v460 = vmul.f32 %v252, 0.01
    %v461 = vmul.f32 %v303, 0.01
    %v462 = vmul.f32 %v305, 0.01
    %v463 = vmul.f32 %v356, 0.01
    %v464 = vmul.f32 %v358, 0.01
    %v465 = vmul.f32 %v409, 0.01
    %v466 = vmul.f32 %v411, 0.01
    %v467 = vmul.f32 %v254, 0.01
    %v468 = vmul.f32 %v256, 0.01
    %v469 = vmul.f32 %v307, 0.01
    %v470 = vmul.f32 %v309, 0.01
    %v471 = vmul.f32 %v360, 0.01
    %v472 = vmul.f32 %v362, 0.01
    %v473 = vmul.f32 %v413, 0.01
    %v474 = vmul.f32 %v415, 0.01
    %v475 = vmul.f32 %v260, 0.01
    %v476 = vmul.f32 %v262, 0.01
    %v477 = vmul.f32 %v313, 0.01
    %v478 = vmul.f32 %v315, 0.01
    %v479 = vmul.f32 %v366, 0.01
    %v480 = vmul.f32 %v368, 0.01
    %v481 = vmul.f32 %v419, 0.01
    %v482 = vmul.f32 %v421, 0.01
    %v483 = vmul.f32 %v264, 0.01
    %v484 = vmul.f32 %v266, 0.01
    %v485 = vmul.f32 %v317, 0.01
    %v486 = vmul.f32 %v319, 0.01
    %v487 = vmul.f32 %v370, 0.01
    %v488 = vmul.f32 %v372, 0.01
    %v489 = vmul.f32 %v423, 0.01
    %v490 = vmul.f32 %v425, 0.01
    %v491 = vsel %vm427, %v250, %v459
    %v492 = vsel %vm428, %v252, %v460
    %v493 = vsel %vm429, %v303, %v461
    %v494 = vsel %vm430, %v305, %v462
    %v495 = vsel %vm431, %v356, %v463
    %v496 = vsel %vm432, %v358, %v464
    %v497 = vsel %vm433, %v409, %v465
    %v498 = vsel %vm434, %v411, %v466
    %v499 = vsel %vm435, %v254, %v467
    %v500 = vsel %vm436, %v256, %v468
    %v501 = vsel %vm437, %v307, %v469
    %v502 = vsel %vm438, %v309, %v470
    %v503 = vsel %vm439, %v360, %v471
    %v504 = vsel %vm440, %v362, %v472
    %v505 = vsel %vm441, %v413, %v473
    %v506 = vsel %vm442, %v415, %v474
    %v507 = vsel %vm443, %v260, %v475
    %v508 = vsel %vm444, %v262, %v476
    %v509 = vsel %vm445, %v313, %v477
    %v510 = vsel %vm446, %v315, %v478
    %v511 = vsel %vm447, %v366, %v479
    %v512 = vsel %vm448, %v368, %v480
    %v513 = vsel %vm449, %v419, %v481
    %v514 = vsel %vm450, %v421, %v482
    %v515 = vsel %vm451, %v264, %v483
    %v516 = vsel %vm452, %v266, %v484
    %v517 = vsel %vm453, %v317, %v485
    %v518 = vsel %vm454, %v319, %v486
    %v519 = vsel %vm455, %v370, %v487
    %v520 = vsel %vm456, %v372, %v488
    %v521 = vsel %vm457, %v423, %v489
    %v522 = vsel %vm458, %v425, %v490
    %v523 = vpack.c.bf16 %v499, %v491
    %v524 = vpack.c.bf16 %v500, %v492
    %v525 = vpack.c.bf16 %v501, %v493
    %v526 = vpack.c.bf16 %v502, %v494
    %v527 = vpack.c.bf16 %v503, %v495
    %v528 = vpack.c.bf16 %v504, %v496
    %v529 = vpack.c.bf16 %v505, %v497
    %v530 = vpack.c.bf16 %v506, %v498
    %v531 = vpack.c.bf16 %v515, %v507
    %v532 = vpack.c.bf16 %v516, %v508
    %v533 = vpack.c.bf16 %v517, %v509
    %v534 = vpack.c.bf16 %v518, %v510
    %v535 = vpack.c.bf16 %v519, %v511
    %v536 = vpack.c.bf16 %v520, %v512
    %v537 = vpack.c.bf16 %v521, %v513
    %v538 = vpack.c.bf16 %v522, %v514
    %v539 = vld [vmem:[#allocation7] sm:$0xff]
    %v540 = vld [vmem:[#allocation7 + $0x8] sm:$0xff]
    %v541 = vld [vmem:[#allocation7 + $0x10] sm:$0xff]
    %v542 = vld [vmem:[#allocation7 + $0x18] sm:$0xff]
    %v543 = vld [vmem:[#allocation7 + $0x20] sm:$0xff]
    %v544 = vld [vmem:[#allocation7 + $0x28] sm:$0xff]
    %v545 = vld [vmem:[#allocation7 + $0x30] sm:$0xff]
    %v546 = vld [vmem:[#allocation7 + $0x38] sm:$0xff]
    %v547 = vld [vmem:[#allocation7 + $0x40] sm:$0xff]
    %v548 = vld [vmem:[#allocation7 + $0x48] sm:$0xff]
    %v549 = vld [vmem:[#allocation7 + $0x50] sm:$0xff]
    %v550 = vld [vmem:[#allocation7 + $0x58] sm:$0xff]
    %v551 = vld [vmem:[#allocation7 + $0x60] sm:$0xff]
    %v552 = vld [vmem:[#allocation7 + $0x68] sm:$0xff]
    %v553 = vld [vmem:[#allocation7 + $0x70] sm:$0xff]
    %v554 = vld [vmem:[#allocation7 + $0x78] sm:$0xff]
    %v555 = vld [vmem:[#allocation7 + $0x80] sm:$0xff]
    %v556 = vld [vmem:[#allocation7 + $0x88] sm:$0xff]
    %v557 = vld [vmem:[#allocation7 + $0x90] sm:$0xff]
    %v558 = vld [vmem:[#allocation7 + $0x98] sm:$0xff]
    %v559 = vld [vmem:[#allocation7 + $0xa0] sm:$0xff]
    %v560 = vld [vmem:[#allocation7 + $0xa8] sm:$0xff]
    %v561 = vld [vmem:[#allocation7 + $0xb0] sm:$0xff]
    %v562 = vld [vmem:[#allocation7 + $0xb8] sm:$0xff]
    %v563 = vld [vmem:[#allocation7 + $0xc0] sm:$0xff]
    %v564 = vld [vmem:[#allocation7 + $0xc8] sm:$0xff]
    %v565 = vld [vmem:[#allocation7 + $0xd0] sm:$0xff]
    %v566 = vld [vmem:[#allocation7 + $0xd8] sm:$0xff]
    %v567 = vld [vmem:[#allocation7 + $0xe0] sm:$0xff]
    %v568 = vld [vmem:[#allocation7 + $0xe8] sm:$0xff]
    %v569 = vld [vmem:[#allocation7 + $0xf0] sm:$0xff]
    %v570 = vld [vmem:[#allocation7 + $0xf8] sm:$0xff]
    %v571 = vld [vmem:[#allocation7 + $0x100] sm:$0xff]
    %v572 = vld [vmem:[#allocation7 + $0x108] sm:$0xff]
    %v573 = vld [vmem:[#allocation7 + $0x110] sm:$0xff]
    %v574 = vld [vmem:[#allocation7 + $0x118] sm:$0xff]
    %v575 = vld [vmem:[#allocation7 + $0x120] sm:$0xff]
    %v576 = vld [vmem:[#allocation7 + $0x128] sm:$0xff]
    %v577 = vld [vmem:[#allocation7 + $0x130] sm:$0xff]
    %v578 = vld [vmem:[#allocation7 + $0x138] sm:$0xff]
    %v579 = vld [vmem:[#allocation7 + $0x140] sm:$0xff]
    %v580 = vld [vmem:[#allocation7 + $0x148] sm:$0xff]
    %v581 = vld [vmem:[#allocation7 + $0x150] sm:$0xff]
    %v582 = vld [vmem:[#allocation7 + $0x158] sm:$0xff]
    %v583 = vld [vmem:[#allocation7 + $0x160] sm:$0xff]
    %v584 = vld [vmem:[#allocation7 + $0x168] sm:$0xff]
    %v585 = vld [vmem:[#allocation7 + $0x170] sm:$0xff]
    %v586 = vld [vmem:[#allocation7 + $0x178] sm:$0xff]
    %v587 = vld [vmem:[#allocation7 + $0x180] sm:$0xff]
    %v588 = vld [vmem:[#allocation7 + $0x188] sm:$0xff]
    %v589 = vld [vmem:[#allocation7 + $0x190] sm:$0xff]
    %v590 = vld [vmem:[#allocation7 + $0x198] sm:$0xff]
    %v591 = vld [vmem:[#allocation7 + $0x1a0] sm:$0xff]
    %v592 = vld [vmem:[#allocation7 + $0x1a8] sm:$0xff]
    %v593 = vld [vmem:[#allocation7 + $0x1b0] sm:$0xff]
    %v594 = vld [vmem:[#allocation7 + $0x1b8] sm:$0xff]
    %v595 = vld [vmem:[#allocation7 + $0x1c0] sm:$0xff]
    %v596 = vld [vmem:[#allocation7 + $0x1c8] sm:$0xff]
    %v597 = vld [vmem:[#allocation7 + $0x1d0] sm:$0xff]
    %v598 = vld [vmem:[#allocation7 + $0x1d8] sm:$0xff]
    %v599 = vld [vmem:[#allocation7 + $0x1e0] sm:$0xff]
    %v600 = vld [vmem:[#allocation7 + $0x1e8] sm:$0xff]
    %v601 = vld [vmem:[#allocation7 + $0x1f0] sm:$0xff]
    %v602 = vld [vmem:[#allocation7 + $0x1f8] sm:$0xff]
    %v603 = vld [vmem:[#allocation7 + $0x200] sm:$0xff]
    %v604 = vld [vmem:[#allocation7 + $0x208] sm:$0xff]
    %v605 = vld [vmem:[#allocation7 + $0x210] sm:$0xff]
    %v606 = vld [vmem:[#allocation7 + $0x218] sm:$0xff]
    %v607 = vld [vmem:[#allocation7 + $0x220] sm:$0xff]
    %v608 = vld [vmem:[#allocation7 + $0x228] sm:$0xff]
    %v609 = vld [vmem:[#allocation7 + $0x230] sm:$0xff]
    %v610 = vld [vmem:[#allocation7 + $0x238] sm:$0xff]
    %v611 = vld [vmem:[#allocation7 + $0x240] sm:$0xff]
    %v612 = vld [vmem:[#allocation7 + $0x248] sm:$0xff]
    %v613 = vld [vmem:[#allocation7 + $0x250] sm:$0xff]
    %v614 = vld [vmem:[#allocation7 + $0x258] sm:$0xff]
    %v615 = vld [vmem:[#allocation7 + $0x260] sm:$0xff]
    %v616 = vld [vmem:[#allocation7 + $0x268] sm:$0xff]
    %v617 = vld [vmem:[#allocation7 + $0x270] sm:$0xff]
    %v618 = vld [vmem:[#allocation7 + $0x278] sm:$0xff]
    %v619 = vld [vmem:[#allocation7 + $0x280] sm:$0xff]
    %v620 = vld [vmem:[#allocation7 + $0x288] sm:$0xff]
    %v621 = vld [vmem:[#allocation7 + $0x290] sm:$0xff]
    %v622 = vld [vmem:[#allocation7 + $0x298] sm:$0xff]
    %v623 = vld [vmem:[#allocation7 + $0x2a0] sm:$0xff]
    %v624 = vld [vmem:[#allocation7 + $0x2a8] sm:$0xff]
    %v625 = vld [vmem:[#allocation7 + $0x2b0] sm:$0xff]
    %v626 = vld [vmem:[#allocation7 + $0x2b8] sm:$0xff]
    %v627 = vld [vmem:[#allocation7 + $0x2c0] sm:$0xff]
    %v628 = vld [vmem:[#allocation7 + $0x2c8] sm:$0xff]
    %v629 = vld [vmem:[#allocation7 + $0x2d0] sm:$0xff]
    %v630 = vld [vmem:[#allocation7 + $0x2d8] sm:$0xff]
    %v631 = vld [vmem:[#allocation7 + $0x2e0] sm:$0xff]
    %v632 = vld [vmem:[#allocation7 + $0x2e8] sm:$0xff]
    %v633 = vld [vmem:[#allocation7 + $0x2f0] sm:$0xff]
    %v634 = vld [vmem:[#allocation7 + $0x2f8] sm:$0xff]
    %v635 = vld [vmem:[#allocation7 + $0x300] sm:$0xff]
    %v636 = vld [vmem:[#allocation7 + $0x308] sm:$0xff]
    %v637 = vld [vmem:[#allocation7 + $0x310] sm:$0xff]
    %v638 = vld [vmem:[#allocation7 + $0x318] sm:$0xff]
    %v639 = vld [vmem:[#allocation7 + $0x320] sm:$0xff]
    %v640 = vld [vmem:[#allocation7 + $0x328] sm:$0xff]
    %v641 = vld [vmem:[#allocation7 + $0x330] sm:$0xff]
    %v642 = vld [vmem:[#allocation7 + $0x338] sm:$0xff]
    %v643 = vld [vmem:[#allocation7 + $0x340] sm:$0xff]
    %v644 = vld [vmem:[#allocation7 + $0x348] sm:$0xff]
    %v645 = vld [vmem:[#allocation7 + $0x350] sm:$0xff]
    %v646 = vld [vmem:[#allocation7 + $0x358] sm:$0xff]
    %v647 = vld [vmem:[#allocation7 + $0x360] sm:$0xff]
    %v648 = vld [vmem:[#allocation7 + $0x368] sm:$0xff]
    %v649 = vld [vmem:[#allocation7 + $0x370] sm:$0xff]
    %v650 = vld [vmem:[#allocation7 + $0x378] sm:$0xff]
    %v651 = vld [vmem:[#allocation7 + $0x380] sm:$0xff]
    %v652 = vld [vmem:[#allocation7 + $0x388] sm:$0xff]
    %v653 = vld [vmem:[#allocation7 + $0x390] sm:$0xff]
    %v654 = vld [vmem:[#allocation7 + $0x398] sm:$0xff]
    %v655 = vld [vmem:[#allocation7 + $0x3a0] sm:$0xff]
    %v656 = vld [vmem:[#allocation7 + $0x3a8] sm:$0xff]
    %v657 = vld [vmem:[#allocation7 + $0x3b0] sm:$0xff]
    %v658 = vld [vmem:[#allocation7 + $0x3b8] sm:$0xff]
    %v659 = vld [vmem:[#allocation7 + $0x3c0] sm:$0xff]
    %v660 = vld [vmem:[#allocation7 + $0x3c8] sm:$0xff]
    %v661 = vld [vmem:[#allocation7 + $0x3d0] sm:$0xff]
    %v662 = vld [vmem:[#allocation7 + $0x3d8] sm:$0xff]
    %v663 = vld [vmem:[#allocation7 + $0x3e0] sm:$0xff]
    %v664 = vld [vmem:[#allocation7 + $0x3e8] sm:$0xff]
    %v665 = vld [vmem:[#allocation7 + $0x3f0] sm:$0xff]
    %v666 = vld [vmem:[#allocation7 + $0x3f8] sm:$0xff]
    %v667 = vld [vmem:[#allocation7 + $0x400] sm:$0xff]
    %v668 = vld [vmem:[#allocation7 + $0x408] sm:$0xff]
    %v669 = vld [vmem:[#allocation7 + $0x410] sm:$0xff]
    %v670 = vld [vmem:[#allocation7 + $0x418] sm:$0xff]
    %v671 = vld [vmem:[#allocation7 + $0x420] sm:$0xff]
    %v672 = vld [vmem:[#allocation7 + $0x428] sm:$0xff]
    %v673 = vld [vmem:[#allocation7 + $0x430] sm:$0xff]
    %v674 = vld [vmem:[#allocation7 + $0x438] sm:$0xff]
    %v675 = vld [vmem:[#allocation7 + $0x440] sm:$0xff]
    %v676 = vld [vmem:[#allocation7 + $0x448] sm:$0xff]
    %v677 = vld [vmem:[#allocation7 + $0x450] sm:$0xff]
    %v678 = vld [vmem:[#allocation7 + $0x458] sm:$0xff]
    %v679 = vld [vmem:[#allocation7 + $0x460] sm:$0xff]
    %v680 = vld [vmem:[#allocation7 + $0x468] sm:$0xff]
    %v681 = vld [vmem:[#allocation7 + $0x470] sm:$0xff]
    %v682 = vld [vmem:[#allocation7 + $0x478] sm:$0xff]
    %v683 = vld [vmem:[#allocation7 + $0x480] sm:$0xff]
    %v684 = vld [vmem:[#allocation7 + $0x488] sm:$0xff]
    %v685 = vld [vmem:[#allocation7 + $0x490] sm:$0xff]
    %v686 = vld [vmem:[#allocation7 + $0x498] sm:$0xff]
    %v687 = vld [vmem:[#allocation7 + $0x4a0] sm:$0xff]
    %v688 = vld [vmem:[#allocation7 + $0x4a8] sm:$0xff]
    %v689 = vld [vmem:[#allocation7 + $0x4b0] sm:$0xff]
    %v690 = vld [vmem:[#allocation7 + $0x4b8] sm:$0xff]
    %v691 = vld [vmem:[#allocation7 + $0x4c0] sm:$0xff]
    %v692 = vld [vmem:[#allocation7 + $0x4c8] sm:$0xff]
    %v693 = vld [vmem:[#allocation7 + $0x4d0] sm:$0xff]
    %v694 = vld [vmem:[#allocation7 + $0x4d8] sm:$0xff]
    %v695 = vld [vmem:[#allocation7 + $0x4e0] sm:$0xff]
    %v696 = vld [vmem:[#allocation7 + $0x4e8] sm:$0xff]
    %v697 = vld [vmem:[#allocation7 + $0x4f0] sm:$0xff]
    %v698 = vld [vmem:[#allocation7 + $0x4f8] sm:$0xff]
    %v699 = vld [vmem:[#allocation7 + $0x500] sm:$0xff]
    %v700 = vld [vmem:[#allocation7 + $0x508] sm:$0xff]
    %v701 = vld [vmem:[#allocation7 + $0x510] sm:$0xff]
    %v702 = vld [vmem:[#allocation7 + $0x518] sm:$0xff]
    %v703 = vld [vmem:[#allocation7 + $0x520] sm:$0xff]
    %v704 = vld [vmem:[#allocation7 + $0x528] sm:$0xff]
    %v705 = vld [vmem:[#allocation7 + $0x530] sm:$0xff]
    %v706 = vld [vmem:[#allocation7 + $0x538] sm:$0xff]
    %v707 = vld [vmem:[#allocation7 + $0x540] sm:$0xff]
    %v708 = vld [vmem:[#allocation7 + $0x548] sm:$0xff]
    %v709 = vld [vmem:[#allocation7 + $0x550] sm:$0xff]
    %v710 = vld [vmem:[#allocation7 + $0x558] sm:$0xff]
    %v711 = vld [vmem:[#allocation7 + $0x560] sm:$0xff]
    %v712 = vld [vmem:[#allocation7 + $0x568] sm:$0xff]
    %v713 = vld [vmem:[#allocation7 + $0x570] sm:$0xff]
    %v714 = vld [vmem:[#allocation7 + $0x578] sm:$0xff]
    %v715 = vld [vmem:[#allocation7 + $0x580] sm:$0xff]
    %v716 = vld [vmem:[#allocation7 + $0x588] sm:$0xff]
    %v717 = vld [vmem:[#allocation7 + $0x590] sm:$0xff]
    %v718 = vld [vmem:[#allocation7 + $0x598] sm:$0xff]
    %v719 = vld [vmem:[#allocation7 + $0x5a0] sm:$0xff]
    %v720 = vld [vmem:[#allocation7 + $0x5a8] sm:$0xff]
    %v721 = vld [vmem:[#allocation7 + $0x5b0] sm:$0xff]
    %v722 = vld [vmem:[#allocation7 + $0x5b8] sm:$0xff]
    %v723 = vld [vmem:[#allocation7 + $0x5c0] sm:$0xff]
    %v724 = vld [vmem:[#allocation7 + $0x5c8] sm:$0xff]
    %v725 = vld [vmem:[#allocation7 + $0x5d0] sm:$0xff]
    %v726 = vld [vmem:[#allocation7 + $0x5d8] sm:$0xff]
    %v727 = vld [vmem:[#allocation7 + $0x5e0] sm:$0xff]
    %v728 = vld [vmem:[#allocation7 + $0x5e8] sm:$0xff]
    %v729 = vld [vmem:[#allocation7 + $0x5f0] sm:$0xff]
    %v730 = vld [vmem:[#allocation7 + $0x5f8] sm:$0xff]
    %v731 = vld [vmem:[#allocation7 + $0x600] sm:$0xff]
    %v732 = vld [vmem:[#allocation7 + $0x608] sm:$0xff]
    %v733 = vld [vmem:[#allocation7 + $0x610] sm:$0xff]
    %v734 = vld [vmem:[#allocation7 + $0x618] sm:$0xff]
    %v735 = vld [vmem:[#allocation7 + $0x620] sm:$0xff]
    %v736 = vld [vmem:[#allocation7 + $0x628] sm:$0xff]
    %v737 = vld [vmem:[#allocation7 + $0x630] sm:$0xff]
    %v738 = vld [vmem:[#allocation7 + $0x638] sm:$0xff]
    %v739 = vld [vmem:[#allocation7 + $0x640] sm:$0xff]
    %v740 = vld [vmem:[#allocation7 + $0x648] sm:$0xff]
    %v741 = vld [vmem:[#allocation7 + $0x650] sm:$0xff]
    %v742 = vld [vmem:[#allocation7 + $0x658] sm:$0xff]
    %v743 = vld [vmem:[#allocation7 + $0x660] sm:$0xff]
    %v744 = vld [vmem:[#allocation7 + $0x668] sm:$0xff]
    %v745 = vld [vmem:[#allocation7 + $0x670] sm:$0xff]
    %v746 = vld [vmem:[#allocation7 + $0x678] sm:$0xff]
    %v747 = vld [vmem:[#allocation7 + $0x680] sm:$0xff]
    %v748 = vld [vmem:[#allocation7 + $0x688] sm:$0xff]
    %v749 = vld [vmem:[#allocation7 + $0x690] sm:$0xff]
    %v750 = vld [vmem:[#allocation7 + $0x698] sm:$0xff]
    %v751 = vld [vmem:[#allocation7 + $0x6a0] sm:$0xff]
    %v752 = vld [vmem:[#allocation7 + $0x6a8] sm:$0xff]
    %v753 = vld [vmem:[#allocation7 + $0x6b0] sm:$0xff]
    %v754 = vld [vmem:[#allocation7 + $0x6b8] sm:$0xff]
    %v755 = vld [vmem:[#allocation7 + $0x6c0] sm:$0xff]
    %v756 = vld [vmem:[#allocation7 + $0x6c8] sm:$0xff]
    %v757 = vld [vmem:[#allocation7 + $0x6d0] sm:$0xff]
    %v758 = vld [vmem:[#allocation7 + $0x6d8] sm:$0xff]
    %v759 = vld [vmem:[#allocation7 + $0x6e0] sm:$0xff]
    %v760 = vld [vmem:[#allocation7 + $0x6e8] sm:$0xff]
    %v761 = vld [vmem:[#allocation7 + $0x6f0] sm:$0xff]
    %v762 = vld [vmem:[#allocation7 + $0x6f8] sm:$0xff]
    %v763 = vld [vmem:[#allocation7 + $0x700] sm:$0xff]
    %v764 = vld [vmem:[#allocation7 + $0x708] sm:$0xff]
    %v765 = vld [vmem:[#allocation7 + $0x710] sm:$0xff]
    %v766 = vld [vmem:[#allocation7 + $0x718] sm:$0xff]
    %v767 = vld [vmem:[#allocation7 + $0x720] sm:$0xff]
    %v768 = vld [vmem:[#allocation7 + $0x728] sm:$0xff]
    %v769 = vld [vmem:[#allocation7 + $0x730] sm:$0xff]
    %v770 = vld [vmem:[#allocation7 + $0x738] sm:$0xff]
    %v771 = vld [vmem:[#allocation7 + $0x740] sm:$0xff]
    %v772 = vld [vmem:[#allocation7 + $0x748] sm:$0xff]
    %v773 = vld [vmem:[#allocation7 + $0x750] sm:$0xff]
    %v774 = vld [vmem:[#allocation7 + $0x758] sm:$0xff]
    %v775 = vld [vmem:[#allocation7 + $0x760] sm:$0xff]
    %v776 = vld [vmem:[#allocation7 + $0x768] sm:$0xff]
    %v777 = vld [vmem:[#allocation7 + $0x770] sm:$0xff]
    %v778 = vld [vmem:[#allocation7 + $0x778] sm:$0xff]
    %v779 = vld [vmem:[#allocation7 + $0x780] sm:$0xff]
    %v780 = vld [vmem:[#allocation7 + $0x788] sm:$0xff]
    %v781 = vld [vmem:[#allocation7 + $0x790] sm:$0xff]
    %v782 = vld [vmem:[#allocation7 + $0x798] sm:$0xff]
    %v783 = vld [vmem:[#allocation7 + $0x7a0] sm:$0xff]
    %v784 = vld [vmem:[#allocation7 + $0x7a8] sm:$0xff]
    %v785 = vld [vmem:[#allocation7 + $0x7b0] sm:$0xff]
    %v786 = vld [vmem:[#allocation7 + $0x7b8] sm:$0xff]
    %v787 = vld [vmem:[#allocation7 + $0x7c0] sm:$0xff]
    %v788 = vld [vmem:[#allocation7 + $0x7c8] sm:$0xff]
    %v789 = vld [vmem:[#allocation7 + $0x7d0] sm:$0xff]
    %v790 = vld [vmem:[#allocation7 + $0x7d8] sm:$0xff]
    %v791 = vld [vmem:[#allocation7 + $0x7e0] sm:$0xff]
    %v792 = vld [vmem:[#allocation7 + $0x7e8] sm:$0xff]
    %v793 = vld [vmem:[#allocation7 + $0x7f0] sm:$0xff]
    %v794 = vld [vmem:[#allocation7 + $0x7f8] sm:$0xff]
    %v795 = vld [vmem:[#allocation7 + $0x800] sm:$0xff]
    %v796 = vld [vmem:[#allocation7 + $0x808] sm:$0xff]
    %v797 = vld [vmem:[#allocation7 + $0x810] sm:$0xff]
    %v798 = vld [vmem:[#allocation7 + $0x818] sm:$0xff]
    %v799 = vld [vmem:[#allocation7 + $0x820] sm:$0xff]
    %v800 = vld [vmem:[#allocation7 + $0x828] sm:$0xff]
    %v801 = vld [vmem:[#allocation7 + $0x830] sm:$0xff]
    %v802 = vld [vmem:[#allocation7 + $0x838] sm:$0xff]
    %v803 = vld [vmem:[#allocation7 + $0x840] sm:$0xff]
    %v804 = vld [vmem:[#allocation7 + $0x848] sm:$0xff]
    %v805 = vld [vmem:[#allocation7 + $0x850] sm:$0xff]
    %v806 = vld [vmem:[#allocation7 + $0x858] sm:$0xff]
    %v807 = vld [vmem:[#allocation7 + $0x860] sm:$0xff]
    %v808 = vld [vmem:[#allocation7 + $0x868] sm:$0xff]
    %v809 = vld [vmem:[#allocation7 + $0x870] sm:$0xff]
    %v810 = vld [vmem:[#allocation7 + $0x878] sm:$0xff]
    %v811 = vld [vmem:[#allocation7 + $0x880] sm:$0xff]
    %v812 = vld [vmem:[#allocation7 + $0x888] sm:$0xff]
    %v813 = vld [vmem:[#allocation7 + $0x890] sm:$0xff]
    %v814 = vld [vmem:[#allocation7 + $0x898] sm:$0xff]
    %v815 = vld [vmem:[#allocation7 + $0x8a0] sm:$0xff]
    %v816 = vld [vmem:[#allocation7 + $0x8a8] sm:$0xff]
    %v817 = vld [vmem:[#allocation7 + $0x8b0] sm:$0xff]
    %v818 = vld [vmem:[#allocation7 + $0x8b8] sm:$0xff]
    %v819 = vld [vmem:[#allocation7 + $0x8c0] sm:$0xff]
    %v820 = vld [vmem:[#allocation7 + $0x8c8] sm:$0xff]
    %v821 = vld [vmem:[#allocation7 + $0x8d0] sm:$0xff]
    %v822 = vld [vmem:[#allocation7 + $0x8d8] sm:$0xff]
    %v823 = vld [vmem:[#allocation7 + $0x8e0] sm:$0xff]
    %v824 = vld [vmem:[#allocation7 + $0x8e8] sm:$0xff]
    %v825 = vld [vmem:[#allocation7 + $0x8f0] sm:$0xff]
    %v826 = vld [vmem:[#allocation7 + $0x8f8] sm:$0xff]
    %v827 = vld [vmem:[#allocation7 + $0x900] sm:$0xff]
    %v828 = vld [vmem:[#allocation7 + $0x908] sm:$0xff]
    %v829 = vld [vmem:[#allocation7 + $0x910] sm:$0xff]
    %v830 = vld [vmem:[#allocation7 + $0x918] sm:$0xff]
    %v831 = vld [vmem:[#allocation7 + $0x920] sm:$0xff]
    %v832 = vld [vmem:[#allocation7 + $0x928] sm:$0xff]
    %v833 = vld [vmem:[#allocation7 + $0x930] sm:$0xff]
    %v834 = vld [vmem:[#allocation7 + $0x938] sm:$0xff]
    %v835 = vld [vmem:[#allocation7 + $0x940] sm:$0xff]
    %v836 = vld [vmem:[#allocation7 + $0x948] sm:$0xff]
    %v837 = vld [vmem:[#allocation7 + $0x950] sm:$0xff]
    %v838 = vld [vmem:[#allocation7 + $0x958] sm:$0xff]
    %v839 = vld [vmem:[#allocation7 + $0x960] sm:$0xff]
    %v840 = vld [vmem:[#allocation7 + $0x968] sm:$0xff]
    %v841 = vld [vmem:[#allocation7 + $0x970] sm:$0xff]
    %v842 = vld [vmem:[#allocation7 + $0x978] sm:$0xff]
    %v843 = vld [vmem:[#allocation7 + $0x980] sm:$0xff]
    %v844 = vld [vmem:[#allocation7 + $0x988] sm:$0xff]
    %v845 = vld [vmem:[#allocation7 + $0x990] sm:$0xff]
    %v846 = vld [vmem:[#allocation7 + $0x998] sm:$0xff]
    %v847 = vld [vmem:[#allocation7 + $0x9a0] sm:$0xff]
    %v848 = vld [vmem:[#allocation7 + $0x9a8] sm:$0xff]
    %v849 = vld [vmem:[#allocation7 + $0x9b0] sm:$0xff]
    %v850 = vld [vmem:[#allocation7 + $0x9b8] sm:$0xff]
    %v851 = vld [vmem:[#allocation7 + $0x9c0] sm:$0xff]
    %v852 = vld [vmem:[#allocation7 + $0x9c8] sm:$0xff]
    %v853 = vld [vmem:[#allocation7 + $0x9d0] sm:$0xff]
    %v854 = vld [vmem:[#allocation7 + $0x9d8] sm:$0xff]
    %v855 = vld [vmem:[#allocation7 + $0x9e0] sm:$0xff]
    %v856 = vld [vmem:[#allocation7 + $0x9e8] sm:$0xff]
    %v857 = vld [vmem:[#allocation7 + $0x9f0] sm:$0xff]
    %v858 = vld [vmem:[#allocation7 + $0x9f8] sm:$0xff]
    %v859 = vld [vmem:[#allocation7 + $0xa00] sm:$0xff]
    %v860 = vld [vmem:[#allocation7 + $0xa08] sm:$0xff]
    %v861 = vld [vmem:[#allocation7 + $0xa10] sm:$0xff]
    %v862 = vld [vmem:[#allocation7 + $0xa18] sm:$0xff]
    %v863 = vld [vmem:[#allocation7 + $0xa20] sm:$0xff]
    %v864 = vld [vmem:[#allocation7 + $0xa28] sm:$0xff]
    %v865 = vld [vmem:[#allocation7 + $0xa30] sm:$0xff]
    %v866 = vld [vmem:[#allocation7 + $0xa38] sm:$0xff]
    %v867 = vld [vmem:[#allocation7 + $0xa40] sm:$0xff]
    %v868 = vld [vmem:[#allocation7 + $0xa48] sm:$0xff]
    %v869 = vld [vmem:[#allocation7 + $0xa50] sm:$0xff]
    %v870 = vld [vmem:[#allocation7 + $0xa58] sm:$0xff]
    %v871 = vld [vmem:[#allocation7 + $0xa60] sm:$0xff]
    %v872 = vld [vmem:[#allocation7 + $0xa68] sm:$0xff]
    %v873 = vld [vmem:[#allocation7 + $0xa70] sm:$0xff]
    %v874 = vld [vmem:[#allocation7 + $0xa78] sm:$0xff]
    %v875 = vld [vmem:[#allocation7 + $0xa80] sm:$0xff]
    %v876 = vld [vmem:[#allocation7 + $0xa88] sm:$0xff]
    %v877 = vld [vmem:[#allocation7 + $0xa90] sm:$0xff]
    %v878 = vld [vmem:[#allocation7 + $0xa98] sm:$0xff]
    %v879 = vld [vmem:[#allocation7 + $0xaa0] sm:$0xff]
    %v880 = vld [vmem:[#allocation7 + $0xaa8] sm:$0xff]
    %v881 = vld [vmem:[#allocation7 + $0xab0] sm:$0xff]
    %v882 = vld [vmem:[#allocation7 + $0xab8] sm:$0xff]
    %v883 = vld [vmem:[#allocation7 + $0xac0] sm:$0xff]
    %v884 = vld [vmem:[#allocation7 + $0xac8] sm:$0xff]
    %v885 = vld [vmem:[#allocation7 + $0xad0] sm:$0xff]
    %v886 = vld [vmem:[#allocation7 + $0xad8] sm:$0xff]
    %v887 = vld [vmem:[#allocation7 + $0xae0] sm:$0xff]
    %v888 = vld [vmem:[#allocation7 + $0xae8] sm:$0xff]
    %v889 = vld [vmem:[#allocation7 + $0xaf0] sm:$0xff]
    %v890 = vld [vmem:[#allocation7 + $0xaf8] sm:$0xff]
    %v891 = vld [vmem:[#allocation7 + $0xb00] sm:$0xff]
    %v892 = vld [vmem:[#allocation7 + $0xb08] sm:$0xff]
    %v893 = vld [vmem:[#allocation7 + $0xb10] sm:$0xff]
    %v894 = vld [vmem:[#allocation7 + $0xb18] sm:$0xff]
    %v895 = vld [vmem:[#allocation7 + $0xb20] sm:$0xff]
    %v896 = vld [vmem:[#allocation7 + $0xb28] sm:$0xff]
    %v897 = vld [vmem:[#allocation7 + $0xb30] sm:$0xff]
    %v898 = vld [vmem:[#allocation7 + $0xb38] sm:$0xff]
    %v899 = vld [vmem:[#allocation7 + $0xb40] sm:$0xff]
    %v900 = vld [vmem:[#allocation7 + $0xb48] sm:$0xff]
    %v901 = vld [vmem:[#allocation7 + $0xb50] sm:$0xff]
    %v902 = vld [vmem:[#allocation7 + $0xb58] sm:$0xff]
    %v903 = vld [vmem:[#allocation7 + $0xb60] sm:$0xff]
    %v904 = vld [vmem:[#allocation7 + $0xb68] sm:$0xff]
    %v905 = vld [vmem:[#allocation7 + $0xb70] sm:$0xff]
    %v906 = vld [vmem:[#allocation7 + $0xb78] sm:$0xff]
    %v907 = vld [vmem:[#allocation7 + $0xb80] sm:$0xff]
    %v908 = vld [vmem:[#allocation7 + $0xb88] sm:$0xff]
    %v909 = vld [vmem:[#allocation7 + $0xb90] sm:$0xff]
    %v910 = vld [vmem:[#allocation7 + $0xb98] sm:$0xff]
    %v911 = vld [vmem:[#allocation7 + $0xba0] sm:$0xff]
    %v912 = vld [vmem:[#allocation7 + $0xba8] sm:$0xff]
    %v913 = vld [vmem:[#allocation7 + $0xbb0] sm:$0xff]
    %v914 = vld [vmem:[#allocation7 + $0xbb8] sm:$0xff]
    %v915 = vld [vmem:[#allocation7 + $0xbc0] sm:$0xff]
    %v916 = vld [vmem:[#allocation7 + $0xbc8] sm:$0xff]
    %v917 = vld [vmem:[#allocation7 + $0xbd0] sm:$0xff]
    %v918 = vld [vmem:[#allocation7 + $0xbd8] sm:$0xff]
    %v919 = vld [vmem:[#allocation7 + $0xbe0] sm:$0xff]
    %v920 = vld [vmem:[#allocation7 + $0xbe8] sm:$0xff]
    %v921 = vld [vmem:[#allocation7 + $0xbf0] sm:$0xff]
    %v922 = vld [vmem:[#allocation7 + $0xbf8] sm:$0xff]
    %v923 = vld [vmem:[#allocation7 + $0xc00] sm:$0xff]
    %v924 = vld [vmem:[#allocation7 + $0xc08] sm:$0xff]
    %v925 = vld [vmem:[#allocation7 + $0xc10] sm:$0xff]
    %v926 = vld [vmem:[#allocation7 + $0xc18] sm:$0xff]
    %v927 = vld [vmem:[#allocation7 + $0xc20] sm:$0xff]
    %v928 = vld [vmem:[#allocation7 + $0xc28] sm:$0xff]
    %v929 = vld [vmem:[#allocation7 + $0xc30] sm:$0xff]
    %v930 = vld [vmem:[#allocation7 + $0xc38] sm:$0xff]
    %v931 = vld [vmem:[#allocation7 + $0xc40] sm:$0xff]
    %v932 = vld [vmem:[#allocation7 + $0xc48] sm:$0xff]
    %v933 = vld [vmem:[#allocation7 + $0xc50] sm:$0xff]
    %v934 = vld [vmem:[#allocation7 + $0xc58] sm:$0xff]
    %v935 = vld [vmem:[#allocation7 + $0xc60] sm:$0xff]
    %v936 = vld [vmem:[#allocation7 + $0xc68] sm:$0xff]
    %v937 = vld [vmem:[#allocation7 + $0xc70] sm:$0xff]
    %v938 = vld [vmem:[#allocation7 + $0xc78] sm:$0xff]
    %v939 = vld [vmem:[#allocation7 + $0xc80] sm:$0xff]
    %v940 = vld [vmem:[#allocation7 + $0xc88] sm:$0xff]
    %v941 = vld [vmem:[#allocation7 + $0xc90] sm:$0xff]
    %v942 = vld [vmem:[#allocation7 + $0xc98] sm:$0xff]
    %v943 = vld [vmem:[#allocation7 + $0xca0] sm:$0xff]
    %v944 = vld [vmem:[#allocation7 + $0xca8] sm:$0xff]
    %v945 = vld [vmem:[#allocation7 + $0xcb0] sm:$0xff]
    %v946 = vld [vmem:[#allocation7 + $0xcb8] sm:$0xff]
    %v947 = vld [vmem:[#allocation7 + $0xcc0] sm:$0xff]
    %v948 = vld [vmem:[#allocation7 + $0xcc8] sm:$0xff]
    %v949 = vld [vmem:[#allocation7 + $0xcd0] sm:$0xff]
    %v950 = vld [vmem:[#allocation7 + $0xcd8] sm:$0xff]
    %v951 = vld [vmem:[#allocation7 + $0xce0] sm:$0xff]
    %v952 = vld [vmem:[#allocation7 + $0xce8] sm:$0xff]
    %v953 = vld [vmem:[#allocation7 + $0xcf0] sm:$0xff]
    %v954 = vld [vmem:[#allocation7 + $0xcf8] sm:$0xff]
    %v955 = vld [vmem:[#allocation7 + $0xd00] sm:$0xff]
    %v956 = vld [vmem:[#allocation7 + $0xd08] sm:$0xff]
    %v957 = vld [vmem:[#allocation7 + $0xd10] sm:$0xff]
    %v958 = vld [vmem:[#allocation7 + $0xd18] sm:$0xff]
    %v959 = vld [vmem:[#allocation7 + $0xd20] sm:$0xff]
    %v960 = vld [vmem:[#allocation7 + $0xd28] sm:$0xff]
    %v961 = vld [vmem:[#allocation7 + $0xd30] sm:$0xff]
    %v962 = vld [vmem:[#allocation7 + $0xd38] sm:$0xff]
    %v963 = vld [vmem:[#allocation7 + $0xd40] sm:$0xff]
    %v964 = vld [vmem:[#allocation7 + $0xd48] sm:$0xff]
    %v965 = vld [vmem:[#allocation7 + $0xd50] sm:$0xff]
    %v966 = vld [vmem:[#allocation7 + $0xd58] sm:$0xff]
    %v967 = vld [vmem:[#allocation7 + $0xd60] sm:$0xff]
    %v968 = vld [vmem:[#allocation7 + $0xd68] sm:$0xff]
    %v969 = vld [vmem:[#allocation7 + $0xd70] sm:$0xff]
    %v970 = vld [vmem:[#allocation7 + $0xd78] sm:$0xff]
    %v971 = vld [vmem:[#allocation7 + $0xd80] sm:$0xff]
    %v972 = vld [vmem:[#allocation7 + $0xd88] sm:$0xff]
    %v973 = vld [vmem:[#allocation7 + $0xd90] sm:$0xff]
    %v974 = vld [vmem:[#allocation7 + $0xd98] sm:$0xff]
    %v975 = vld [vmem:[#allocation7 + $0xda0] sm:$0xff]
    %v976 = vld [vmem:[#allocation7 + $0xda8] sm:$0xff]
    %v977 = vld [vmem:[#allocation7 + $0xdb0] sm:$0xff]
    %v978 = vld [vmem:[#allocation7 + $0xdb8] sm:$0xff]
    %v979 = vld [vmem:[#allocation7 + $0xdc0] sm:$0xff]
    %v980 = vld [vmem:[#allocation7 + $0xdc8] sm:$0xff]
    %v981 = vld [vmem:[#allocation7 + $0xdd0] sm:$0xff]
    %v982 = vld [vmem:[#allocation7 + $0xdd8] sm:$0xff]
    %v983 = vld [vmem:[#allocation7 + $0xde0] sm:$0xff]
    %v984 = vld [vmem:[#allocation7 + $0xde8] sm:$0xff]
    %v985 = vld [vmem:[#allocation7 + $0xdf0] sm:$0xff]
    %v986 = vld [vmem:[#allocation7 + $0xdf8] sm:$0xff]
    %v987 = vld [vmem:[#allocation7 + $0xe00] sm:$0xff]
    %v988 = vld [vmem:[#allocation7 + $0xe08] sm:$0xff]
    %v989 = vld [vmem:[#allocation7 + $0xe10] sm:$0xff]
    %v990 = vld [vmem:[#allocation7 + $0xe18] sm:$0xff]
    %v991 = vld [vmem:[#allocation7 + $0xe20] sm:$0xff]
    %v992 = vld [vmem:[#allocation7 + $0xe28] sm:$0xff]
    %v993 = vld [vmem:[#allocation7 + $0xe30] sm:$0xff]
    %v994 = vld [vmem:[#allocation7 + $0xe38] sm:$0xff]
    %v995 = vld [vmem:[#allocation7 + $0xe40] sm:$0xff]
    %v996 = vld [vmem:[#allocation7 + $0xe48] sm:$0xff]
    %v997 = vld [vmem:[#allocation7 + $0xe50] sm:$0xff]
    %v998 = vld [vmem:[#allocation7 + $0xe58] sm:$0xff]
    %v999 = vld [vmem:[#allocation7 + $0xe60] sm:$0xff]
    %v1000 = vld [vmem:[#allocation7 + $0xe68] sm:$0xff]
    %v1001 = vld [vmem:[#allocation7 + $0xe70] sm:$0xff]
    %v1002 = vld [vmem:[#allocation7 + $0xe78] sm:$0xff]
    %v1003 = vld [vmem:[#allocation7 + $0xe80] sm:$0xff]
    %v1004 = vld [vmem:[#allocation7 + $0xe88] sm:$0xff]
    %v1005 = vld [vmem:[#allocation7 + $0xe90] sm:$0xff]
    %v1006 = vld [vmem:[#allocation7 + $0xe98] sm:$0xff]
    %v1007 = vld [vmem:[#allocation7 + $0xea0] sm:$0xff]
    %v1008 = vld [vmem:[#allocation7 + $0xea8] sm:$0xff]
    %v1009 = vld [vmem:[#allocation7 + $0xeb0] sm:$0xff]
    %v1010 = vld [vmem:[#allocation7 + $0xeb8] sm:$0xff]
    %v1011 = vld [vmem:[#allocation7 + $0xec0] sm:$0xff]
    %v1012 = vld [vmem:[#allocation7 + $0xec8] sm:$0xff]
    %v1013 = vld [vmem:[#allocation7 + $0xed0] sm:$0xff]
    %v1014 = vld [vmem:[#allocation7 + $0xed8] sm:$0xff]
    %v1015 = vld [vmem:[#allocation7 + $0xee0] sm:$0xff]
    %v1016 = vld [vmem:[#allocation7 + $0xee8] sm:$0xff]
    %v1017 = vld [vmem:[#allocation7 + $0xef0] sm:$0xff]
    %v1018 = vld [vmem:[#allocation7 + $0xef8] sm:$0xff]
    %v1019 = vld [vmem:[#allocation7 + $0xf00] sm:$0xff]
    %v1020 = vld [vmem:[#allocation7 + $0xf08] sm:$0xff]
    %v1021 = vld [vmem:[#allocation7 + $0xf10] sm:$0xff]
    %v1022 = vld [vmem:[#allocation7 + $0xf18] sm:$0xff]
    %v1023 = vld [vmem:[#allocation7 + $0xf20] sm:$0xff]
    %v1024 = vld [vmem:[#allocation7 + $0xf28] sm:$0xff]
    %v1025 = vld [vmem:[#allocation7 + $0xf30] sm:$0xff]
    %v1026 = vld [vmem:[#allocation7 + $0xf38] sm:$0xff]
    %v1027 = vld [vmem:[#allocation7 + $0xf40] sm:$0xff]
    %v1028 = vld [vmem:[#allocation7 + $0xf48] sm:$0xff]
    %v1029 = vld [vmem:[#allocation7 + $0xf50] sm:$0xff]
    %v1030 = vld [vmem:[#allocation7 + $0xf58] sm:$0xff]
    %v1031 = vld [vmem:[#allocation7 + $0xf60] sm:$0xff]
    %v1032 = vld [vmem:[#allocation7 + $0xf68] sm:$0xff]
    %v1033 = vld [vmem:[#allocation7 + $0xf70] sm:$0xff]
    %v1034 = vld [vmem:[#allocation7 + $0xf78] sm:$0xff]
    %v1035 = vld [vmem:[#allocation7 + $0xf80] sm:$0xff]
    %v1036 = vld [vmem:[#allocation7 + $0xf88] sm:$0xff]
    %v1037 = vld [vmem:[#allocation7 + $0xf90] sm:$0xff]
    %v1038 = vld [vmem:[#allocation7 + $0xf98] sm:$0xff]
    %v1039 = vld [vmem:[#allocation7 + $0xfa0] sm:$0xff]
    %v1040 = vld [vmem:[#allocation7 + $0xfa8] sm:$0xff]
    %v1041 = vld [vmem:[#allocation7 + $0xfb0] sm:$0xff]
    %v1042 = vld [vmem:[#allocation7 + $0xfb8] sm:$0xff]
    %v1043 = vld [vmem:[#allocation7 + $0xfc0] sm:$0xff]
    %v1044 = vld [vmem:[#allocation7 + $0xfc8] sm:$0xff]
    %v1045 = vld [vmem:[#allocation7 + $0xfd0] sm:$0xff]
    %v1046 = vld [vmem:[#allocation7 + $0xfd8] sm:$0xff]
    %v1047 = vld [vmem:[#allocation7 + $0xfe0] sm:$0xff]
    %v1048 = vld [vmem:[#allocation7 + $0xfe8] sm:$0xff]
    %v1049 = vld [vmem:[#allocation7 + $0xff0] sm:$0xff]
    %v1050 = vld [vmem:[#allocation7 + $0xff8] sm:$0xff]
    %v1051 = vld [vmem:[#allocation8] sm:$0xff]
    %v1053 = vlaneseq
    %v1054 = vshrl.u32 %v1053, 7
    %v1055 = vsub.s32 0, %v1054
    %v1056 = vrot.slane %v1051, %v1055
    %v1057 = vlaneseq
    %v1058 = vshrl.u32 %v1057, 7
    %v1059 = vsub.s32 1, %v1058
    %v1060 = vrot.slane %v1051, %v1059
    %v1061 = vlaneseq
    %v1062 = vshrl.u32 %v1061, 7
    %v1063 = vsub.s32 2, %v1062
    %v1064 = vrot.slane %v1051, %v1063
    %v1065 = vlaneseq
    %v1066 = vshrl.u32 %v1065, 7
    %v1067 = vsub.s32 3, %v1066
    %v1068 = vrot.slane %v1051, %v1067
    %v1069 = vlaneseq
    %v1070 = vshrl.u32 %v1069, 7
    %v1071 = vsub.s32 4, %v1070
    %v1072 = vrot.slane %v1051, %v1071
    %v1073 = vlaneseq
    %v1074 = vshrl.u32 %v1073, 7
    %v1075 = vsub.s32 5, %v1074
    %v1076 = vrot.slane %v1051, %v1075
    %v1077 = vlaneseq
    %v1078 = vshrl.u32 %v1077, 7
    %v1079 = vsub.s32 6, %v1078
    %v1080 = vrot.slane %v1051, %v1079
    %v1081 = vlaneseq
    %v1082 = vshrl.u32 %v1081, 7
    %v1083 = vsub.s32 7, %v1082
    %v1084 = vrot.slane %v1051, %v1083
    %v1605 = vunpack.c.l.b16 %v539
    %v1606 = vunpack.c.h.b16 %v539
    %v1607 = vunpack.c.l.b16 %v540
    %v1608 = vunpack.c.h.b16 %v540
    %v1609 = vunpack.c.l.b16 %v541
    %v1610 = vunpack.c.h.b16 %v541
    %v1611 = vunpack.c.l.b16 %v542
    %v1612 = vunpack.c.h.b16 %v542
    %v1613 = vunpack.c.l.b16 %v543
    %v1614 = vunpack.c.h.b16 %v543
    %v1615 = vunpack.c.l.b16 %v544
    %v1616 = vunpack.c.h.b16 %v544
    %v1617 = vunpack.c.l.b16 %v545
    %v1618 = vunpack.c.h.b16 %v545
    %v1619 = vunpack.c.l.b16 %v546
    %v1620 = vunpack.c.h.b16 %v546
    %v1621 = vunpack.c.l.b16 %v547
    %v1622 = vunpack.c.h.b16 %v547
    %v1623 = vunpack.c.l.b16 %v548
    %v1624 = vunpack.c.h.b16 %v548
    %v1625 = vunpack.c.l.b16 %v549
    %v1626 = vunpack.c.h.b16 %v549
    %v1627 = vunpack.c.l.b16 %v550
    %v1628 = vunpack.c.h.b16 %v550
    %v1629 = vunpack.c.l.b16 %v551
    %v1630 = vunpack.c.h.b16 %v551
    %v1631 = vunpack.c.l.b16 %v552
    %v1632 = vunpack.c.h.b16 %v552
    %v1633 = vunpack.c.l.b16 %v553
    %v1634 = vunpack.c.h.b16 %v553
    %v1635 = vunpack.c.l.b16 %v554
    %v1636 = vunpack.c.h.b16 %v554
    %v1637 = vunpack.c.l.b16 %v555
    %v1638 = vunpack.c.h.b16 %v555
    %v1639 = vunpack.c.l.b16 %v556
    %v1640 = vunpack.c.h.b16 %v556
    %v1641 = vunpack.c.l.b16 %v557
    %v1642 = vunpack.c.h.b16 %v557
    %v1643 = vunpack.c.l.b16 %v558
    %v1644 = vunpack.c.h.b16 %v558
    %v1645 = vunpack.c.l.b16 %v559
    %v1646 = vunpack.c.h.b16 %v559
    %v1647 = vunpack.c.l.b16 %v560
    %v1648 = vunpack.c.h.b16 %v560
    %v1649 = vunpack.c.l.b16 %v561
    %v1650 = vunpack.c.h.b16 %v561
    %v1651 = vunpack.c.l.b16 %v562
    %v1652 = vunpack.c.h.b16 %v562
    %v1653 = vunpack.c.l.b16 %v563
    %v1654 = vunpack.c.h.b16 %v563
    %v1655 = vunpack.c.l.b16 %v564
    %v1656 = vunpack.c.h.b16 %v564
    %v1657 = vunpack.c.l.b16 %v565
    %v1658 = vunpack.c.h.b16 %v565
    %v1659 = vunpack.c.l.b16 %v566
    %v1660 = vunpack.c.h.b16 %v566
    %v1661 = vunpack.c.l.b16 %v567
    %v1662 = vunpack.c.h.b16 %v567
    %v1663 = vunpack.c.l.b16 %v568
    %v1664 = vunpack.c.h.b16 %v568
    %v1665 = vunpack.c.l.b16 %v569
    %v1666 = vunpack.c.h.b16 %v569
    %v1667 = vunpack.c.l.b16 %v570
    %v1668 = vunpack.c.h.b16 %v570
    %v1669 = vunpack.c.l.b16 %v571
    %v1670 = vunpack.c.h.b16 %v571
    %v1671 = vunpack.c.l.b16 %v572
    %v1672 = vunpack.c.h.b16 %v572
    %v1673 = vunpack.c.l.b16 %v573
    %v1674 = vunpack.c.h.b16 %v573
    %v1675 = vunpack.c.l.b16 %v574
    %v1676 = vunpack.c.h.b16 %v574
    %v1677 = vunpack.c.l.b16 %v575
    %v1678 = vunpack.c.h.b16 %v575
    %v1679 = vunpack.c.l.b16 %v576
    %v1680 = vunpack.c.h.b16 %v576
    %v1681 = vunpack.c.l.b16 %v577
    %v1682 = vunpack.c.h.b16 %v577
    %v1683 = vunpack.c.l.b16 %v578
    %v1684 = vunpack.c.h.b16 %v578
    %v1685 = vunpack.c.l.b16 %v579
    %v1686 = vunpack.c.h.b16 %v579
    %v1687 = vunpack.c.l.b16 %v580
    %v1688 = vunpack.c.h.b16 %v580
    %v1689 = vunpack.c.l.b16 %v581
    %v1690 = vunpack.c.h.b16 %v581
    %v1691 = vunpack.c.l.b16 %v582
    %v1692 = vunpack.c.h.b16 %v582
    %v1693 = vunpack.c.l.b16 %v583
    %v1694 = vunpack.c.h.b16 %v583
    %v1695 = vunpack.c.l.b16 %v584
    %v1696 = vunpack.c.h.b16 %v584
    %v1697 = vunpack.c.l.b16 %v585
    %v1698 = vunpack.c.h.b16 %v585
    %v1699 = vunpack.c.l.b16 %v586
    %v1700 = vunpack.c.h.b16 %v586
    %v1701 = vunpack.c.l.b16 %v587
    %v1702 = vunpack.c.h.b16 %v587
    %v1703 = vunpack.c.l.b16 %v588
    %v1704 = vunpack.c.h.b16 %v588
    %v1705 = vunpack.c.l.b16 %v589
    %v1706 = vunpack.c.h.b16 %v589
    %v1707 = vunpack.c.l.b16 %v590
    %v1708 = vunpack.c.h.b16 %v590
    %v1709 = vunpack.c.l.b16 %v591
    %v1710 = vunpack.c.h.b16 %v591
    %v1711 = vunpack.c.l.b16 %v592
    %v1712 = vunpack.c.h.b16 %v592
    %v1713 = vunpack.c.l.b16 %v593
    %v1714 = vunpack.c.h.b16 %v593
    %v1715 = vunpack.c.l.b16 %v594
    %v1716 = vunpack.c.h.b16 %v594
    %v1717 = vunpack.c.l.b16 %v595
    %v1718 = vunpack.c.h.b16 %v595
    %v1719 = vunpack.c.l.b16 %v596
    %v1720 = vunpack.c.h.b16 %v596
    %v1721 = vunpack.c.l.b16 %v597
    %v1722 = vunpack.c.h.b16 %v597
    %v1723 = vunpack.c.l.b16 %v598
    %v1724 = vunpack.c.h.b16 %v598
    %v1725 = vunpack.c.l.b16 %v599
    %v1726 = vunpack.c.h.b16 %v599
    %v1727 = vunpack.c.l.b16 %v600
    %v1728 = vunpack.c.h.b16 %v600
    %v1729 = vunpack.c.l.b16 %v601
    %v1730 = vunpack.c.h.b16 %v601
    %v1731 = vunpack.c.l.b16 %v602
    %v1732 = vunpack.c.h.b16 %v602
    %v1733 = vunpack.c.l.b16 %v603
    %v1734 = vunpack.c.h.b16 %v603
    %v1735 = vunpack.c.l.b16 %v604
    %v1736 = vunpack.c.h.b16 %v604
    %v1737 = vunpack.c.l.b16 %v605
    %v1738 = vunpack.c.h.b16 %v605
    %v1739 = vunpack.c.l.b16 %v606
    %v1740 = vunpack.c.h.b16 %v606
    %v1741 = vunpack.c.l.b16 %v607
    %v1742 = vunpack.c.h.b16 %v607
    %v1743 = vunpack.c.l.b16 %v608
    %v1744 = vunpack.c.h.b16 %v608
    %v1745 = vunpack.c.l.b16 %v609
    %v1746 = vunpack.c.h.b16 %v609
    %v1747 = vunpack.c.l.b16 %v610
    %v1748 = vunpack.c.h.b16 %v610
    %v1749 = vunpack.c.l.b16 %v611
    %v1750 = vunpack.c.h.b16 %v611
    %v1751 = vunpack.c.l.b16 %v612
    %v1752 = vunpack.c.h.b16 %v612
    %v1753 = vunpack.c.l.b16 %v613
    %v1754 = vunpack.c.h.b16 %v613
    %v1755 = vunpack.c.l.b16 %v614
    %v1756 = vunpack.c.h.b16 %v614
    %v1757 = vunpack.c.l.b16 %v615
    %v1758 = vunpack.c.h.b16 %v615
    %v1759 = vunpack.c.l.b16 %v616
    %v1760 = vunpack.c.h.b16 %v616
    %v1761 = vunpack.c.l.b16 %v617
    %v1762 = vunpack.c.h.b16 %v617
    %v1763 = vunpack.c.l.b16 %v618
    %v1764 = vunpack.c.h.b16 %v618
    %v1765 = vunpack.c.l.b16 %v619
    %v1766 = vunpack.c.h.b16 %v619
    %v1767 = vunpack.c.l.b16 %v620
    %v1768 = vunpack.c.h.b16 %v620
    %v1769 = vunpack.c.l.b16 %v621
    %v1770 = vunpack.c.h.b16 %v621
    %v1771 = vunpack.c.l.b16 %v622
    %v1772 = vunpack.c.h.b16 %v622
    %v1773 = vunpack.c.l.b16 %v623
    %v1774 = vunpack.c.h.b16 %v623
    %v1775 = vunpack.c.l.b16 %v624
    %v1776 = vunpack.c.h.b16 %v624
    %v1777 = vunpack.c.l.b16 %v625
    %v1778 = vunpack.c.h.b16 %v625
    %v1779 = vunpack.c.l.b16 %v626
    %v1780 = vunpack.c.h.b16 %v626
    %v1781 = vunpack.c.l.b16 %v627
    %v1782 = vunpack.c.h.b16 %v627
    %v1783 = vunpack.c.l.b16 %v628
    %v1784 = vunpack.c.h.b16 %v628
    %v1785 = vunpack.c.l.b16 %v629
    %v1786 = vunpack.c.h.b16 %v629
    %v1787 = vunpack.c.l.b16 %v630
    %v1788 = vunpack.c.h.b16 %v630
    %v1789 = vunpack.c.l.b16 %v631
    %v1790 = vunpack.c.h.b16 %v631
    %v1791 = vunpack.c.l.b16 %v632
    %v1792 = vunpack.c.h.b16 %v632
    %v1793 = vunpack.c.l.b16 %v633
    %v1794 = vunpack.c.h.b16 %v633
    %v1795 = vunpack.c.l.b16 %v634
    %v1796 = vunpack.c.h.b16 %v634
    %v1797 = vunpack.c.l.b16 %v635
    %v1798 = vunpack.c.h.b16 %v635
    %v1799 = vunpack.c.l.b16 %v636
    %v1800 = vunpack.c.h.b16 %v636
    %v1801 = vunpack.c.l.b16 %v637
    %v1802 = vunpack.c.h.b16 %v637
    %v1803 = vunpack.c.l.b16 %v638
    %v1804 = vunpack.c.h.b16 %v638
    %v1805 = vunpack.c.l.b16 %v639
    %v1806 = vunpack.c.h.b16 %v639
    %v1807 = vunpack.c.l.b16 %v640
    %v1808 = vunpack.c.h.b16 %v640
    %v1809 = vunpack.c.l.b16 %v641
    %v1810 = vunpack.c.h.b16 %v641
    %v1811 = vunpack.c.l.b16 %v642
    %v1812 = vunpack.c.h.b16 %v642
    %v1813 = vunpack.c.l.b16 %v643
    %v1814 = vunpack.c.h.b16 %v643
    %v1815 = vunpack.c.l.b16 %v644
    %v1816 = vunpack.c.h.b16 %v644
    %v1817 = vunpack.c.l.b16 %v645
    %v1818 = vunpack.c.h.b16 %v645
    %v1819 = vunpack.c.l.b16 %v646
    %v1820 = vunpack.c.h.b16 %v646
    %v1821 = vunpack.c.l.b16 %v647
    %v1822 = vunpack.c.h.b16 %v647
    %v1823 = vunpack.c.l.b16 %v648
    %v1824 = vunpack.c.h.b16 %v648
    %v1825 = vunpack.c.l.b16 %v649
    %v1826 = vunpack.c.h.b16 %v649
    %v1827 = vunpack.c.l.b16 %v650
    %v1828 = vunpack.c.h.b16 %v650
    %v1829 = vunpack.c.l.b16 %v651
    %v1830 = vunpack.c.h.b16 %v651
    %v1831 = vunpack.c.l.b16 %v652
    %v1832 = vunpack.c.h.b16 %v652
    %v1833 = vunpack.c.l.b16 %v653
    %v1834 = vunpack.c.h.b16 %v653
    %v1835 = vunpack.c.l.b16 %v654
    %v1836 = vunpack.c.h.b16 %v654
    %v1837 = vunpack.c.l.b16 %v655
    %v1838 = vunpack.c.h.b16 %v655
    %v1839 = vunpack.c.l.b16 %v656
    %v1840 = vunpack.c.h.b16 %v656
    %v1841 = vunpack.c.l.b16 %v657
    %v1842 = vunpack.c.h.b16 %v657
    %v1843 = vunpack.c.l.b16 %v658
    %v1844 = vunpack.c.h.b16 %v658
    %v1845 = vunpack.c.l.b16 %v659
    %v1846 = vunpack.c.h.b16 %v659
    %v1847 = vunpack.c.l.b16 %v660
    %v1848 = vunpack.c.h.b16 %v660
    %v1849 = vunpack.c.l.b16 %v661
    %v1850 = vunpack.c.h.b16 %v661
    %v1851 = vunpack.c.l.b16 %v662
    %v1852 = vunpack.c.h.b16 %v662
    %v1853 = vunpack.c.l.b16 %v663
    %v1854 = vunpack.c.h.b16 %v663
    %v1855 = vunpack.c.l.b16 %v664
    %v1856 = vunpack.c.h.b16 %v664
    %v1857 = vunpack.c.l.b16 %v665
    %v1858 = vunpack.c.h.b16 %v665
    %v1859 = vunpack.c.l.b16 %v666
    %v1860 = vunpack.c.h.b16 %v666
    %v1861 = vunpack.c.l.b16 %v667
    %v1862 = vunpack.c.h.b16 %v667
    %v1863 = vunpack.c.l.b16 %v668
    %v1864 = vunpack.c.h.b16 %v668
    %v1865 = vunpack.c.l.b16 %v669
    %v1866 = vunpack.c.h.b16 %v669
    %v1867 = vunpack.c.l.b16 %v670
    %v1868 = vunpack.c.h.b16 %v670
    %v1869 = vunpack.c.l.b16 %v671
    %v1870 = vunpack.c.h.b16 %v671
    %v1871 = vunpack.c.l.b16 %v672
    %v1872 = vunpack.c.h.b16 %v672
    %v1873 = vunpack.c.l.b16 %v673
    %v1874 = vunpack.c.h.b16 %v673
    %v1875 = vunpack.c.l.b16 %v674
    %v1876 = vunpack.c.h.b16 %v674
    %v1877 = vunpack.c.l.b16 %v675
    %v1878 = vunpack.c.h.b16 %v675
    %v1879 = vunpack.c.l.b16 %v676
    %v1880 = vunpack.c.h.b16 %v676
    %v1881 = vunpack.c.l.b16 %v677
    %v1882 = vunpack.c.h.b16 %v677
    %v1883 = vunpack.c.l.b16 %v678
    %v1884 = vunpack.c.h.b16 %v678
    %v1885 = vunpack.c.l.b16 %v679
    %v1886 = vunpack.c.h.b16 %v679
    %v1887 = vunpack.c.l.b16 %v680
    %v1888 = vunpack.c.h.b16 %v680
    %v1889 = vunpack.c.l.b16 %v681
    %v1890 = vunpack.c.h.b16 %v681
    %v1891 = vunpack.c.l.b16 %v682
    %v1892 = vunpack.c.h.b16 %v682
    %v1893 = vunpack.c.l.b16 %v683
    %v1894 = vunpack.c.h.b16 %v683
    %v1895 = vunpack.c.l.b16 %v684
    %v1896 = vunpack.c.h.b16 %v684
    %v1897 = vunpack.c.l.b16 %v685
    %v1898 = vunpack.c.h.b16 %v685
    %v1899 = vunpack.c.l.b16 %v686
    %v1900 = vunpack.c.h.b16 %v686
    %v1901 = vunpack.c.l.b16 %v687
    %v1902 = vunpack.c.h.b16 %v687
    %v1903 = vunpack.c.l.b16 %v688
    %v1904 = vunpack.c.h.b16 %v688
    %v1905 = vunpack.c.l.b16 %v689
    %v1906 = vunpack.c.h.b16 %v689
    %v1907 = vunpack.c.l.b16 %v690
    %v1908 = vunpack.c.h.b16 %v690
    %v1909 = vunpack.c.l.b16 %v691
    %v1910 = vunpack.c.h.b16 %v691
    %v1911 = vunpack.c.l.b16 %v692
    %v1912 = vunpack.c.h.b16 %v692
    %v1913 = vunpack.c.l.b16 %v693
    %v1914 = vunpack.c.h.b16 %v693
    %v1915 = vunpack.c.l.b16 %v694
    %v1916 = vunpack.c.h.b16 %v694
    %v1917 = vunpack.c.l.b16 %v695
    %v1918 = vunpack.c.h.b16 %v695
    %v1919 = vunpack.c.l.b16 %v696
    %v1920 = vunpack.c.h.b16 %v696
    %v1921 = vunpack.c.l.b16 %v697
    %v1922 = vunpack.c.h.b16 %v697
    %v1923 = vunpack.c.l.b16 %v698
    %v1924 = vunpack.c.h.b16 %v698
    %v1925 = vunpack.c.l.b16 %v699
    %v1926 = vunpack.c.h.b16 %v699
    %v1927 = vunpack.c.l.b16 %v700
    %v1928 = vunpack.c.h.b16 %v700
    %v1929 = vunpack.c.l.b16 %v701
    %v1930 = vunpack.c.h.b16 %v701
    %v1931 = vunpack.c.l.b16 %v702
    %v1932 = vunpack.c.h.b16 %v702
    %v1933 = vunpack.c.l.b16 %v703
    %v1934 = vunpack.c.h.b16 %v703
    %v1935 = vunpack.c.l.b16 %v704
    %v1936 = vunpack.c.h.b16 %v704
    %v1937 = vunpack.c.l.b16 %v705
    %v1938 = vunpack.c.h.b16 %v705
    %v1939 = vunpack.c.l.b16 %v706
    %v1940 = vunpack.c.h.b16 %v706
    %v1941 = vunpack.c.l.b16 %v707
    %v1942 = vunpack.c.h.b16 %v707
    %v1943 = vunpack.c.l.b16 %v708
    %v1944 = vunpack.c.h.b16 %v708
    %v1945 = vunpack.c.l.b16 %v709
    %v1946 = vunpack.c.h.b16 %v709
    %v1947 = vunpack.c.l.b16 %v710
    %v1948 = vunpack.c.h.b16 %v710
    %v1949 = vunpack.c.l.b16 %v711
    %v1950 = vunpack.c.h.b16 %v711
    %v1951 = vunpack.c.l.b16 %v712
    %v1952 = vunpack.c.h.b16 %v712
    %v1953 = vunpack.c.l.b16 %v713
    %v1954 = vunpack.c.h.b16 %v713
    %v1955 = vunpack.c.l.b16 %v714
    %v1956 = vunpack.c.h.b16 %v714
    %v1957 = vunpack.c.l.b16 %v715
    %v1958 = vunpack.c.h.b16 %v715
    %v1959 = vunpack.c.l.b16 %v716
    %v1960 = vunpack.c.h.b16 %v716
    %v1961 = vunpack.c.l.b16 %v717
    %v1962 = vunpack.c.h.b16 %v717
    %v1963 = vunpack.c.l.b16 %v718
    %v1964 = vunpack.c.h.b16 %v718
    %v1965 = vunpack.c.l.b16 %v719
    %v1966 = vunpack.c.h.b16 %v719
    %v1967 = vunpack.c.l.b16 %v720
    %v1968 = vunpack.c.h.b16 %v720
    %v1969 = vunpack.c.l.b16 %v721
    %v1970 = vunpack.c.h.b16 %v721
    %v1971 = vunpack.c.l.b16 %v722
    %v1972 = vunpack.c.h.b16 %v722
    %v1973 = vunpack.c.l.b16 %v723
    %v1974 = vunpack.c.h.b16 %v723
    %v1975 = vunpack.c.l.b16 %v724
    %v1976 = vunpack.c.h.b16 %v724
    %v1977 = vunpack.c.l.b16 %v725
    %v1978 = vunpack.c.h.b16 %v725
    %v1979 = vunpack.c.l.b16 %v726
    %v1980 = vunpack.c.h.b16 %v726
    %v1981 = vunpack.c.l.b16 %v727
    %v1982 = vunpack.c.h.b16 %v727
    %v1983 = vunpack.c.l.b16 %v728
    %v1984 = vunpack.c.h.b16 %v728
    %v1985 = vunpack.c.l.b16 %v729
    %v1986 = vunpack.c.h.b16 %v729
    %v1987 = vunpack.c.l.b16 %v730
    %v1988 = vunpack.c.h.b16 %v730
    %v1989 = vunpack.c.l.b16 %v731
    %v1990 = vunpack.c.h.b16 %v731
    %v1991 = vunpack.c.l.b16 %v732
    %v1992 = vunpack.c.h.b16 %v732
    %v1993 = vunpack.c.l.b16 %v733
    %v1994 = vunpack.c.h.b16 %v733
    %v1995 = vunpack.c.l.b16 %v734
    %v1996 = vunpack.c.h.b16 %v734
    %v1997 = vunpack.c.l.b16 %v735
    %v1998 = vunpack.c.h.b16 %v735
    %v1999 = vunpack.c.l.b16 %v736
    %v2000 = vunpack.c.h.b16 %v736
    %v2001 = vunpack.c.l.b16 %v737
    %v2002 = vunpack.c.h.b16 %v737
    %v2003 = vunpack.c.l.b16 %v738
    %v2004 = vunpack.c.h.b16 %v738
    %v2005 = vunpack.c.l.b16 %v739
    %v2006 = vunpack.c.h.b16 %v739
    %v2007 = vunpack.c.l.b16 %v740
    %v2008 = vunpack.c.h.b16 %v740
    %v2009 = vunpack.c.l.b16 %v741
    %v2010 = vunpack.c.h.b16 %v741
    %v2011 = vunpack.c.l.b16 %v742
    %v2012 = vunpack.c.h.b16 %v742
    %v2013 = vunpack.c.l.b16 %v743
    %v2014 = vunpack.c.h.b16 %v743
    %v2015 = vunpack.c.l.b16 %v744
    %v2016 = vunpack.c.h.b16 %v744
    %v2017 = vunpack.c.l.b16 %v745
    %v2018 = vunpack.c.h.b16 %v745
    %v2019 = vunpack.c.l.b16 %v746
    %v2020 = vunpack.c.h.b16 %v746
    %v2021 = vunpack.c.l.b16 %v747
    %v2022 = vunpack.c.h.b16 %v747
    %v2023 = vunpack.c.l.b16 %v748
    %v2024 = vunpack.c.h.b16 %v748
    %v2025 = vunpack.c.l.b16 %v749
    %v2026 = vunpack.c.h.b16 %v749
    %v2027 = vunpack.c.l.b16 %v750
    %v2028 = vunpack.c.h.b16 %v750
    %v2029 = vunpack.c.l.b16 %v751
    %v2030 = vunpack.c.h.b16 %v751
    %v2031 = vunpack.c.l.b16 %v752
    %v2032 = vunpack.c.h.b16 %v752
    %v2033 = vunpack.c.l.b16 %v753
    %v2034 = vunpack.c.h.b16 %v753
    %v2035 = vunpack.c.l.b16 %v754
    %v2036 = vunpack.c.h.b16 %v754
    %v2037 = vunpack.c.l.b16 %v755
    %v2038 = vunpack.c.h.b16 %v755
    %v2039 = vunpack.c.l.b16 %v756
    %v2040 = vunpack.c.h.b16 %v756
    %v2041 = vunpack.c.l.b16 %v757
    %v2042 = vunpack.c.h.b16 %v757
    %v2043 = vunpack.c.l.b16 %v758
    %v2044 = vunpack.c.h.b16 %v758
    %v2045 = vunpack.c.l.b16 %v759
    %v2046 = vunpack.c.h.b16 %v759
    %v2047 = vunpack.c.l.b16 %v760
    %v2048 = vunpack.c.h.b16 %v760
    %v2049 = vunpack.c.l.b16 %v761
    %v2050 = vunpack.c.h.b16 %v761
    %v2051 = vunpack.c.l.b16 %v762
    %v2052 = vunpack.c.h.b16 %v762
    %v2053 = vunpack.c.l.b16 %v763
    %v2054 = vunpack.c.h.b16 %v763
    %v2055 = vunpack.c.l.b16 %v764
    %v2056 = vunpack.c.h.b16 %v764
    %v2057 = vunpack.c.l.b16 %v765
    %v2058 = vunpack.c.h.b16 %v765
    %v2059 = vunpack.c.l.b16 %v766
    %v2060 = vunpack.c.h.b16 %v766
    %v2061 = vunpack.c.l.b16 %v767
    %v2062 = vunpack.c.h.b16 %v767
    %v2063 = vunpack.c.l.b16 %v768
    %v2064 = vunpack.c.h.b16 %v768
    %v2065 = vunpack.c.l.b16 %v769
    %v2066 = vunpack.c.h.b16 %v769
    %v2067 = vunpack.c.l.b16 %v770
    %v2068 = vunpack.c.h.b16 %v770
    %v2069 = vunpack.c.l.b16 %v771
    %v2070 = vunpack.c.h.b16 %v771
    %v2071 = vunpack.c.l.b16 %v772
    %v2072 = vunpack.c.h.b16 %v772
    %v2073 = vunpack.c.l.b16 %v773
    %v2074 = vunpack.c.h.b16 %v773
    %v2075 = vunpack.c.l.b16 %v774
    %v2076 = vunpack.c.h.b16 %v774
    %v2077 = vunpack.c.l.b16 %v775
    %v2078 = vunpack.c.h.b16 %v775
    %v2079 = vunpack.c.l.b16 %v776
    %v2080 = vunpack.c.h.b16 %v776
    %v2081 = vunpack.c.l.b16 %v777
    %v2082 = vunpack.c.h.b16 %v777
    %v2083 = vunpack.c.l.b16 %v778
    %v2084 = vunpack.c.h.b16 %v778
    %v2085 = vunpack.c.l.b16 %v779
    %v2086 = vunpack.c.h.b16 %v779
    %v2087 = vunpack.c.l.b16 %v780
    %v2088 = vunpack.c.h.b16 %v780
    %v2089 = vunpack.c.l.b16 %v781
    %v2090 = vunpack.c.h.b16 %v781
    %v2091 = vunpack.c.l.b16 %v782
    %v2092 = vunpack.c.h.b16 %v782
    %v2093 = vunpack.c.l.b16 %v783
    %v2094 = vunpack.c.h.b16 %v783
    %v2095 = vunpack.c.l.b16 %v784
    %v2096 = vunpack.c.h.b16 %v784
    %v2097 = vunpack.c.l.b16 %v785
    %v2098 = vunpack.c.h.b16 %v785
    %v2099 = vunpack.c.l.b16 %v786
    %v2100 = vunpack.c.h.b16 %v786
    %v2101 = vunpack.c.l.b16 %v787
    %v2102 = vunpack.c.h.b16 %v787
    %v2103 = vunpack.c.l.b16 %v788
    %v2104 = vunpack.c.h.b16 %v788
    %v2105 = vunpack.c.l.b16 %v789
    %v2106 = vunpack.c.h.b16 %v789
    %v2107 = vunpack.c.l.b16 %v790
    %v2108 = vunpack.c.h.b16 %v790
    %v2109 = vunpack.c.l.b16 %v791
    %v2110 = vunpack.c.h.b16 %v791
    %v2111 = vunpack.c.l.b16 %v792
    %v2112 = vunpack.c.h.b16 %v792
    %v2113 = vunpack.c.l.b16 %v793
    %v2114 = vunpack.c.h.b16 %v793
    %v2115 = vunpack.c.l.b16 %v794
    %v2116 = vunpack.c.h.b16 %v794
    %v2117 = vunpack.c.l.b16 %v795
    %v2118 = vunpack.c.h.b16 %v795
    %v2119 = vunpack.c.l.b16 %v796
    %v2120 = vunpack.c.h.b16 %v796
    %v2121 = vunpack.c.l.b16 %v797
    %v2122 = vunpack.c.h.b16 %v797
    %v2123 = vunpack.c.l.b16 %v798
    %v2124 = vunpack.c.h.b16 %v798
    %v2125 = vunpack.c.l.b16 %v799
    %v2126 = vunpack.c.h.b16 %v799
    %v2127 = vunpack.c.l.b16 %v800
    %v2128 = vunpack.c.h.b16 %v800
    %v2129 = vunpack.c.l.b16 %v801
    %v2130 = vunpack.c.h.b16 %v801
    %v2131 = vunpack.c.l.b16 %v802
    %v2132 = vunpack.c.h.b16 %v802
    %v2133 = vunpack.c.l.b16 %v803
    %v2134 = vunpack.c.h.b16 %v803
    %v2135 = vunpack.c.l.b16 %v804
    %v2136 = vunpack.c.h.b16 %v804
    %v2137 = vunpack.c.l.b16 %v805
    %v2138 = vunpack.c.h.b16 %v805
    %v2139 = vunpack.c.l.b16 %v806
    %v2140 = vunpack.c.h.b16 %v806
    %v2141 = vunpack.c.l.b16 %v807
    %v2142 = vunpack.c.h.b16 %v807
    %v2143 = vunpack.c.l.b16 %v808
    %v2144 = vunpack.c.h.b16 %v808
    %v2145 = vunpack.c.l.b16 %v809
    %v2146 = vunpack.c.h.b16 %v809
    %v2147 = vunpack.c.l.b16 %v810
    %v2148 = vunpack.c.h.b16 %v810
    %v2149 = vunpack.c.l.b16 %v811
    %v2150 = vunpack.c.h.b16 %v811
    %v2151 = vunpack.c.l.b16 %v812
    %v2152 = vunpack.c.h.b16 %v812
    %v2153 = vunpack.c.l.b16 %v813
    %v2154 = vunpack.c.h.b16 %v813
    %v2155 = vunpack.c.l.b16 %v814
    %v2156 = vunpack.c.h.b16 %v814
    %v2157 = vunpack.c.l.b16 %v815
    %v2158 = vunpack.c.h.b16 %v815
    %v2159 = vunpack.c.l.b16 %v816
    %v2160 = vunpack.c.h.b16 %v816
    %v2161 = vunpack.c.l.b16 %v817
    %v2162 = vunpack.c.h.b16 %v817
    %v2163 = vunpack.c.l.b16 %v818
    %v2164 = vunpack.c.h.b16 %v818
    %v2165 = vunpack.c.l.b16 %v819
    %v2166 = vunpack.c.h.b16 %v819
    %v2167 = vunpack.c.l.b16 %v820
    %v2168 = vunpack.c.h.b16 %v820
    %v2169 = vunpack.c.l.b16 %v821
    %v2170 = vunpack.c.h.b16 %v821
    %v2171 = vunpack.c.l.b16 %v822
    %v2172 = vunpack.c.h.b16 %v822
    %v2173 = vunpack.c.l.b16 %v823
    %v2174 = vunpack.c.h.b16 %v823
    %v2175 = vunpack.c.l.b16 %v824
    %v2176 = vunpack.c.h.b16 %v824
    %v2177 = vunpack.c.l.b16 %v825
    %v2178 = vunpack.c.h.b16 %v825
    %v2179 = vunpack.c.l.b16 %v826
    %v2180 = vunpack.c.h.b16 %v826
    %v2181 = vunpack.c.l.b16 %v827
    %v2182 = vunpack.c.h.b16 %v827
    %v2183 = vunpack.c.l.b16 %v828
    %v2184 = vunpack.c.h.b16 %v828
    %v2185 = vunpack.c.l.b16 %v829
    %v2186 = vunpack.c.h.b16 %v829
    %v2187 = vunpack.c.l.b16 %v830
    %v2188 = vunpack.c.h.b16 %v830
    %v2189 = vunpack.c.l.b16 %v831
    %v2190 = vunpack.c.h.b16 %v831
    %v2191 = vunpack.c.l.b16 %v832
    %v2192 = vunpack.c.h.b16 %v832
    %v2193 = vunpack.c.l.b16 %v833
    %v2194 = vunpack.c.h.b16 %v833
    %v2195 = vunpack.c.l.b16 %v834
    %v2196 = vunpack.c.h.b16 %v834
    %v2197 = vunpack.c.l.b16 %v835
    %v2198 = vunpack.c.h.b16 %v835
    %v2199 = vunpack.c.l.b16 %v836
    %v2200 = vunpack.c.h.b16 %v836
    %v2201 = vunpack.c.l.b16 %v837
    %v2202 = vunpack.c.h.b16 %v837
    %v2203 = vunpack.c.l.b16 %v838
    %v2204 = vunpack.c.h.b16 %v838
    %v2205 = vunpack.c.l.b16 %v839
    %v2206 = vunpack.c.h.b16 %v839
    %v2207 = vunpack.c.l.b16 %v840
    %v2208 = vunpack.c.h.b16 %v840
    %v2209 = vunpack.c.l.b16 %v841
    %v2210 = vunpack.c.h.b16 %v841
    %v2211 = vunpack.c.l.b16 %v842
    %v2212 = vunpack.c.h.b16 %v842
    %v2213 = vunpack.c.l.b16 %v843
    %v2214 = vunpack.c.h.b16 %v843
    %v2215 = vunpack.c.l.b16 %v844
    %v2216 = vunpack.c.h.b16 %v844
    %v2217 = vunpack.c.l.b16 %v845
    %v2218 = vunpack.c.h.b16 %v845
    %v2219 = vunpack.c.l.b16 %v846
    %v2220 = vunpack.c.h.b16 %v846
    %v2221 = vunpack.c.l.b16 %v847
    %v2222 = vunpack.c.h.b16 %v847
    %v2223 = vunpack.c.l.b16 %v848
    %v2224 = vunpack.c.h.b16 %v848
    %v2225 = vunpack.c.l.b16 %v849
    %v2226 = vunpack.c.h.b16 %v849
    %v2227 = vunpack.c.l.b16 %v850
    %v2228 = vunpack.c.h.b16 %v850
    %v2229 = vunpack.c.l.b16 %v851
    %v2230 = vunpack.c.h.b16 %v851
    %v2231 = vunpack.c.l.b16 %v852
    %v2232 = vunpack.c.h.b16 %v852
    %v2233 = vunpack.c.l.b16 %v853
    %v2234 = vunpack.c.h.b16 %v853
    %v2235 = vunpack.c.l.b16 %v854
    %v2236 = vunpack.c.h.b16 %v854
    %v2237 = vunpack.c.l.b16 %v855
    %v2238 = vunpack.c.h.b16 %v855
    %v2239 = vunpack.c.l.b16 %v856
    %v2240 = vunpack.c.h.b16 %v856
    %v2241 = vunpack.c.l.b16 %v857
    %v2242 = vunpack.c.h.b16 %v857
    %v2243 = vunpack.c.l.b16 %v858
    %v2244 = vunpack.c.h.b16 %v858
    %v2245 = vunpack.c.l.b16 %v859
    %v2246 = vunpack.c.h.b16 %v859
    %v2247 = vunpack.c.l.b16 %v860
    %v2248 = vunpack.c.h.b16 %v860
    %v2249 = vunpack.c.l.b16 %v861
    %v2250 = vunpack.c.h.b16 %v861
    %v2251 = vunpack.c.l.b16 %v862
    %v2252 = vunpack.c.h.b16 %v862
    %v2253 = vunpack.c.l.b16 %v863
    %v2254 = vunpack.c.h.b16 %v863
    %v2255 = vunpack.c.l.b16 %v864
    %v2256 = vunpack.c.h.b16 %v864
    %v2257 = vunpack.c.l.b16 %v865
    %v2258 = vunpack.c.h.b16 %v865
    %v2259 = vunpack.c.l.b16 %v866
    %v2260 = vunpack.c.h.b16 %v866
    %v2261 = vunpack.c.l.b16 %v867
    %v2262 = vunpack.c.h.b16 %v867
    %v2263 = vunpack.c.l.b16 %v868
    %v2264 = vunpack.c.h.b16 %v868
    %v2265 = vunpack.c.l.b16 %v869
    %v2266 = vunpack.c.h.b16 %v869
    %v2267 = vunpack.c.l.b16 %v870
    %v2268 = vunpack.c.h.b16 %v870
    %v2269 = vunpack.c.l.b16 %v871
    %v2270 = vunpack.c.h.b16 %v871
    %v2271 = vunpack.c.l.b16 %v872
    %v2272 = vunpack.c.h.b16 %v872
    %v2273 = vunpack.c.l.b16 %v873
    %v2274 = vunpack.c.h.b16 %v873
    %v2275 = vunpack.c.l.b16 %v874
    %v2276 = vunpack.c.h.b16 %v874
    %v2277 = vunpack.c.l.b16 %v875
    %v2278 = vunpack.c.h.b16 %v875
    %v2279 = vunpack.c.l.b16 %v876
    %v2280 = vunpack.c.h.b16 %v876
    %v2281 = vunpack.c.l.b16 %v877
    %v2282 = vunpack.c.h.b16 %v877
    %v2283 = vunpack.c.l.b16 %v878
    %v2284 = vunpack.c.h.b16 %v878
    %v2285 = vunpack.c.l.b16 %v879
    %v2286 = vunpack.c.h.b16 %v879
    %v2287 = vunpack.c.l.b16 %v880
    %v2288 = vunpack.c.h.b16 %v880
    %v2289 = vunpack.c.l.b16 %v881
    %v2290 = vunpack.c.h.b16 %v881
    %v2291 = vunpack.c.l.b16 %v882
    %v2292 = vunpack.c.h.b16 %v882
    %v2293 = vunpack.c.l.b16 %v883
    %v2294 = vunpack.c.h.b16 %v883
    %v2295 = vunpack.c.l.b16 %v884
    %v2296 = vunpack.c.h.b16 %v884
    %v2297 = vunpack.c.l.b16 %v885
    %v2298 = vunpack.c.h.b16 %v885
    %v2299 = vunpack.c.l.b16 %v886
    %v2300 = vunpack.c.h.b16 %v886
    %v2301 = vunpack.c.l.b16 %v887
    %v2302 = vunpack.c.h.b16 %v887
    %v2303 = vunpack.c.l.b16 %v888
    %v2304 = vunpack.c.h.b16 %v888
    %v2305 = vunpack.c.l.b16 %v889
    %v2306 = vunpack.c.h.b16 %v889
    %v2307 = vunpack.c.l.b16 %v890
    %v2308 = vunpack.c.h.b16 %v890
    %v2309 = vunpack.c.l.b16 %v891
    %v2310 = vunpack.c.h.b16 %v891
    %v2311 = vunpack.c.l.b16 %v892
    %v2312 = vunpack.c.h.b16 %v892
    %v2313 = vunpack.c.l.b16 %v893
    %v2314 = vunpack.c.h.b16 %v893
    %v2315 = vunpack.c.l.b16 %v894
    %v2316 = vunpack.c.h.b16 %v894
    %v2317 = vunpack.c.l.b16 %v895
    %v2318 = vunpack.c.h.b16 %v895
    %v2319 = vunpack.c.l.b16 %v896
    %v2320 = vunpack.c.h.b16 %v896
    %v2321 = vunpack.c.l.b16 %v897
    %v2322 = vunpack.c.h.b16 %v897
    %v2323 = vunpack.c.l.b16 %v898
    %v2324 = vunpack.c.h.b16 %v898
    %v2325 = vunpack.c.l.b16 %v899
    %v2326 = vunpack.c.h.b16 %v899
    %v2327 = vunpack.c.l.b16 %v900
    %v2328 = vunpack.c.h.b16 %v900
    %v2329 = vunpack.c.l.b16 %v901
    %v2330 = vunpack.c.h.b16 %v901
    %v2331 = vunpack.c.l.b16 %v902
    %v2332 = vunpack.c.h.b16 %v902
    %v2333 = vunpack.c.l.b16 %v903
    %v2334 = vunpack.c.h.b16 %v903
    %v2335 = vunpack.c.l.b16 %v904
    %v2336 = vunpack.c.h.b16 %v904
    %v2337 = vunpack.c.l.b16 %v905
    %v2338 = vunpack.c.h.b16 %v905
    %v2339 = vunpack.c.l.b16 %v906
    %v2340 = vunpack.c.h.b16 %v906
    %v2341 = vunpack.c.l.b16 %v907
    %v2342 = vunpack.c.h.b16 %v907
    %v2343 = vunpack.c.l.b16 %v908
    %v2344 = vunpack.c.h.b16 %v908
    %v2345 = vunpack.c.l.b16 %v909
    %v2346 = vunpack.c.h.b16 %v909
    %v2347 = vunpack.c.l.b16 %v910
    %v2348 = vunpack.c.h.b16 %v910
    %v2349 = vunpack.c.l.b16 %v911
    %v2350 = vunpack.c.h.b16 %v911
    %v2351 = vunpack.c.l.b16 %v912
    %v2352 = vunpack.c.h.b16 %v912
    %v2353 = vunpack.c.l.b16 %v913
    %v2354 = vunpack.c.h.b16 %v913
    %v2355 = vunpack.c.l.b16 %v914
    %v2356 = vunpack.c.h.b16 %v914
    %v2357 = vunpack.c.l.b16 %v915
    %v2358 = vunpack.c.h.b16 %v915
    %v2359 = vunpack.c.l.b16 %v916
    %v2360 = vunpack.c.h.b16 %v916
    %v2361 = vunpack.c.l.b16 %v917
    %v2362 = vunpack.c.h.b16 %v917
    %v2363 = vunpack.c.l.b16 %v918
    %v2364 = vunpack.c.h.b16 %v918
    %v2365 = vunpack.c.l.b16 %v919
    %v2366 = vunpack.c.h.b16 %v919
    %v2367 = vunpack.c.l.b16 %v920
    %v2368 = vunpack.c.h.b16 %v920
    %v2369 = vunpack.c.l.b16 %v921
    %v2370 = vunpack.c.h.b16 %v921
    %v2371 = vunpack.c.l.b16 %v922
    %v2372 = vunpack.c.h.b16 %v922
    %v2373 = vunpack.c.l.b16 %v923
    %v2374 = vunpack.c.h.b16 %v923
    %v2375 = vunpack.c.l.b16 %v924
    %v2376 = vunpack.c.h.b16 %v924
    %v2377 = vunpack.c.l.b16 %v925
    %v2378 = vunpack.c.h.b16 %v925
    %v2379 = vunpack.c.l.b16 %v926
    %v2380 = vunpack.c.h.b16 %v926
    %v2381 = vunpack.c.l.b16 %v927
    %v2382 = vunpack.c.h.b16 %v927
    %v2383 = vunpack.c.l.b16 %v928
    %v2384 = vunpack.c.h.b16 %v928
    %v2385 = vunpack.c.l.b16 %v929
    %v2386 = vunpack.c.h.b16 %v929
    %v2387 = vunpack.c.l.b16 %v930
    %v2388 = vunpack.c.h.b16 %v930
    %v2389 = vunpack.c.l.b16 %v931
    %v2390 = vunpack.c.h.b16 %v931
    %v2391 = vunpack.c.l.b16 %v932
    %v2392 = vunpack.c.h.b16 %v932
    %v2393 = vunpack.c.l.b16 %v933
    %v2394 = vunpack.c.h.b16 %v933
    %v2395 = vunpack.c.l.b16 %v934
    %v2396 = vunpack.c.h.b16 %v934
    %v2397 = vunpack.c.l.b16 %v935
    %v2398 = vunpack.c.h.b16 %v935
    %v2399 = vunpack.c.l.b16 %v936
    %v2400 = vunpack.c.h.b16 %v936
    %v2401 = vunpack.c.l.b16 %v937
    %v2402 = vunpack.c.h.b16 %v937
    %v2403 = vunpack.c.l.b16 %v938
    %v2404 = vunpack.c.h.b16 %v938
    %v2405 = vunpack.c.l.b16 %v939
    %v2406 = vunpack.c.h.b16 %v939
    %v2407 = vunpack.c.l.b16 %v940
    %v2408 = vunpack.c.h.b16 %v940
    %v2409 = vunpack.c.l.b16 %v941
    %v2410 = vunpack.c.h.b16 %v941
    %v2411 = vunpack.c.l.b16 %v942
    %v2412 = vunpack.c.h.b16 %v942
    %v2413 = vunpack.c.l.b16 %v943
    %v2414 = vunpack.c.h.b16 %v943
    %v2415 = vunpack.c.l.b16 %v944
    %v2416 = vunpack.c.h.b16 %v944
    %v2417 = vunpack.c.l.b16 %v945
    %v2418 = vunpack.c.h.b16 %v945
    %v2419 = vunpack.c.l.b16 %v946
    %v2420 = vunpack.c.h.b16 %v946
    %v2421 = vunpack.c.l.b16 %v947
    %v2422 = vunpack.c.h.b16 %v947
    %v2423 = vunpack.c.l.b16 %v948
    %v2424 = vunpack.c.h.b16 %v948
    %v2425 = vunpack.c.l.b16 %v949
    %v2426 = vunpack.c.h.b16 %v949
    %v2427 = vunpack.c.l.b16 %v950
    %v2428 = vunpack.c.h.b16 %v950
    %v2429 = vunpack.c.l.b16 %v951
    %v2430 = vunpack.c.h.b16 %v951
    %v2431 = vunpack.c.l.b16 %v952
    %v2432 = vunpack.c.h.b16 %v952
    %v2433 = vunpack.c.l.b16 %v953
    %v2434 = vunpack.c.h.b16 %v953
    %v2435 = vunpack.c.l.b16 %v954
    %v2436 = vunpack.c.h.b16 %v954
    %v2437 = vunpack.c.l.b16 %v955
    %v2438 = vunpack.c.h.b16 %v955
    %v2439 = vunpack.c.l.b16 %v956
    %v2440 = vunpack.c.h.b16 %v956
    %v2441 = vunpack.c.l.b16 %v957
    %v2442 = vunpack.c.h.b16 %v957
    %v2443 = vunpack.c.l.b16 %v958
    %v2444 = vunpack.c.h.b16 %v958
    %v2445 = vunpack.c.l.b16 %v959
    %v2446 = vunpack.c.h.b16 %v959
    %v2447 = vunpack.c.l.b16 %v960
    %v2448 = vunpack.c.h.b16 %v960
    %v2449 = vunpack.c.l.b16 %v961
    %v2450 = vunpack.c.h.b16 %v961
    %v2451 = vunpack.c.l.b16 %v962
    %v2452 = vunpack.c.h.b16 %v962
    %v2453 = vunpack.c.l.b16 %v963
    %v2454 = vunpack.c.h.b16 %v963
    %v2455 = vunpack.c.l.b16 %v964
    %v2456 = vunpack.c.h.b16 %v964
    %v2457 = vunpack.c.l.b16 %v965
    %v2458 = vunpack.c.h.b16 %v965
    %v2459 = vunpack.c.l.b16 %v966
    %v2460 = vunpack.c.h.b16 %v966
    %v2461 = vunpack.c.l.b16 %v967
    %v2462 = vunpack.c.h.b16 %v967
    %v2463 = vunpack.c.l.b16 %v968
    %v2464 = vunpack.c.h.b16 %v968
    %v2465 = vunpack.c.l.b16 %v969
    %v2466 = vunpack.c.h.b16 %v969
    %v2467 = vunpack.c.l.b16 %v970
    %v2468 = vunpack.c.h.b16 %v970
    %v2469 = vunpack.c.l.b16 %v971
    %v2470 = vunpack.c.h.b16 %v971
    %v2471 = vunpack.c.l.b16 %v972
    %v2472 = vunpack.c.h.b16 %v972
    %v2473 = vunpack.c.l.b16 %v973
    %v2474 = vunpack.c.h.b16 %v973
    %v2475 = vunpack.c.l.b16 %v974
    %v2476 = vunpack.c.h.b16 %v974
    %v2477 = vunpack.c.l.b16 %v975
    %v2478 = vunpack.c.h.b16 %v975
    %v2479 = vunpack.c.l.b16 %v976
    %v2480 = vunpack.c.h.b16 %v976
    %v2481 = vunpack.c.l.b16 %v977
    %v2482 = vunpack.c.h.b16 %v977
    %v2483 = vunpack.c.l.b16 %v978
    %v2484 = vunpack.c.h.b16 %v978
    %v2485 = vunpack.c.l.b16 %v979
    %v2486 = vunpack.c.h.b16 %v979
    %v2487 = vunpack.c.l.b16 %v980
    %v2488 = vunpack.c.h.b16 %v980
    %v2489 = vunpack.c.l.b16 %v981
    %v2490 = vunpack.c.h.b16 %v981
    %v2491 = vunpack.c.l.b16 %v982
    %v2492 = vunpack.c.h.b16 %v982
    %v2493 = vunpack.c.l.b16 %v983
    %v2494 = vunpack.c.h.b16 %v983
    %v2495 = vunpack.c.l.b16 %v984
    %v2496 = vunpack.c.h.b16 %v984
    %v2497 = vunpack.c.l.b16 %v985
    %v2498 = vunpack.c.h.b16 %v985
    %v2499 = vunpack.c.l.b16 %v986
    %v2500 = vunpack.c.h.b16 %v986
    %v2501 = vunpack.c.l.b16 %v987
    %v2502 = vunpack.c.h.b16 %v987
    %v2503 = vunpack.c.l.b16 %v988
    %v2504 = vunpack.c.h.b16 %v988
    %v2505 = vunpack.c.l.b16 %v989
    %v2506 = vunpack.c.h.b16 %v989
    %v2507 = vunpack.c.l.b16 %v990
    %v2508 = vunpack.c.h.b16 %v990
    %v2509 = vunpack.c.l.b16 %v991
    %v2510 = vunpack.c.h.b16 %v991
    %v2511 = vunpack.c.l.b16 %v992
    %v2512 = vunpack.c.h.b16 %v992
    %v2513 = vunpack.c.l.b16 %v993
    %v2514 = vunpack.c.h.b16 %v993
    %v2515 = vunpack.c.l.b16 %v994
    %v2516 = vunpack.c.h.b16 %v994
    %v2517 = vunpack.c.l.b16 %v995
    %v2518 = vunpack.c.h.b16 %v995
    %v2519 = vunpack.c.l.b16 %v996
    %v2520 = vunpack.c.h.b16 %v996
    %v2521 = vunpack.c.l.b16 %v997
    %v2522 = vunpack.c.h.b16 %v997
    %v2523 = vunpack.c.l.b16 %v998
    %v2524 = vunpack.c.h.b16 %v998
    %v2525 = vunpack.c.l.b16 %v999
    %v2526 = vunpack.c.h.b16 %v999
    %v2527 = vunpack.c.l.b16 %v1000
    %v2528 = vunpack.c.h.b16 %v1000
    %v2529 = vunpack.c.l.b16 %v1001
    %v2530 = vunpack.c.h.b16 %v1001
    %v2531 = vunpack.c.l.b16 %v1002
    %v2532 = vunpack.c.h.b16 %v1002
    %v2533 = vunpack.c.l.b16 %v1003
    %v2534 = vunpack.c.h.b16 %v1003
    %v2535 = vunpack.c.l.b16 %v1004
    %v2536 = vunpack.c.h.b16 %v1004
    %v2537 = vunpack.c.l.b16 %v1005
    %v2538 = vunpack.c.h.b16 %v1005
    %v2539 = vunpack.c.l.b16 %v1006
    %v2540 = vunpack.c.h.b16 %v1006
    %v2541 = vunpack.c.l.b16 %v1007
    %v2542 = vunpack.c.h.b16 %v1007
    %v2543 = vunpack.c.l.b16 %v1008
    %v2544 = vunpack.c.h.b16 %v1008
    %v2545 = vunpack.c.l.b16 %v1009
    %v2546 = vunpack.c.h.b16 %v1009
    %v2547 = vunpack.c.l.b16 %v1010
    %v2548 = vunpack.c.h.b16 %v1010
    %v2549 = vunpack.c.l.b16 %v1011
    %v2550 = vunpack.c.h.b16 %v1011
    %v2551 = vunpack.c.l.b16 %v1012
    %v2552 = vunpack.c.h.b16 %v1012
    %v2553 = vunpack.c.l.b16 %v1013
    %v2554 = vunpack.c.h.b16 %v1013
    %v2555 = vunpack.c.l.b16 %v1014
    %v2556 = vunpack.c.h.b16 %v1014
    %v2557 = vunpack.c.l.b16 %v1015
    %v2558 = vunpack.c.h.b16 %v1015
    %v2559 = vunpack.c.l.b16 %v1016
    %v2560 = vunpack.c.h.b16 %v1016
    %v2561 = vunpack.c.l.b16 %v1017
    %v2562 = vunpack.c.h.b16 %v1017
    %v2563 = vunpack.c.l.b16 %v1018
    %v2564 = vunpack.c.h.b16 %v1018
    %v2565 = vunpack.c.l.b16 %v1019
    %v2566 = vunpack.c.h.b16 %v1019
    %v2567 = vunpack.c.l.b16 %v1020
    %v2568 = vunpack.c.h.b16 %v1020
    %v2569 = vunpack.c.l.b16 %v1021
    %v2570 = vunpack.c.h.b16 %v1021
    %v2571 = vunpack.c.l.b16 %v1022
    %v2572 = vunpack.c.h.b16 %v1022
    %v2573 = vunpack.c.l.b16 %v1023
    %v2574 = vunpack.c.h.b16 %v1023
    %v2575 = vunpack.c.l.b16 %v1024
    %v2576 = vunpack.c.h.b16 %v1024
    %v2577 = vunpack.c.l.b16 %v1025
    %v2578 = vunpack.c.h.b16 %v1025
    %v2579 = vunpack.c.l.b16 %v1026
    %v2580 = vunpack.c.h.b16 %v1026
    %v2581 = vunpack.c.l.b16 %v1027
    %v2582 = vunpack.c.h.b16 %v1027
    %v2583 = vunpack.c.l.b16 %v1028
    %v2584 = vunpack.c.h.b16 %v1028
    %v2585 = vunpack.c.l.b16 %v1029
    %v2586 = vunpack.c.h.b16 %v1029
    %v2587 = vunpack.c.l.b16 %v1030
    %v2588 = vunpack.c.h.b16 %v1030
    %v2589 = vunpack.c.l.b16 %v1031
    %v2590 = vunpack.c.h.b16 %v1031
    %v2591 = vunpack.c.l.b16 %v1032
    %v2592 = vunpack.c.h.b16 %v1032
    %v2593 = vunpack.c.l.b16 %v1033
    %v2594 = vunpack.c.h.b16 %v1033
    %v2595 = vunpack.c.l.b16 %v1034
    %v2596 = vunpack.c.h.b16 %v1034
    %v2597 = vunpack.c.l.b16 %v1035
    %v2598 = vunpack.c.h.b16 %v1035
    %v2599 = vunpack.c.l.b16 %v1036
    %v2600 = vunpack.c.h.b16 %v1036
    %v2601 = vunpack.c.l.b16 %v1037
    %v2602 = vunpack.c.h.b16 %v1037
    %v2603 = vunpack.c.l.b16 %v1038
    %v2604 = vunpack.c.h.b16 %v1038
    %v2605 = vunpack.c.l.b16 %v1039
    %v2606 = vunpack.c.h.b16 %v1039
    %v2607 = vunpack.c.l.b16 %v1040
    %v2608 = vunpack.c.h.b16 %v1040
    %v2609 = vunpack.c.l.b16 %v1041
    %v2610 = vunpack.c.h.b16 %v1041
    %v2611 = vunpack.c.l.b16 %v1042
    %v2612 = vunpack.c.h.b16 %v1042
    %v2613 = vunpack.c.l.b16 %v1043
    %v2614 = vunpack.c.h.b16 %v1043
    %v2615 = vunpack.c.l.b16 %v1044
    %v2616 = vunpack.c.h.b16 %v1044
    %v2617 = vunpack.c.l.b16 %v1045
    %v2618 = vunpack.c.h.b16 %v1045
    %v2619 = vunpack.c.l.b16 %v1046
    %v2620 = vunpack.c.h.b16 %v1046
    %v2621 = vunpack.c.l.b16 %v1047
    %v2622 = vunpack.c.h.b16 %v1047
    %v2623 = vunpack.c.l.b16 %v1048
    %v2624 = vunpack.c.h.b16 %v1048
    %v2625 = vunpack.c.l.b16 %v1049
    %v2626 = vunpack.c.h.b16 %v1049
    %v2627 = vunpack.c.l.b16 %v1050
    %v2628 = vunpack.c.h.b16 %v1050
    %v2629 = vpack.c.b16 %v1613, %v1605
    %v2630 = vpack.c.b16 %v1614, %v1606
    %v2631 = vpack.c.b16 %v1615, %v1607
    %v2632 = vpack.c.b16 %v1616, %v1608
    %v2633 = vpack.c.b16 %v1617, %v1609
    %v2634 = vpack.c.b16 %v1618, %v1610
    %v2635 = vpack.c.b16 %v1619, %v1611
    %v2636 = vpack.c.b16 %v1620, %v1612
    %v2637 = vpack.c.b16 %v1629, %v1621
    %v2638 = vpack.c.b16 %v1630, %v1622
    %v2639 = vpack.c.b16 %v1631, %v1623
    %v2640 = vpack.c.b16 %v1632, %v1624
    %v2641 = vpack.c.b16 %v1633, %v1625
    %v2642 = vpack.c.b16 %v1634, %v1626
    %v2643 = vpack.c.b16 %v1635, %v1627
    %v2644 = vpack.c.b16 %v1636, %v1628
    %v2645 = vpack.c.b16 %v1645, %v1637
    %v2646 = vpack.c.b16 %v1646, %v1638
    %v2647 = vpack.c.b16 %v1647, %v1639
    %v2648 = vpack.c.b16 %v1648, %v1640
    %v2649 = vpack.c.b16 %v1649, %v1641
    %v2650 = vpack.c.b16 %v1650, %v1642
    %v2651 = vpack.c.b16 %v1651, %v1643
    %v2652 = vpack.c.b16 %v1652, %v1644
    %v2653 = vpack.c.b16 %v1661, %v1653
    %v2654 = vpack.c.b16 %v1662, %v1654
    %v2655 = vpack.c.b16 %v1663, %v1655
    %v2656 = vpack.c.b16 %v1664, %v1656
    %v2657 = vpack.c.b16 %v1665, %v1657
    %v2658 = vpack.c.b16 %v1666, %v1658
    %v2659 = vpack.c.b16 %v1667, %v1659
    %v2660 = vpack.c.b16 %v1668, %v1660
    %v2661 = vpack.c.b16 %v1677, %v1669
    %v2662 = vpack.c.b16 %v1678, %v1670
    %v2663 = vpack.c.b16 %v1679, %v1671
    %v2664 = vpack.c.b16 %v1680, %v1672
    %v2665 = vpack.c.b16 %v1681, %v1673
    %v2666 = vpack.c.b16 %v1682, %v1674
    %v2667 = vpack.c.b16 %v1683, %v1675
    %v2668 = vpack.c.b16 %v1684, %v1676
    %v2669 = vpack.c.b16 %v1693, %v1685
    %v2670 = vpack.c.b16 %v1694, %v1686
    %v2671 = vpack.c.b16 %v1695, %v1687
    %v2672 = vpack.c.b16 %v1696, %v1688
    %v2673 = vpack.c.b16 %v1697, %v1689
    %v2674 = vpack.c.b16 %v1698, %v1690
    %v2675 = vpack.c.b16 %v1699, %v1691
    %v2676 = vpack.c.b16 %v1700, %v1692
    %v2677 = vpack.c.b16 %v1709, %v1701
    %v2678 = vpack.c.b16 %v1710, %v1702
    %v2679 = vpack.c.b16 %v1711, %v1703
    %v2680 = vpack.c.b16 %v1712, %v1704
    %v2681 = vpack.c.b16 %v1713, %v1705
    %v2682 = vpack.c.b16 %v1714, %v1706
    %v2683 = vpack.c.b16 %v1715, %v1707
    %v2684 = vpack.c.b16 %v1716, %v1708
    %v2685 = vpack.c.b16 %v1725, %v1717
    %v2686 = vpack.c.b16 %v1726, %v1718
    %v2687 = vpack.c.b16 %v1727, %v1719
    %v2688 = vpack.c.b16 %v1728, %v1720
    %v2689 = vpack.c.b16 %v1729, %v1721
    %v2690 = vpack.c.b16 %v1730, %v1722
    %v2691 = vpack.c.b16 %v1731, %v1723
    %v2692 = vpack.c.b16 %v1732, %v1724
    %v2693 = vpack.c.b16 %v1741, %v1733
    %v2694 = vpack.c.b16 %v1742, %v1734
    %v2695 = vpack.c.b16 %v1743, %v1735
    %v2696 = vpack.c.b16 %v1744, %v1736
    %v2697 = vpack.c.b16 %v1745, %v1737
    %v2698 = vpack.c.b16 %v1746, %v1738
    %v2699 = vpack.c.b16 %v1747, %v1739
    %v2700 = vpack.c.b16 %v1748, %v1740
    %v2701 = vpack.c.b16 %v1757, %v1749
    %v2702 = vpack.c.b16 %v1758, %v1750
    %v2703 = vpack.c.b16 %v1759, %v1751
    %v2704 = vpack.c.b16 %v1760, %v1752
    %v2705 = vpack.c.b16 %v1761, %v1753
    %v2706 = vpack.c.b16 %v1762, %v1754
    %v2707 = vpack.c.b16 %v1763, %v1755
    %v2708 = vpack.c.b16 %v1764, %v1756
    %v2709 = vpack.c.b16 %v1773, %v1765
    %v2710 = vpack.c.b16 %v1774, %v1766
    %v2711 = vpack.c.b16 %v1775, %v1767
    %v2712 = vpack.c.b16 %v1776, %v1768
    %v2713 = vpack.c.b16 %v1777, %v1769
    %v2714 = vpack.c.b16 %v1778, %v1770
    %v2715 = vpack.c.b16 %v1779, %v1771
    %v2716 = vpack.c.b16 %v1780, %v1772
    %v2717 = vpack.c.b16 %v1789, %v1781
    %v2718 = vpack.c.b16 %v1790, %v1782
    %v2719 = vpack.c.b16 %v1791, %v1783
    %v2720 = vpack.c.b16 %v1792, %v1784
    %v2721 = vpack.c.b16 %v1793, %v1785
    %v2722 = vpack.c.b16 %v1794, %v1786
    %v2723 = vpack.c.b16 %v1795, %v1787
    %v2724 = vpack.c.b16 %v1796, %v1788
    %v2725 = vpack.c.b16 %v1805, %v1797
    %v2726 = vpack.c.b16 %v1806, %v1798
    %v2727 = vpack.c.b16 %v1807, %v1799
    %v2728 = vpack.c.b16 %v1808, %v1800
    %v2729 = vpack.c.b16 %v1809, %v1801
    %v2730 = vpack.c.b16 %v1810, %v1802
    %v2731 = vpack.c.b16 %v1811, %v1803
    %v2732 = vpack.c.b16 %v1812, %v1804
    %v2733 = vpack.c.b16 %v1821, %v1813
    %v2734 = vpack.c.b16 %v1822, %v1814
    %v2735 = vpack.c.b16 %v1823, %v1815
    %v2736 = vpack.c.b16 %v1824, %v1816
    %v2737 = vpack.c.b16 %v1825, %v1817
    %v2738 = vpack.c.b16 %v1826, %v1818
    %v2739 = vpack.c.b16 %v1827, %v1819
    %v2740 = vpack.c.b16 %v1828, %v1820
    %v2741 = vpack.c.b16 %v1837, %v1829
    %v2742 = vpack.c.b16 %v1838, %v1830
    %v2743 = vpack.c.b16 %v1839, %v1831
    %v2744 = vpack.c.b16 %v1840, %v1832
    %v2745 = vpack.c.b16 %v1841, %v1833
    %v2746 = vpack.c.b16 %v1842, %v1834
    %v2747 = vpack.c.b16 %v1843, %v1835
    %v2748 = vpack.c.b16 %v1844, %v1836
    %v2749 = vpack.c.b16 %v1853, %v1845
    %v2750 = vpack.c.b16 %v1854, %v1846
    %v2751 = vpack.c.b16 %v1855, %v1847
    %v2752 = vpack.c.b16 %v1856, %v1848
    %v2753 = vpack.c.b16 %v1857, %v1849
    %v2754 = vpack.c.b16 %v1858, %v1850
    %v2755 = vpack.c.b16 %v1859, %v1851
    %v2756 = vpack.c.b16 %v1860, %v1852
    %v2757 = vpack.c.b16 %v1869, %v1861
    %v2758 = vpack.c.b16 %v1870, %v1862
    %v2759 = vpack.c.b16 %v1871, %v1863
    %v2760 = vpack.c.b16 %v1872, %v1864
    %v2761 = vpack.c.b16 %v1873, %v1865
    %v2762 = vpack.c.b16 %v1874, %v1866
    %v2763 = vpack.c.b16 %v1875, %v1867
    %v2764 = vpack.c.b16 %v1876, %v1868
    %v2765 = vpack.c.b16 %v1885, %v1877
    %v2766 = vpack.c.b16 %v1886, %v1878
    %v2767 = vpack.c.b16 %v1887, %v1879
    %v2768 = vpack.c.b16 %v1888, %v1880
    %v2769 = vpack.c.b16 %v1889, %v1881
    %v2770 = vpack.c.b16 %v1890, %v1882
    %v2771 = vpack.c.b16 %v1891, %v1883
    %v2772 = vpack.c.b16 %v1892, %v1884
    %v2773 = vpack.c.b16 %v1901, %v1893
    %v2774 = vpack.c.b16 %v1902, %v1894
    %v2775 = vpack.c.b16 %v1903, %v1895
    %v2776 = vpack.c.b16 %v1904, %v1896
    %v2777 = vpack.c.b16 %v1905, %v1897
    %v2778 = vpack.c.b16 %v1906, %v1898
    %v2779 = vpack.c.b16 %v1907, %v1899
    %v2780 = vpack.c.b16 %v1908, %v1900
    %v2781 = vpack.c.b16 %v1917, %v1909
    %v2782 = vpack.c.b16 %v1918, %v1910
    %v2783 = vpack.c.b16 %v1919, %v1911
    %v2784 = vpack.c.b16 %v1920, %v1912
    %v2785 = vpack.c.b16 %v1921, %v1913
    %v2786 = vpack.c.b16 %v1922, %v1914
    %v2787 = vpack.c.b16 %v1923, %v1915
    %v2788 = vpack.c.b16 %v1924, %v1916
    %v2789 = vpack.c.b16 %v1933, %v1925
    %v2790 = vpack.c.b16 %v1934, %v1926
    %v2791 = vpack.c.b16 %v1935, %v1927
    %v2792 = vpack.c.b16 %v1936, %v1928
    %v2793 = vpack.c.b16 %v1937, %v1929
    %v2794 = vpack.c.b16 %v1938, %v1930
    %v2795 = vpack.c.b16 %v1939, %v1931
    %v2796 = vpack.c.b16 %v1940, %v1932
    %v2797 = vpack.c.b16 %v1949, %v1941
    %v2798 = vpack.c.b16 %v1950, %v1942
    %v2799 = vpack.c.b16 %v1951, %v1943
    %v2800 = vpack.c.b16 %v1952, %v1944
    %v2801 = vpack.c.b16 %v1953, %v1945
    %v2802 = vpack.c.b16 %v1954, %v1946
    %v2803 = vpack.c.b16 %v1955, %v1947
    %v2804 = vpack.c.b16 %v1956, %v1948
    %v2805 = vpack.c.b16 %v1965, %v1957
    %v2806 = vpack.c.b16 %v1966, %v1958
    %v2807 = vpack.c.b16 %v1967, %v1959
    %v2808 = vpack.c.b16 %v1968, %v1960
    %v2809 = vpack.c.b16 %v1969, %v1961
    %v2810 = vpack.c.b16 %v1970, %v1962
    %v2811 = vpack.c.b16 %v1971, %v1963
    %v2812 = vpack.c.b16 %v1972, %v1964
    %v2813 = vpack.c.b16 %v1981, %v1973
    %v2814 = vpack.c.b16 %v1982, %v1974
    %v2815 = vpack.c.b16 %v1983, %v1975
    %v2816 = vpack.c.b16 %v1984, %v1976
    %v2817 = vpack.c.b16 %v1985, %v1977
    %v2818 = vpack.c.b16 %v1986, %v1978
    %v2819 = vpack.c.b16 %v1987, %v1979
    %v2820 = vpack.c.b16 %v1988, %v1980
    %v2821 = vpack.c.b16 %v1997, %v1989
    %v2822 = vpack.c.b16 %v1998, %v1990
    %v2823 = vpack.c.b16 %v1999, %v1991
    %v2824 = vpack.c.b16 %v2000, %v1992
    %v2825 = vpack.c.b16 %v2001, %v1993
    %v2826 = vpack.c.b16 %v2002, %v1994
    %v2827 = vpack.c.b16 %v2003, %v1995
    %v2828 = vpack.c.b16 %v2004, %v1996
    %v2829 = vpack.c.b16 %v2013, %v2005
    %v2830 = vpack.c.b16 %v2014, %v2006
    %v2831 = vpack.c.b16 %v2015, %v2007
    %v2832 = vpack.c.b16 %v2016, %v2008
    %v2833 = vpack.c.b16 %v2017, %v2009
    %v2834 = vpack.c.b16 %v2018, %v2010
    %v2835 = vpack.c.b16 %v2019, %v2011
    %v2836 = vpack.c.b16 %v2020, %v2012
    %v2837 = vpack.c.b16 %v2029, %v2021
    %v2838 = vpack.c.b16 %v2030, %v2022
    %v2839 = vpack.c.b16 %v2031, %v2023
    %v2840 = vpack.c.b16 %v2032, %v2024
    %v2841 = vpack.c.b16 %v2033, %v2025
    %v2842 = vpack.c.b16 %v2034, %v2026
    %v2843 = vpack.c.b16 %v2035, %v2027
    %v2844 = vpack.c.b16 %v2036, %v2028
    %v2845 = vpack.c.b16 %v2045, %v2037
    %v2846 = vpack.c.b16 %v2046, %v2038
    %v2847 = vpack.c.b16 %v2047, %v2039
    %v2848 = vpack.c.b16 %v2048, %v2040
    %v2849 = vpack.c.b16 %v2049, %v2041
    %v2850 = vpack.c.b16 %v2050, %v2042
    %v2851 = vpack.c.b16 %v2051, %v2043
    %v2852 = vpack.c.b16 %v2052, %v2044
    %v2853 = vpack.c.b16 %v2061, %v2053
    %v2854 = vpack.c.b16 %v2062, %v2054
    %v2855 = vpack.c.b16 %v2063, %v2055
    %v2856 = vpack.c.b16 %v2064, %v2056
    %v2857 = vpack.c.b16 %v2065, %v2057
    %v2858 = vpack.c.b16 %v2066, %v2058
    %v2859 = vpack.c.b16 %v2067, %v2059
    %v2860 = vpack.c.b16 %v2068, %v2060
    %v2861 = vpack.c.b16 %v2077, %v2069
    %v2862 = vpack.c.b16 %v2078, %v2070
    %v2863 = vpack.c.b16 %v2079, %v2071
    %v2864 = vpack.c.b16 %v2080, %v2072
    %v2865 = vpack.c.b16 %v2081, %v2073
    %v2866 = vpack.c.b16 %v2082, %v2074
    %v2867 = vpack.c.b16 %v2083, %v2075
    %v2868 = vpack.c.b16 %v2084, %v2076
    %v2869 = vpack.c.b16 %v2093, %v2085
    %v2870 = vpack.c.b16 %v2094, %v2086
    %v2871 = vpack.c.b16 %v2095, %v2087
    %v2872 = vpack.c.b16 %v2096, %v2088
    %v2873 = vpack.c.b16 %v2097, %v2089
    %v2874 = vpack.c.b16 %v2098, %v2090
    %v2875 = vpack.c.b16 %v2099, %v2091
    %v2876 = vpack.c.b16 %v2100, %v2092
    %v2877 = vpack.c.b16 %v2109, %v2101
    %v2878 = vpack.c.b16 %v2110, %v2102
    %v2879 = vpack.c.b16 %v2111, %v2103
    %v2880 = vpack.c.b16 %v2112, %v2104
    %v2881 = vpack.c.b16 %v2113, %v2105
    %v2882 = vpack.c.b16 %v2114, %v2106
    %v2883 = vpack.c.b16 %v2115, %v2107
    %v2884 = vpack.c.b16 %v2116, %v2108
    %v2885 = vpack.c.b16 %v2125, %v2117
    %v2886 = vpack.c.b16 %v2126, %v2118
    %v2887 = vpack.c.b16 %v2127, %v2119
    %v2888 = vpack.c.b16 %v2128, %v2120
    %v2889 = vpack.c.b16 %v2129, %v2121
    %v2890 = vpack.c.b16 %v2130, %v2122
    %v2891 = vpack.c.b16 %v2131, %v2123
    %v2892 = vpack.c.b16 %v2132, %v2124
    %v2893 = vpack.c.b16 %v2141, %v2133
    %v2894 = vpack.c.b16 %v2142, %v2134
    %v2895 = vpack.c.b16 %v2143, %v2135
    %v2896 = vpack.c.b16 %v2144, %v2136
    %v2897 = vpack.c.b16 %v2145, %v2137
    %v2898 = vpack.c.b16 %v2146, %v2138
    %v2899 = vpack.c.b16 %v2147, %v2139
    %v2900 = vpack.c.b16 %v2148, %v2140
    %v2901 = vpack.c.b16 %v2157, %v2149
    %v2902 = vpack.c.b16 %v2158, %v2150
    %v2903 = vpack.c.b16 %v2159, %v2151
    %v2904 = vpack.c.b16 %v2160, %v2152
    %v2905 = vpack.c.b16 %v2161, %v2153
    %v2906 = vpack.c.b16 %v2162, %v2154
    %v2907 = vpack.c.b16 %v2163, %v2155
    %v2908 = vpack.c.b16 %v2164, %v2156
    %v2909 = vpack.c.b16 %v2173, %v2165
    %v2910 = vpack.c.b16 %v2174, %v2166
    %v2911 = vpack.c.b16 %v2175, %v2167
    %v2912 = vpack.c.b16 %v2176, %v2168
    %v2913 = vpack.c.b16 %v2177, %v2169
    %v2914 = vpack.c.b16 %v2178, %v2170
    %v2915 = vpack.c.b16 %v2179, %v2171
    %v2916 = vpack.c.b16 %v2180, %v2172
    %v2917 = vpack.c.b16 %v2189, %v2181
    %v2918 = vpack.c.b16 %v2190, %v2182
    %v2919 = vpack.c.b16 %v2191, %v2183
    %v2920 = vpack.c.b16 %v2192, %v2184
    %v2921 = vpack.c.b16 %v2193, %v2185
    %v2922 = vpack.c.b16 %v2194, %v2186
    %v2923 = vpack.c.b16 %v2195, %v2187
    %v2924 = vpack.c.b16 %v2196, %v2188
    %v2925 = vpack.c.b16 %v2205, %v2197
    %v2926 = vpack.c.b16 %v2206, %v2198
    %v2927 = vpack.c.b16 %v2207, %v2199
    %v2928 = vpack.c.b16 %v2208, %v2200
    %v2929 = vpack.c.b16 %v2209, %v2201
    %v2930 = vpack.c.b16 %v2210, %v2202
    %v2931 = vpack.c.b16 %v2211, %v2203
    %v2932 = vpack.c.b16 %v2212, %v2204
    %v2933 = vpack.c.b16 %v2221, %v2213
    %v2934 = vpack.c.b16 %v2222, %v2214
    %v2935 = vpack.c.b16 %v2223, %v2215
    %v2936 = vpack.c.b16 %v2224, %v2216
    %v2937 = vpack.c.b16 %v2225, %v2217
    %v2938 = vpack.c.b16 %v2226, %v2218
    %v2939 = vpack.c.b16 %v2227, %v2219
    %v2940 = vpack.c.b16 %v2228, %v2220
    %v2941 = vpack.c.b16 %v2237, %v2229
    %v2942 = vpack.c.b16 %v2238, %v2230
    %v2943 = vpack.c.b16 %v2239, %v2231
    %v2944 = vpack.c.b16 %v2240, %v2232
    %v2945 = vpack.c.b16 %v2241, %v2233
    %v2946 = vpack.c.b16 %v2242, %v2234
    %v2947 = vpack.c.b16 %v2243, %v2235
    %v2948 = vpack.c.b16 %v2244, %v2236
    %v2949 = vpack.c.b16 %v2253, %v2245
    %v2950 = vpack.c.b16 %v2254, %v2246
    %v2951 = vpack.c.b16 %v2255, %v2247
    %v2952 = vpack.c.b16 %v2256, %v2248
    %v2953 = vpack.c.b16 %v2257, %v2249
    %v2954 = vpack.c.b16 %v2258, %v2250
    %v2955 = vpack.c.b16 %v2259, %v2251
    %v2956 = vpack.c.b16 %v2260, %v2252
    %v2957 = vpack.c.b16 %v2269, %v2261
    %v2958 = vpack.c.b16 %v2270, %v2262
    %v2959 = vpack.c.b16 %v2271, %v2263
    %v2960 = vpack.c.b16 %v2272, %v2264
    %v2961 = vpack.c.b16 %v2273, %v2265
    %v2962 = vpack.c.b16 %v2274, %v2266
    %v2963 = vpack.c.b16 %v2275, %v2267
    %v2964 = vpack.c.b16 %v2276, %v2268
    %v2965 = vpack.c.b16 %v2285, %v2277
    %v2966 = vpack.c.b16 %v2286, %v2278
    %v2967 = vpack.c.b16 %v2287, %v2279
    %v2968 = vpack.c.b16 %v2288, %v2280
    %v2969 = vpack.c.b16 %v2289, %v2281
    %v2970 = vpack.c.b16 %v2290, %v2282
    %v2971 = vpack.c.b16 %v2291, %v2283
    %v2972 = vpack.c.b16 %v2292, %v2284
    %v2973 = vpack.c.b16 %v2301, %v2293
    %v2974 = vpack.c.b16 %v2302, %v2294
    %v2975 = vpack.c.b16 %v2303, %v2295
    %v2976 = vpack.c.b16 %v2304, %v2296
    %v2977 = vpack.c.b16 %v2305, %v2297
    %v2978 = vpack.c.b16 %v2306, %v2298
    %v2979 = vpack.c.b16 %v2307, %v2299
    %v2980 = vpack.c.b16 %v2308, %v2300
    %v2981 = vpack.c.b16 %v2317, %v2309
    %v2982 = vpack.c.b16 %v2318, %v2310
    %v2983 = vpack.c.b16 %v2319, %v2311
    %v2984 = vpack.c.b16 %v2320, %v2312
    %v2985 = vpack.c.b16 %v2321, %v2313
    %v2986 = vpack.c.b16 %v2322, %v2314
    %v2987 = vpack.c.b16 %v2323, %v2315
    %v2988 = vpack.c.b16 %v2324, %v2316
    %v2989 = vpack.c.b16 %v2333, %v2325
    %v2990 = vpack.c.b16 %v2334, %v2326
    %v2991 = vpack.c.b16 %v2335, %v2327
    %v2992 = vpack.c.b16 %v2336, %v2328
    %v2993 = vpack.c.b16 %v2337, %v2329
    %v2994 = vpack.c.b16 %v2338, %v2330
    %v2995 = vpack.c.b16 %v2339, %v2331
    %v2996 = vpack.c.b16 %v2340, %v2332
    %v2997 = vpack.c.b16 %v2349, %v2341
    %v2998 = vpack.c.b16 %v2350, %v2342
    %v2999 = vpack.c.b16 %v2351, %v2343
    %v3000 = vpack.c.b16 %v2352, %v2344
    %v3001 = vpack.c.b16 %v2353, %v2345
    %v3002 = vpack.c.b16 %v2354, %v2346
    %v3003 = vpack.c.b16 %v2355, %v2347
    %v3004 = vpack.c.b16 %v2356, %v2348
    %v3005 = vpack.c.b16 %v2365, %v2357
    %v3006 = vpack.c.b16 %v2366, %v2358
    %v3007 = vpack.c.b16 %v2367, %v2359
    %v3008 = vpack.c.b16 %v2368, %v2360
    %v3009 = vpack.c.b16 %v2369, %v2361
    %v3010 = vpack.c.b16 %v2370, %v2362
    %v3011 = vpack.c.b16 %v2371, %v2363
    %v3012 = vpack.c.b16 %v2372, %v2364
    %v3013 = vpack.c.b16 %v2381, %v2373
    %v3014 = vpack.c.b16 %v2382, %v2374
    %v3015 = vpack.c.b16 %v2383, %v2375
    %v3016 = vpack.c.b16 %v2384, %v2376
    %v3017 = vpack.c.b16 %v2385, %v2377
    %v3018 = vpack.c.b16 %v2386, %v2378
    %v3019 = vpack.c.b16 %v2387, %v2379
    %v3020 = vpack.c.b16 %v2388, %v2380
    %v3021 = vpack.c.b16 %v2397, %v2389
    %v3022 = vpack.c.b16 %v2398, %v2390
    %v3023 = vpack.c.b16 %v2399, %v2391
    %v3024 = vpack.c.b16 %v2400, %v2392
    %v3025 = vpack.c.b16 %v2401, %v2393
    %v3026 = vpack.c.b16 %v2402, %v2394
    %v3027 = vpack.c.b16 %v2403, %v2395
    %v3028 = vpack.c.b16 %v2404, %v2396
    %v3029 = vpack.c.b16 %v2413, %v2405
    %v3030 = vpack.c.b16 %v2414, %v2406
    %v3031 = vpack.c.b16 %v2415, %v2407
    %v3032 = vpack.c.b16 %v2416, %v2408
    %v3033 = vpack.c.b16 %v2417, %v2409
    %v3034 = vpack.c.b16 %v2418, %v2410
    %v3035 = vpack.c.b16 %v2419, %v2411
    %v3036 = vpack.c.b16 %v2420, %v2412
    %v3037 = vpack.c.b16 %v2429, %v2421
    %v3038 = vpack.c.b16 %v2430, %v2422
    %v3039 = vpack.c.b16 %v2431, %v2423
    %v3040 = vpack.c.b16 %v2432, %v2424
    %v3041 = vpack.c.b16 %v2433, %v2425
    %v3042 = vpack.c.b16 %v2434, %v2426
    %v3043 = vpack.c.b16 %v2435, %v2427
    %v3044 = vpack.c.b16 %v2436, %v2428
    %v3045 = vpack.c.b16 %v2445, %v2437
    %v3046 = vpack.c.b16 %v2446, %v2438
    %v3047 = vpack.c.b16 %v2447, %v2439
    %v3048 = vpack.c.b16 %v2448, %v2440
    %v3049 = vpack.c.b16 %v2449, %v2441
    %v3050 = vpack.c.b16 %v2450, %v2442
    %v3051 = vpack.c.b16 %v2451, %v2443
    %v3052 = vpack.c.b16 %v2452, %v2444
    %v3053 = vpack.c.b16 %v2461, %v2453
    %v3054 = vpack.c.b16 %v2462, %v2454
    %v3055 = vpack.c.b16 %v2463, %v2455
    %v3056 = vpack.c.b16 %v2464, %v2456
    %v3057 = vpack.c.b16 %v2465, %v2457
    %v3058 = vpack.c.b16 %v2466, %v2458
    %v3059 = vpack.c.b16 %v2467, %v2459
    %v3060 = vpack.c.b16 %v2468, %v2460
    %v3061 = vpack.c.b16 %v2477, %v2469
    %v3062 = vpack.c.b16 %v2478, %v2470
    %v3063 = vpack.c.b16 %v2479, %v2471
    %v3064 = vpack.c.b16 %v2480, %v2472
    %v3065 = vpack.c.b16 %v2481, %v2473
    %v3066 = vpack.c.b16 %v2482, %v2474
    %v3067 = vpack.c.b16 %v2483, %v2475
    %v3068 = vpack.c.b16 %v2484, %v2476
    %v3069 = vpack.c.b16 %v2493, %v2485
    %v3070 = vpack.c.b16 %v2494, %v2486
    %v3071 = vpack.c.b16 %v2495, %v2487
    %v3072 = vpack.c.b16 %v2496, %v2488
    %v3073 = vpack.c.b16 %v2497, %v2489
    %v3074 = vpack.c.b16 %v2498, %v2490
    %v3075 = vpack.c.b16 %v2499, %v2491
    %v3076 = vpack.c.b16 %v2500, %v2492
    %v3077 = vpack.c.b16 %v2509, %v2501
    %v3078 = vpack.c.b16 %v2510, %v2502
    %v3079 = vpack.c.b16 %v2511, %v2503
    %v3080 = vpack.c.b16 %v2512, %v2504
    %v3081 = vpack.c.b16 %v2513, %v2505
    %v3082 = vpack.c.b16 %v2514, %v2506
    %v3083 = vpack.c.b16 %v2515, %v2507
    %v3084 = vpack.c.b16 %v2516, %v2508
    %v3085 = vpack.c.b16 %v2525, %v2517
    %v3086 = vpack.c.b16 %v2526, %v2518
    %v3087 = vpack.c.b16 %v2527, %v2519
    %v3088 = vpack.c.b16 %v2528, %v2520
    %v3089 = vpack.c.b16 %v2529, %v2521
    %v3090 = vpack.c.b16 %v2530, %v2522
    %v3091 = vpack.c.b16 %v2531, %v2523
    %v3092 = vpack.c.b16 %v2532, %v2524
    %v3093 = vpack.c.b16 %v2541, %v2533
    %v3094 = vpack.c.b16 %v2542, %v2534
    %v3095 = vpack.c.b16 %v2543, %v2535
    %v3096 = vpack.c.b16 %v2544, %v2536
    %v3097 = vpack.c.b16 %v2545, %v2537
    %v3098 = vpack.c.b16 %v2546, %v2538
    %v3099 = vpack.c.b16 %v2547, %v2539
    %v3100 = vpack.c.b16 %v2548, %v2540
    %v3101 = vpack.c.b16 %v2557, %v2549
    %v3102 = vpack.c.b16 %v2558, %v2550
    %v3103 = vpack.c.b16 %v2559, %v2551
    %v3104 = vpack.c.b16 %v2560, %v2552
    %v3105 = vpack.c.b16 %v2561, %v2553
    %v3106 = vpack.c.b16 %v2562, %v2554
    %v3107 = vpack.c.b16 %v2563, %v2555
    %v3108 = vpack.c.b16 %v2564, %v2556
    %v3109 = vpack.c.b16 %v2573, %v2565
    %v3110 = vpack.c.b16 %v2574, %v2566
    %v3111 = vpack.c.b16 %v2575, %v2567
    %v3112 = vpack.c.b16 %v2576, %v2568
    %v3113 = vpack.c.b16 %v2577, %v2569
    %v3114 = vpack.c.b16 %v2578, %v2570
    %v3115 = vpack.c.b16 %v2579, %v2571
    %v3116 = vpack.c.b16 %v2580, %v2572
    %v3117 = vpack.c.b16 %v2589, %v2581
    %v3118 = vpack.c.b16 %v2590, %v2582
    %v3119 = vpack.c.b16 %v2591, %v2583
    %v3120 = vpack.c.b16 %v2592, %v2584
    %v3121 = vpack.c.b16 %v2593, %v2585
    %v3122 = vpack.c.b16 %v2594, %v2586
    %v3123 = vpack.c.b16 %v2595, %v2587
    %v3124 = vpack.c.b16 %v2596, %v2588
    %v3125 = vpack.c.b16 %v2605, %v2597
    %v3126 = vpack.c.b16 %v2606, %v2598
    %v3127 = vpack.c.b16 %v2607, %v2599
    %v3128 = vpack.c.b16 %v2608, %v2600
    %v3129 = vpack.c.b16 %v2609, %v2601
    %v3130 = vpack.c.b16 %v2610, %v2602
    %v3131 = vpack.c.b16 %v2611, %v2603
    %v3132 = vpack.c.b16 %v2612, %v2604
    %v3133 = vpack.c.b16 %v2621, %v2613
    %v3134 = vpack.c.b16 %v2622, %v2614
    %v3135 = vpack.c.b16 %v2623, %v2615
    %v3136 = vpack.c.b16 %v2624, %v2616
    %v3137 = vpack.c.b16 %v2625, %v2617
    %v3138 = vpack.c.b16 %v2626, %v2618
    %v3139 = vpack.c.b16 %v2627, %v2619
    %v3140 = vpack.c.b16 %v2628, %v2620
    %3653 = vmatprep.subr.bf16.mxu0 %v2630
    %3654 = vmatpush1.bf16.msra.mxu0 %v2629
    %3655 = vmatprep.subr.bf16.mxu0 %v2638
    %3656 = vmatpush1.bf16.msra.mxu0 %v2637
    %3657 = vmatprep.subr.bf16.mxu0 %v2646
    %3658 = vmatpush1.bf16.msra.mxu0 %v2645
    %3659 = vmatprep.subr.bf16.mxu0 %v2654
    %3660 = vmatpush1.bf16.msra.mxu0 %v2653
    %3661 = vmatprep.subr.bf16.mxu0 %v2662
    %3662 = vmatpush1.bf16.msra.mxu0 %v2661
    %3663 = vmatprep.subr.bf16.mxu0 %v2670
    %3664 = vmatpush1.bf16.msra.mxu0 %v2669
    %3665 = vmatprep.subr.bf16.mxu0 %v2678
    %3666 = vmatpush1.bf16.msra.mxu0 %v2677
    %3667 = vmatprep.subr.bf16.mxu0 %v2686
    %3668 = vmatpush1.bf16.msra.mxu0 %v2685
    %3669 = vmatprep.subr.bf16.mxu0 %v2694
    %3670 = vmatpush1.bf16.msra.mxu0 %v2693
    %3671 = vmatprep.subr.bf16.mxu0 %v2702
    %3672 = vmatpush1.bf16.msra.mxu0 %v2701
    %3673 = vmatprep.subr.bf16.mxu0 %v2710
    %3674 = vmatpush1.bf16.msra.mxu0 %v2709
    %3675 = vmatprep.subr.bf16.mxu0 %v2718
    %3676 = vmatpush1.bf16.msra.mxu0 %v2717
    %3677 = vmatprep.subr.bf16.mxu0 %v2726
    %3678 = vmatpush1.bf16.msra.mxu0 %v2725
    %3679 = vmatprep.subr.bf16.mxu0 %v2734
    %3680 = vmatpush1.bf16.msra.mxu0 %v2733
    %3681 = vmatprep.subr.bf16.mxu0 %v2742
    %3682 = vmatpush1.bf16.msra.mxu0 %v2741
    %3683 = vmatprep.subr.bf16.mxu0 %v2750
    %3684 = vmatpush1.bf16.msra.mxu0 %v2749
    %3685 = vmatprep.mubr.bf16.mxu0 %v524
    %3686 = vmatmul.mubr.bf16.gmra.mrb[0].mxu0 %v523
    %v3687 = vpop.f32.mrb[0].mxu0
    %v3688 = vadd.f32 %v1056, %v3687
    %v3689 = vpop.f32.mrb[0].mxu0
    %v3690 = vadd.f32 %v1060, %v3689
    %v3691 = vpop.f32.mrb[0].mxu0
    %v3692 = vadd.f32 %v1056, %v3691
    %v3693 = vpop.f32.mrb[0].mxu0
    %v3694 = vadd.f32 %v1060, %v3693
    %3695 = vmatprep.mubr.bf16.mxu0 %v532
    %3696 = vmatmul.mubr.bf16.gmra.mrb[0].mxu0 %v531
    %v3697 = vpop.f32.mrb[0].mxu0
    %v3698 = vadd.f32 %v1056, %v3697
    %v3699 = vpop.f32.mrb[0].mxu0
    %v3700 = vadd.f32 %v1060, %v3699
    %v3701 = vpop.f32.mrb[0].mxu0
    %v3702 = vadd.f32 %v1056, %v3701
    %v3703 = vpop.f32.mrb[0].mxu0
    %v3704 = vadd.f32 %v1060, %v3703
    %3705 = vdwg.mxu0
    %3706 = vmatprep.subr.bf16.mxu0 %v2758
    %3707 = vmatpush1.bf16.msra.mxu0 %v2757
    %3708 = vmatprep.subr.bf16.mxu0 %v2766
    %3709 = vmatpush1.bf16.msra.mxu0 %v2765
    %3710 = vmatprep.subr.bf16.mxu0 %v2774
    %3711 = vmatpush1.bf16.msra.mxu0 %v2773
    %3712 = vmatprep.subr.bf16.mxu0 %v2782
    %3713 = vmatpush1.bf16.msra.mxu0 %v2781
    %3714 = vmatprep.subr.bf16.mxu0 %v2790
    %3715 = vmatpush1.bf16.msra.mxu0 %v2789
    %3716 = vmatprep.subr.bf16.mxu0 %v2798
    %3717 = vmatpush1.bf16.msra.mxu0 %v2797
    %3718 = vmatprep.subr.bf16.mxu0 %v2806
    %3719 = vmatpush1.bf16.msra.mxu0 %v2805
    %3720 = vmatprep.subr.bf16.mxu0 %v2814
    %3721 = vmatpush1.bf16.msra.mxu0 %v2813
    %3722 = vmatprep.subr.bf16.mxu0 %v2822
    %3723 = vmatpush1.bf16.msra.mxu0 %v2821
    %3724 = vmatprep.subr.bf16.mxu0 %v2830
    %3725 = vmatpush1.bf16.msra.mxu0 %v2829
    %3726 = vmatprep.subr.bf16.mxu0 %v2838
    %3727 = vmatpush1.bf16.msra.mxu0 %v2837
    %3728 = vmatprep.subr.bf16.mxu0 %v2846
    %3729 = vmatpush1.bf16.msra.mxu0 %v2845
    %3730 = vmatprep.subr.bf16.mxu0 %v2854
    %3731 = vmatpush1.bf16.msra.mxu0 %v2853
    %3732 = vmatprep.subr.bf16.mxu0 %v2862
    %3733 = vmatpush1.bf16.msra.mxu0 %v2861
    %3734 = vmatprep.subr.bf16.mxu0 %v2870
    %3735 = vmatpush1.bf16.msra.mxu0 %v2869
    %3736 = vmatprep.subr.bf16.mxu0 %v2878
    %3737 = vmatpush1.bf16.msra.mxu0 %v2877
    %3738 = vmatprep.mubr.bf16.mxu0 %v526
    %3739 = vmatmul.mubr.bf16.gmra.mrb[0].mxu0 %v525
    %v3740 = vpop.f32.mrb[0].mxu0
    %v3741 = vadd.f32 %v3688, %v3740
    %v3742 = vpop.f32.mrb[0].mxu0
    %v3743 = vadd.f32 %v3690, %v3742
    %v3744 = vpop.f32.mrb[0].mxu0
    %v3745 = vadd.f32 %v3692, %v3744
    %v3746 = vpop.f32.mrb[0].mxu0
    %v3747 = vadd.f32 %v3694, %v3746
    %3748 = vmatprep.mubr.bf16.mxu0 %v534
    %3749 = vmatmul.mubr.bf16.gmra.mrb[0].mxu0 %v533
    %v3750 = vpop.f32.mrb[0].mxu0
    %v3751 = vadd.f32 %v3698, %v3750
    %v3752 = vpop.f32.mrb[0].mxu0
    %v3753 = vadd.f32 %v3700, %v3752
    %v3754 = vpop.f32.mrb[0].mxu0
    %v3755 = vadd.f32 %v3702, %v3754
    %v3756 = vpop.f32.mrb[0].mxu0
    %v3757 = vadd.f32 %v3704, %v3756
    %3758 = vdwg.mxu0
    %3759 = vmatprep.subr.bf16.mxu0 %v2886
    %3760 = vmatpush1.bf16.msra.mxu0 %v2885
    %3761 = vmatprep.subr.bf16.mxu0 %v2894
    %3762 = vmatpush1.bf16.msra.mxu0 %v2893
    %3763 = vmatprep.subr.bf16.mxu0 %v2902
    %3764 = vmatpush1.bf16.msra.mxu0 %v2901
    %3765 = vmatprep.subr.bf16.mxu0 %v2910
    %3766 = vmatpush1.bf16.msra.mxu0 %v2909
    %3767 = vmatprep.subr.bf16.mxu0 %v2918
    %3768 = vmatpush1.bf16.msra.mxu0 %v2917
    %3769 = vmatprep.subr.bf16.mxu0 %v2926
    %3770 = vmatpush1.bf16.msra.mxu0 %v2925
    %3771 = vmatprep.subr.bf16.mxu0 %v2934
    %3772 = vmatpush1.bf16.msra.mxu0 %v2933
    %3773 = vmatprep.subr.bf16.mxu0 %v2942
    %3774 = vmatpush1.bf16.msra.mxu0 %v2941
    %3775 = vmatprep.subr.bf16.mxu0 %v2950
    %3776 = vmatpush1.bf16.msra.mxu0 %v2949
    %3777 = vmatprep.subr.bf16.mxu0 %v2958
    %3778 = vmatpush1.bf16.msra.mxu0 %v2957
    %3779 = vmatprep.subr.bf16.mxu0 %v2966
    %3780 = vmatpush1.bf16.msra.mxu0 %v2965
    %3781 = vmatprep.subr.bf16.mxu0 %v2974
    %3782 = vmatpush1.bf16.msra.mxu0 %v2973
    %3783 = vmatprep.subr.bf16.mxu0 %v2982
    %3784 = vmatpush1.bf16.msra.mxu0 %v2981
    %3785 = vmatprep.subr.bf16.mxu0 %v2990
    %3786 = vmatpush1.bf16.msra.mxu0 %v2989
    %3787 = vmatprep.subr.bf16.mxu0 %v2998
    %3788 = vmatpush1.bf16.msra.mxu0 %v2997
    %3789 = vmatprep.subr.bf16.mxu0 %v3006
    %3790 = vmatpush1.bf16.msra.mxu0 %v3005
    %3791 = vmatprep.mubr.bf16.mxu0 %v528
    %3792 = vmatmul.mubr.bf16.gmra.mrb[0].mxu0 %v527
    %v3793 = vpop.f32.mrb[0].mxu0
    %v3794 = vadd.f32 %v3741, %v3793
    %v3795 = vpop.f32.mrb[0].mxu0
    %v3796 = vadd.f32 %v3743, %v3795
    %v3797 = vpop.f32.mrb[0].mxu0
    %v3798 = vadd.f32 %v3745, %v3797
    %v3799 = vpop.f32.mrb[0].mxu0
    %v3800 = vadd.f32 %v3747, %v3799
    %3801 = vmatprep.mubr.bf16.mxu0 %v536
    %3802 = vmatmul.mubr.bf16.gmra.mrb[0].mxu0 %v535
    %v3803 = vpop.f32.mrb[0].mxu0
    %v3804 = vadd.f32 %v3751, %v3803
    %v3805 = vpop.f32.mrb[0].mxu0
    %v3806 = vadd.f32 %v3753, %v3805
    %v3807 = vpop.f32.mrb[0].mxu0
    %v3808 = vadd.f32 %v3755, %v3807
    %v3809 = vpop.f32.mrb[0].mxu0
    %v3810 = vadd.f32 %v3757, %v3809
    %3811 = vdwg.mxu0
    %3812 = vmatprep.subr.bf16.mxu0 %v3014
    %3813 = vmatpush1.bf16.msra.mxu0 %v3013
    %3814 = vmatprep.subr.bf16.mxu0 %v3022
    %3815 = vmatpush1.bf16.msra.mxu0 %v3021
    %3816 = vmatprep.subr.bf16.mxu0 %v3030
    %3817 = vmatpush1.bf16.msra.mxu0 %v3029
    %3818 = vmatprep.subr.bf16.mxu0 %v3038
    %3819 = vmatpush1.bf16.msra.mxu0 %v3037
    %3820 = vmatprep.subr.bf16.mxu0 %v3046
    %3821 = vmatpush1.bf16.msra.mxu0 %v3045
    %3822 = vmatprep.subr.bf16.mxu0 %v3054
    %3823 = vmatpush1.bf16.msra.mxu0 %v3053
    %3824 = vmatprep.subr.bf16.mxu0 %v3062
    %3825 = vmatpush1.bf16.msra.mxu0 %v3061
    %3826 = vmatprep.subr.bf16.mxu0 %v3070
    %3827 = vmatpush1.bf16.msra.mxu0 %v3069
    %3828 = vmatprep.subr.bf16.mxu0 %v3078
    %3829 = vmatpush1.bf16.msra.mxu0 %v3077
    %3830 = vmatprep.subr.bf16.mxu0 %v3086
    %3831 = vmatpush1.bf16.msra.mxu0 %v3085
    %3832 = vmatprep.subr.bf16.mxu0 %v3094
    %3833 = vmatpush1.bf16.msra.mxu0 %v3093
    %3834 = vmatprep.subr.bf16.mxu0 %v3102
    %3835 = vmatpush1.bf16.msra.mxu0 %v3101
    %3836 = vmatprep.subr.bf16.mxu0 %v3110
    %3837 = vmatpush1.bf16.msra.mxu0 %v3109
    %3838 = vmatprep.subr.bf16.mxu0 %v3118
    %3839 = vmatpush1.bf16.msra.mxu0 %v3117
    %3840 = vmatprep.subr.bf16.mxu0 %v3126
    %3841 = vmatpush1.bf16.msra.mxu0 %v3125
    %3842 = vmatprep.subr.bf16.mxu0 %v3134
    %3843 = vmatpush1.bf16.msra.mxu0 %v3133
    %3844 = vmatprep.mubr.bf16.mxu0 %v530
    %3845 = vmatmul.mubr.bf16.gmra.mrb[0].mxu0 %v529
    %v3846 = vpop.f32.mrb[0].mxu0
    %v3847 = vadd.f32 %v3794, %v3846
    %v3848 = vpop.f32.mrb[0].mxu0
    %v3849 = vadd.f32 %v3796, %v3848
    %v3850 = vpop.f32.mrb[0].mxu0
    %v3851 = vadd.f32 %v3798, %v3850
    %v3852 = vpop.f32.mrb[0].mxu0
    %v3853 = vadd.f32 %v3800, %v3852
    %3854 = vmatprep.mubr.bf16.mxu0 %v538
    %3855 = vmatmul.mubr.bf16.gmra.mrb[0].mxu0 %v537
    %v3856 = vpop.f32.mrb[0].mxu0
    %v3857 = vadd.f32 %v3804, %v3856
    %v3858 = vpop.f32.mrb[0].mxu0
    %v3859 = vadd.f32 %v3806, %v3858
    %v3860 = vpop.f32.mrb[0].mxu0
    %v3861 = vadd.f32 %v3808, %v3860
    %v3862 = vpop.f32.mrb[0].mxu0
    %v3863 = vadd.f32 %v3810, %v3862
    %3864 = vdwg.mxu0
    %3865 = vmatprep.subr.bf16.mxu0 %v2632
    %3866 = vmatpush1.bf16.msra.mxu0 %v2631
    %3867 = vmatprep.subr.bf16.mxu0 %v2640
    %3868 = vmatpush1.bf16.msra.mxu0 %v2639
    %3869 = vmatprep.subr.bf16.mxu0 %v2648
    %3870 = vmatpush1.bf16.msra.mxu0 %v2647
    %3871 = vmatprep.subr.bf16.mxu0 %v2656
    %3872 = vmatpush1.bf16.msra.mxu0 %v2655
    %3873 = vmatprep.subr.bf16.mxu0 %v2664
    %3874 = vmatpush1.bf16.msra.mxu0 %v2663
    %3875 = vmatprep.subr.bf16.mxu0 %v2672
    %3876 = vmatpush1.bf16.msra.mxu0 %v2671
    %3877 = vmatprep.subr.bf16.mxu0 %v2680
    %3878 = vmatpush1.bf16.msra.mxu0 %v2679
    %3879 = vmatprep.subr.bf16.mxu0 %v2688
    %3880 = vmatpush1.bf16.msra.mxu0 %v2687
    %3881 = vmatprep.subr.bf16.mxu0 %v2696
    %3882 = vmatpush1.bf16.msra.mxu0 %v2695
    %3883 = vmatprep.subr.bf16.mxu0 %v2704
    %3884 = vmatpush1.bf16.msra.mxu0 %v2703
    %3885 = vmatprep.subr.bf16.mxu0 %v2712
    %3886 = vmatpush1.bf16.msra.mxu0 %v2711
    %3887 = vmatprep.subr.bf16.mxu0 %v2720
    %3888 = vmatpush1.bf16.msra.mxu0 %v2719
    %3889 = vmatprep.subr.bf16.mxu0 %v2728
    %3890 = vmatpush1.bf16.msra.mxu0 %v2727
    %3891 = vmatprep.subr.bf16.mxu0 %v2736
    %3892 = vmatpush1.bf16.msra.mxu0 %v2735
    %3893 = vmatprep.subr.bf16.mxu0 %v2744
    %3894 = vmatpush1.bf16.msra.mxu0 %v2743
    %3895 = vmatprep.subr.bf16.mxu0 %v2752
    %3896 = vmatpush1.bf16.msra.mxu0 %v2751
    %3897 = vmatprep.mubr.bf16.mxu0 %v524
    %3898 = vmatmul.mubr.bf16.gmra.mrb[0].mxu0 %v523
    %v3899 = vpop.f32.mrb[0].mxu0
    %v3900 = vadd.f32 %v1064, %v3899
    %v3901 = vpop.f32.mrb[0].mxu0
    %v3902 = vadd.f32 %v1068, %v3901
    %v3903 = vpop.f32.mrb[0].mxu0
    %v3904 = vadd.f32 %v1064, %v3903
    %v3905 = vpop.f32.mrb[0].mxu0
    %v3906 = vadd.f32 %v1068, %v3905
    %3907 = vmatprep.mubr.bf16.mxu0 %v532
    %3908 = vmatmul.mubr.bf16.gmra.mrb[0].mxu0 %v531
    %v3909 = vpop.f32.mrb[0].mxu0
    %v3910 = vadd.f32 %v1064, %v3909
    %v3911 = vpop.f32.mrb[0].mxu0
    %v3912 = vadd.f32 %v1068, %v3911
    %v3913 = vpop.f32.mrb[0].mxu0
    %v3914 = vadd.f32 %v1064, %v3913
    %v3915 = vpop.f32.mrb[0].mxu0
    %v3916 = vadd.f32 %v1068, %v3915
    %3917 = vdwg.mxu0
    %3918 = vmatprep.subr.bf16.mxu0 %v2760
    %3919 = vmatpush1.bf16.msra.mxu0 %v2759
    %3920 = vmatprep.subr.bf16.mxu0 %v2768
    %3921 = vmatpush1.bf16.msra.mxu0 %v2767
    %3922 = vmatprep.subr.bf16.mxu0 %v2776
    %3923 = vmatpush1.bf16.msra.mxu0 %v2775
    %3924 = vmatprep.subr.bf16.mxu0 %v2784
    %3925 = vmatpush1.bf16.msra.mxu0 %v2783
    %3926 = vmatprep.subr.bf16.mxu0 %v2792
    %3927 = vmatpush1.bf16.msra.mxu0 %v2791
    %3928 = vmatprep.subr.bf16.mxu0 %v2800
    %3929 = vmatpush1.bf16.msra.mxu0 %v2799
    %3930 = vmatprep.subr.bf16.mxu0 %v2808
    %3931 = vmatpush1.bf16.msra.mxu0 %v2807
    %3932 = vmatprep.subr.bf16.mxu0 %v2816
    %3933 = vmatpush1.bf16.msra.mxu0 %v2815
    %3934 = vmatprep.subr.bf16.mxu0 %v2824
    %3935 = vmatpush1.bf16.msra.mxu0 %v2823
    %3936 = vmatprep.subr.bf16.mxu0 %v2832
    %3937 = vmatpush1.bf16.msra.mxu0 %v2831
    %3938 = vmatprep.subr.bf16.mxu0 %v2840
    %3939 = vmatpush1.bf16.msra.mxu0 %v2839
    %3940 = vmatprep.subr.bf16.mxu0 %v2848
    %3941 = vmatpush1.bf16.msra.mxu0 %v2847
    %3942 = vmatprep.subr.bf16.mxu0 %v2856
    %3943 = vmatpush1.bf16.msra.mxu0 %v2855
    %3944 = vmatprep.subr.bf16.mxu0 %v2864
    %3945 = vmatpush1.bf16.msra.mxu0 %v2863
    %3946 = vmatprep.subr.bf16.mxu0 %v2872
    %3947 = vmatpush1.bf16.msra.mxu0 %v2871
    %3948 = vmatprep.subr.bf16.mxu0 %v2880
    %3949 = vmatpush1.bf16.msra.mxu0 %v2879
    %3950 = vmatprep.mubr.bf16.mxu0 %v526
    %3951 = vmatmul.mubr.bf16.gmra.mrb[0].mxu0 %v525
    %v3952 = vpop.f32.mrb[0].mxu0
    %v3953 = vadd.f32 %v3900, %v3952
    %v3954 = vpop.f32.mrb[0].mxu0
    %v3955 = vadd.f32 %v3902, %v3954
    %v3956 = vpop.f32.mrb[0].mxu0
    %v3957 = vadd.f32 %v3904, %v3956
    %v3958 = vpop.f32.mrb[0].mxu0
    %v3959 = vadd.f32 %v3906, %v3958
    %3960 = vmatprep.mubr.bf16.mxu0 %v534
    %3961 = vmatmul.mubr.bf16.gmra.mrb[0].mxu0 %v533
    %v3962 = vpop.f32.mrb[0].mxu0
    %v3963 = vadd.f32 %v3910, %v3962
    %v3964 = vpop.f32.mrb[0].mxu0
    %v3965 = vadd.f32 %v3912, %v3964
    %v3966 = vpop.f32.mrb[0].mxu0
    %v3967 = vadd.f32 %v3914, %v3966
    %v3968 = vpop.f32.mrb[0].mxu0
    %v3969 = vadd.f32 %v3916, %v3968
    %3970 = vdwg.mxu0
    %3971 = vmatprep.subr.bf16.mxu0 %v2888
    %3972 = vmatpush1.bf16.msra.mxu0 %v2887
    %3973 = vmatprep.subr.bf16.mxu0 %v2896
    %3974 = vmatpush1.bf16.msra.mxu0 %v2895
    %3975 = vmatprep.subr.bf16.mxu0 %v2904
    %3976 = vmatpush1.bf16.msra.mxu0 %v2903
    %3977 = vmatprep.subr.bf16.mxu0 %v2912
    %3978 = vmatpush1.bf16.msra.mxu0 %v2911
    %3979 = vmatprep.subr.bf16.mxu0 %v2920
    %3980 = vmatpush1.bf16.msra.mxu0 %v2919
    %3981 = vmatprep.subr.bf16.mxu0 %v2928
    %3982 = vmatpush1.bf16.msra.mxu0 %v2927
    %3983 = vmatprep.subr.bf16.mxu0 %v2936
    %3984 = vmatpush1.bf16.msra.mxu0 %v2935
    %3985 = vmatprep.subr.bf16.mxu0 %v2944
    %3986 = vmatpush1.bf16.msra.mxu0 %v2943
    %3987 = vmatprep.subr.bf16.mxu0 %v2952
    %3988 = vmatpush1.bf16.msra.mxu0 %v2951
    %3989 = vmatprep.subr.bf16.mxu0 %v2960
    %3990 = vmatpush1.bf16.msra.mxu0 %v2959
    %3991 = vmatprep.subr.bf16.mxu0 %v2968
    %3992 = vmatpush1.bf16.msra.mxu0 %v2967
    %3993 = vmatprep.subr.bf16.mxu0 %v2976
    %3994 = vmatpush1.bf16.msra.mxu0 %v2975
    %3995 = vmatprep.subr.bf16.mxu0 %v2984
    %3996 = vmatpush1.bf16.msra.mxu0 %v2983
    %3997 = vmatprep.subr.bf16.mxu0 %v2992
    %3998 = vmatpush1.bf16.msra.mxu0 %v2991
    %3999 = vmatprep.subr.bf16.mxu0 %v3000
    %4000 = vmatpush1.bf16.msra.mxu0 %v2999
    %4001 = vmatprep.subr.bf16.mxu0 %v3008
    %4002 = vmatpush1.bf16.msra.mxu0 %v3007
    %4003 = vmatprep.mubr.bf16.mxu0 %v528
    %4004 = vmatmul.mubr.bf16.gmra.mrb[0].mxu0 %v527
    %v4005 = vpop.f32.mrb[0].mxu0
    %v4006 = vadd.f32 %v3953, %v4005
    %v4007 = vpop.f32.mrb[0].mxu0
    %v4008 = vadd.f32 %v3955, %v4007
    %v4009 = vpop.f32.mrb[0].mxu0
    %v4010 = vadd.f32 %v3957, %v4009
    %v4011 = vpop.f32.mrb[0].mxu0
    %v4012 = vadd.f32 %v3959, %v4011
    %4013 = vmatprep.mubr.bf16.mxu0 %v536
    %4014 = vmatmul.mubr.bf16.gmra.mrb[0].mxu0 %v535
    %v4015 = vpop.f32.mrb[0].mxu0
    %v4016 = vadd.f32 %v3963, %v4015
    %v4017 = vpop.f32.mrb[0].mxu0
    %v4018 = vadd.f32 %v3965, %v4017
    %v4019 = vpop.f32.mrb[0].mxu0
    %v4020 = vadd.f32 %v3967, %v4019
    %v4021 = vpop.f32.mrb[0].mxu0
    %v4022 = vadd.f32 %v3969, %v4021
    %4023 = vdwg.mxu0
    %4024 = vmatprep.subr.bf16.mxu0 %v3016
    %4025 = vmatpush1.bf16.msra.mxu0 %v3015
    %4026 = vmatprep.subr.bf16.mxu0 %v3024
    %4027 = vmatpush1.bf16.msra.mxu0 %v3023
    %4028 = vmatprep.subr.bf16.mxu0 %v3032
    %4029 = vmatpush1.bf16.msra.mxu0 %v3031
    %4030 = vmatprep.subr.bf16.mxu0 %v3040
    %4031 = vmatpush1.bf16.msra.mxu0 %v3039
    %4032 = vmatprep.subr.bf16.mxu0 %v3048
    %4033 = vmatpush1.bf16.msra.mxu0 %v3047
    %4034 = vmatprep.subr.bf16.mxu0 %v3056
    %4035 = vmatpush1.bf16.msra.mxu0 %v3055
    %4036 = vmatprep.subr.bf16.mxu0 %v3064
    %4037 = vmatpush1.bf16.msra.mxu0 %v3063
    %4038 = vmatprep.subr.bf16.mxu0 %v3072
    %4039 = vmatpush1.bf16.msra.mxu0 %v3071
    %4040 = vmatprep.subr.bf16.mxu0 %v3080
    %4041 = vmatpush1.bf16.msra.mxu0 %v3079
    %4042 = vmatprep.subr.bf16.mxu0 %v3088
    %4043 = vmatpush1.bf16.msra.mxu0 %v3087
    %4044 = vmatprep.subr.bf16.mxu0 %v3096
    %4045 = vmatpush1.bf16.msra.mxu0 %v3095
    %4046 = vmatprep.subr.bf16.mxu0 %v3104
    %4047 = vmatpush1.bf16.msra.mxu0 %v3103
    %4048 = vmatprep.subr.bf16.mxu0 %v3112
    %4049 = vmatpush1.bf16.msra.mxu0 %v3111
    %4050 = vmatprep.subr.bf16.mxu0 %v3120
    %4051 = vmatpush1.bf16.msra.mxu0 %v3119
    %4052 = vmatprep.subr.bf16.mxu0 %v3128
    %4053 = vmatpush1.bf16.msra.mxu0 %v3127
    %4054 = vmatprep.subr.bf16.mxu0 %v3136
    %4055 = vmatpush1.bf16.msra.mxu0 %v3135
    %4056 = vmatprep.mubr.bf16.mxu0 %v530
    %4057 = vmatmul.mubr.bf16.gmra.mrb[0].mxu0 %v529
    %v4058 = vpop.f32.mrb[0].mxu0
    %v4059 = vadd.f32 %v4006, %v4058
    %v4060 = vpop.f32.mrb[0].mxu0
    %v4061 = vadd.f32 %v4008, %v4060
    %v4062 = vpop.f32.mrb[0].mxu0
    %v4063 = vadd.f32 %v4010, %v4062
    %v4064 = vpop.f32.mrb[0].mxu0
    %v4065 = vadd.f32 %v4012, %v4064
    %4066 = vmatprep.mubr.bf16.mxu0 %v538
    %4067 = vmatmul.mubr.bf16.gmra.mrb[0].mxu0 %v537
    %v4068 = vpop.f32.mrb[0].mxu0
    %v4069 = vadd.f32 %v4016, %v4068
    %v4070 = vpop.f32.mrb[0].mxu0
    %v4071 = vadd.f32 %v4018, %v4070
    %v4072 = vpop.f32.mrb[0].mxu0
    %v4073 = vadd.f32 %v4020, %v4072
    %v4074 = vpop.f32.mrb[0].mxu0
    %v4075 = vadd.f32 %v4022, %v4074
    %4076 = vdwg.mxu0
    %4077 = vmatprep.subr.bf16.mxu0 %v2634
    %4078 = vmatpush1.bf16.msra.mxu0 %v2633
    %4079 = vmatprep.subr.bf16.mxu0 %v2642
    %4080 = vmatpush1.bf16.msra.mxu0 %v2641
    %4081 = vmatprep.subr.bf16.mxu0 %v2650
    %4082 = vmatpush1.bf16.msra.mxu0 %v2649
    %4083 = vmatprep.subr.bf16.mxu0 %v2658
    %4084 = vmatpush1.bf16.msra.mxu0 %v2657
    %4085 = vmatprep.subr.bf16.mxu0 %v2666
    %4086 = vmatpush1.bf16.msra.mxu0 %v2665
    %4087 = vmatprep.subr.bf16.mxu0 %v2674
    %4088 = vmatpush1.bf16.msra.mxu0 %v2673
    %4089 = vmatprep.subr.bf16.mxu0 %v2682
    %4090 = vmatpush1.bf16.msra.mxu0 %v2681
    %4091 = vmatprep.subr.bf16.mxu0 %v2690
    %4092 = vmatpush1.bf16.msra.mxu0 %v2689
    %4093 = vmatprep.subr.bf16.mxu0 %v2698
    %4094 = vmatpush1.bf16.msra.mxu0 %v2697
    %4095 = vmatprep.subr.bf16.mxu0 %v2706
    %4096 = vmatpush1.bf16.msra.mxu0 %v2705
    %4097 = vmatprep.subr.bf16.mxu0 %v2714
    %4098 = vmatpush1.bf16.msra.mxu0 %v2713
    %4099 = vmatprep.subr.bf16.mxu0 %v2722
    %4100 = vmatpush1.bf16.msra.mxu0 %v2721
    %4101 = vmatprep.subr.bf16.mxu0 %v2730
    %4102 = vmatpush1.bf16.msra.mxu0 %v2729
    %4103 = vmatprep.subr.bf16.mxu0 %v2738
    %4104 = vmatpush1.bf16.msra.mxu0 %v2737
    %4105 = vmatprep.subr.bf16.mxu0 %v2746
    %4106 = vmatpush1.bf16.msra.mxu0 %v2745
    %4107 = vmatprep.subr.bf16.mxu0 %v2754
    %4108 = vmatpush1.bf16.msra.mxu0 %v2753
    %4109 = vmatprep.mubr.bf16.mxu0 %v524
    %4110 = vmatmul.mubr.bf16.gmra.mrb[0].mxu0 %v523
    %v4111 = vpop.f32.mrb[0].mxu0
    %v4112 = vadd.f32 %v1072, %v4111
    %v4113 = vpop.f32.mrb[0].mxu0
    %v4114 = vadd.f32 %v1076, %v4113
    %v4115 = vpop.f32.mrb[0].mxu0
    %v4116 = vadd.f32 %v1072, %v4115
    %v4117 = vpop.f32.mrb[0].mxu0
    %v4118 = vadd.f32 %v1076, %v4117
    %4119 = vmatprep.mubr.bf16.mxu0 %v532
    %4120 = vmatmul.mubr.bf16.gmra.mrb[0].mxu0 %v531
    %v4121 = vpop.f32.mrb[0].mxu0
    %v4122 = vadd.f32 %v1072, %v4121
    %v4123 = vpop.f32.mrb[0].mxu0
    %v4124 = vadd.f32 %v1076, %v4123
    %v4125 = vpop.f32.mrb[0].mxu0
    %v4126 = vadd.f32 %v1072, %v4125
    %v4127 = vpop.f32.mrb[0].mxu0
    %v4128 = vadd.f32 %v1076, %v4127
    %4129 = vdwg.mxu0
    %4130 = vmatprep.subr.bf16.mxu0 %v2762
    %4131 = vmatpush1.bf16.msra.mxu0 %v2761
    %4132 = vmatprep.subr.bf16.mxu0 %v2770
    %4133 = vmatpush1.bf16.msra.mxu0 %v2769
    %4134 = vmatprep.subr.bf16.mxu0 %v2778
    %4135 = vmatpush1.bf16.msra.mxu0 %v2777
    %4136 = vmatprep.subr.bf16.mxu0 %v2786
    %4137 = vmatpush1.bf16.msra.mxu0 %v2785
    %4138 = vmatprep.subr.bf16.mxu0 %v2794
    %4139 = vmatpush1.bf16.msra.mxu0 %v2793
    %4140 = vmatprep.subr.bf16.mxu0 %v2802
    %4141 = vmatpush1.bf16.msra.mxu0 %v2801
    %4142 = vmatprep.subr.bf16.mxu0 %v2810
    %4143 = vmatpush1.bf16.msra.mxu0 %v2809
    %4144 = vmatprep.subr.bf16.mxu0 %v2818
    %4145 = vmatpush1.bf16.msra.mxu0 %v2817
    %4146 = vmatprep.subr.bf16.mxu0 %v2826
    %4147 = vmatpush1.bf16.msra.mxu0 %v2825
    %4148 = vmatprep.subr.bf16.mxu0 %v2834
    %4149 = vmatpush1.bf16.msra.mxu0 %v2833
    %4150 = vmatprep.subr.bf16.mxu0 %v2842
    %4151 = vmatpush1.bf16.msra.mxu0 %v2841
    %4152 = vmatprep.subr.bf16.mxu0 %v2850
    %4153 = vmatpush1.bf16.msra.mxu0 %v2849
    %4154 = vmatprep.subr.bf16.mxu0 %v2858
    %4155 = vmatpush1.bf16.msra.mxu0 %v2857
    %4156 = vmatprep.subr.bf16.mxu0 %v2866
    %4157 = vmatpush1.bf16.msra.mxu0 %v2865
    %4158 = vmatprep.subr.bf16.mxu0 %v2874
    %4159 = vmatpush1.bf16.msra.mxu0 %v2873
    %4160 = vmatprep.subr.bf16.mxu0 %v2882
    %4161 = vmatpush1.bf16.msra.mxu0 %v2881
    %4162 = vmatprep.mubr.bf16.mxu0 %v526
    %4163 = vmatmul.mubr.bf16.gmra.mrb[0].mxu0 %v525
    %v4164 = vpop.f32.mrb[0].mxu0
    %v4165 = vadd.f32 %v4112, %v4164
    %v4166 = vpop.f32.mrb[0].mxu0
    %v4167 = vadd.f32 %v4114, %v4166
    %v4168 = vpop.f32.mrb[0].mxu0
    %v4169 = vadd.f32 %v4116, %v4168
    %v4170 = vpop.f32.mrb[0].mxu0
    %v4171 = vadd.f32 %v4118, %v4170
    %4172 = vmatprep.mubr.bf16.mxu0 %v534
    %4173 = vmatmul.mubr.bf16.gmra.mrb[0].mxu0 %v533
    %v4174 = vpop.f32.mrb[0].mxu0
    %v4175 = vadd.f32 %v4122, %v4174
    %v4176 = vpop.f32.mrb[0].mxu0
    %v4177 = vadd.f32 %v4124, %v4176
    %v4178 = vpop.f32.mrb[0].mxu0
    %v4179 = vadd.f32 %v4126, %v4178
    %v4180 = vpop.f32.mrb[0].mxu0
    %v4181 = vadd.f32 %v4128, %v4180
    %4182 = vdwg.mxu0
    %4183 = vmatprep.subr.bf16.mxu0 %v2890
    %4184 = vmatpush1.bf16.msra.mxu0 %v2889
    %4185 = vmatprep.subr.bf16.mxu0 %v2898
    %4186 = vmatpush1.bf16.msra.mxu0 %v2897
    %4187 = vmatprep.subr.bf16.mxu0 %v2906
    %4188 = vmatpush1.bf16.msra.mxu0 %v2905
    %4189 = vmatprep.subr.bf16.mxu0 %v2914
    %4190 = vmatpush1.bf16.msra.mxu0 %v2913
    %4191 = vmatprep.subr.bf16.mxu0 %v2922
    %4192 = vmatpush1.bf16.msra.mxu0 %v2921
    %4193 = vmatprep.subr.bf16.mxu0 %v2930
    %4194 = vmatpush1.bf16.msra.mxu0 %v2929
    %4195 = vmatprep.subr.bf16.mxu0 %v2938
    %4196 = vmatpush1.bf16.msra.mxu0 %v2937
    %4197 = vmatprep.subr.bf16.mxu0 %v2946
    %4198 = vmatpush1.bf16.msra.mxu0 %v2945
    %4199 = vmatprep.subr.bf16.mxu0 %v2954
    %4200 = vmatpush1.bf16.msra.mxu0 %v2953
    %4201 = vmatprep.subr.bf16.mxu0 %v2962
    %4202 = vmatpush1.bf16.msra.mxu0 %v2961
    %4203 = vmatprep.subr.bf16.mxu0 %v2970
    %4204 = vmatpush1.bf16.msra.mxu0 %v2969
    %4205 = vmatprep.subr.bf16.mxu0 %v2978
    %4206 = vmatpush1.bf16.msra.mxu0 %v2977
    %4207 = vmatprep.subr.bf16.mxu0 %v2986
    %4208 = vmatpush1.bf16.msra.mxu0 %v2985
    %4209 = vmatprep.subr.bf16.mxu0 %v2994
    %4210 = vmatpush1.bf16.msra.mxu0 %v2993
    %4211 = vmatprep.subr.bf16.mxu0 %v3002
    %4212 = vmatpush1.bf16.msra.mxu0 %v3001
    %4213 = vmatprep.subr.bf16.mxu0 %v3010
    %4214 = vmatpush1.bf16.msra.mxu0 %v3009
    %4215 = vmatprep.mubr.bf16.mxu0 %v528
    %4216 = vmatmul.mubr.bf16.gmra.mrb[0].mxu0 %v527
    %v4217 = vpop.f32.mrb[0].mxu0
    %v4218 = vadd.f32 %v4165, %v4217
    %v4219 = vpop.f32.mrb[0].mxu0
    %v4220 = vadd.f32 %v4167, %v4219
    %v4221 = vpop.f32.mrb[0].mxu0
    %v4222 = vadd.f32 %v4169, %v4221
    %v4223 = vpop.f32.mrb[0].mxu0
    %v4224 = vadd.f32 %v4171, %v4223
    %4225 = vmatprep.mubr.bf16.mxu0 %v536
    %4226 = vmatmul.mubr.bf16.gmra.mrb[0].mxu0 %v535
    %v4227 = vpop.f32.mrb[0].mxu0
    %v4228 = vadd.f32 %v4175, %v4227
    %v4229 = vpop.f32.mrb[0].mxu0
    %v4230 = vadd.f32 %v4177, %v4229
    %v4231 = vpop.f32.mrb[0].mxu0
    %v4232 = vadd.f32 %v4179, %v4231
    %v4233 = vpop.f32.mrb[0].mxu0
    %v4234 = vadd.f32 %v4181, %v4233
    %4235 = vdwg.mxu0
    %4236 = vmatprep.subr.bf16.mxu0 %v3018
    %4237 = vmatpush1.bf16.msra.mxu0 %v3017
    %4238 = vmatprep.subr.bf16.mxu0 %v3026
    %4239 = vmatpush1.bf16.msra.mxu0 %v3025
    %4240 = vmatprep.subr.bf16.mxu0 %v3034
    %4241 = vmatpush1.bf16.msra.mxu0 %v3033
    %4242 = vmatprep.subr.bf16.mxu0 %v3042
    %4243 = vmatpush1.bf16.msra.mxu0 %v3041
    %4244 = vmatprep.subr.bf16.mxu0 %v3050
    %4245 = vmatpush1.bf16.msra.mxu0 %v3049
    %4246 = vmatprep.subr.bf16.mxu0 %v3058
    %4247 = vmatpush1.bf16.msra.mxu0 %v3057
    %4248 = vmatprep.subr.bf16.mxu0 %v3066
    %4249 = vmatpush1.bf16.msra.mxu0 %v3065
    %4250 = vmatprep.subr.bf16.mxu0 %v3074
    %4251 = vmatpush1.bf16.msra.mxu0 %v3073
    %4252 = vmatprep.subr.bf16.mxu0 %v3082
    %4253 = vmatpush1.bf16.msra.mxu0 %v3081
    %4254 = vmatprep.subr.bf16.mxu0 %v3090
    %4255 = vmatpush1.bf16.msra.mxu0 %v3089
    %4256 = vmatprep.subr.bf16.mxu0 %v3098
    %4257 = vmatpush1.bf16.msra.mxu0 %v3097
    %4258 = vmatprep.subr.bf16.mxu0 %v3106
    %4259 = vmatpush1.bf16.msra.mxu0 %v3105
    %4260 = vmatprep.subr.bf16.mxu0 %v3114
    %4261 = vmatpush1.bf16.msra.mxu0 %v3113
    %4262 = vmatprep.subr.bf16.mxu0 %v3122
    %4263 = vmatpush1.bf16.msra.mxu0 %v3121
    %4264 = vmatprep.subr.bf16.mxu0 %v3130
    %4265 = vmatpush1.bf16.msra.mxu0 %v3129
    %4266 = vmatprep.subr.bf16.mxu0 %v3138
    %4267 = vmatpush1.bf16.msra.mxu0 %v3137
    %4268 = vmatprep.mubr.bf16.mxu0 %v530
    %4269 = vmatmul.mubr.bf16.gmra.mrb[0].mxu0 %v529
    %v4270 = vpop.f32.mrb[0].mxu0
    %v4271 = vadd.f32 %v4218, %v4270
    %v4272 = vpop.f32.mrb[0].mxu0
    %v4273 = vadd.f32 %v4220, %v4272
    %v4274 = vpop.f32.mrb[0].mxu0
    %v4275 = vadd.f32 %v4222, %v4274
    %v4276 = vpop.f32.mrb[0].mxu0
    %v4277 = vadd.f32 %v4224, %v4276
    %4278 = vmatprep.mubr.bf16.mxu0 %v538
    %4279 = vmatmul.mubr.bf16.gmra.mrb[0].mxu0 %v537
    %v4280 = vpop.f32.mrb[0].mxu0
    %v4281 = vadd.f32 %v4228, %v4280
    %v4282 = vpop.f32.mrb[0].mxu0
    %v4283 = vadd.f32 %v4230, %v4282
    %v4284 = vpop.f32.mrb[0].mxu0
    %v4285 = vadd.f32 %v4232, %v4284
    %v4286 = vpop.f32.mrb[0].mxu0
    %v4287 = vadd.f32 %v4234, %v4286
    %4288 = vdwg.mxu0
    %4289 = vmatprep.subr.bf16.mxu0 %v2636
    %4290 = vmatpush1.bf16.msra.mxu0 %v2635
    %4291 = vmatprep.subr.bf16.mxu0 %v2644
    %4292 = vmatpush1.bf16.msra.mxu0 %v2643
    %4293 = vmatprep.subr.bf16.mxu0 %v2652
    %4294 = vmatpush1.bf16.msra.mxu0 %v2651
    %4295 = vmatprep.subr.bf16.mxu0 %v2660
    %4296 = vmatpush1.bf16.msra.mxu0 %v2659
    %4297 = vmatprep.subr.bf16.mxu0 %v2668
    %4298 = vmatpush1.bf16.msra.mxu0 %v2667
    %4299 = vmatprep.subr.bf16.mxu0 %v2676
    %4300 = vmatpush1.bf16.msra.mxu0 %v2675
    %4301 = vmatprep.subr.bf16.mxu0 %v2684
    %4302 = vmatpush1.bf16.msra.mxu0 %v2683
    %4303 = vmatprep.subr.bf16.mxu0 %v2692
    %4304 = vmatpush1.bf16.msra.mxu0 %v2691
    %4305 = vmatprep.subr.bf16.mxu0 %v2700
    %4306 = vmatpush1.bf16.msra.mxu0 %v2699
    %4307 = vmatprep.subr.bf16.mxu0 %v2708
    %4308 = vmatpush1.bf16.msra.mxu0 %v2707
    %4309 = vmatprep.subr.bf16.mxu0 %v2716
    %4310 = vmatpush1.bf16.msra.mxu0 %v2715
    %4311 = vmatprep.subr.bf16.mxu0 %v2724
    %4312 = vmatpush1.bf16.msra.mxu0 %v2723
    %4313 = vmatprep.subr.bf16.mxu0 %v2732
    %4314 = vmatpush1.bf16.msra.mxu0 %v2731
    %4315 = vmatprep.subr.bf16.mxu0 %v2740
    %4316 = vmatpush1.bf16.msra.mxu0 %v2739
    %4317 = vmatprep.subr.bf16.mxu0 %v2748
    %4318 = vmatpush1.bf16.msra.mxu0 %v2747
    %4319 = vmatprep.subr.bf16.mxu0 %v2756
    %4320 = vmatpush1.bf16.msra.mxu0 %v2755
    %4321 = vmatprep.mubr.bf16.mxu0 %v524
    %4322 = vmatmul.mubr.bf16.gmra.mrb[0].mxu0 %v523
    %v4323 = vpop.f32.mrb[0].mxu0
    %v4324 = vadd.f32 %v1080, %v4323
    %v4325 = vpop.f32.mrb[0].mxu0
    %v4326 = vadd.f32 %v1084, %v4325
    %v4327 = vpop.f32.mrb[0].mxu0
    %v4328 = vadd.f32 %v1080, %v4327
    %v4329 = vpop.f32.mrb[0].mxu0
    %v4330 = vadd.f32 %v1084, %v4329
    %4331 = vmatprep.mubr.bf16.mxu0 %v532
    %4332 = vmatmul.mubr.bf16.gmra.mrb[0].mxu0 %v531
    %v4333 = vpop.f32.mrb[0].mxu0
    %v4334 = vadd.f32 %v1080, %v4333
    %v4335 = vpop.f32.mrb[0].mxu0
    %v4336 = vadd.f32 %v1084, %v4335
    %v4337 = vpop.f32.mrb[0].mxu0
    %v4338 = vadd.f32 %v1080, %v4337
    %v4339 = vpop.f32.mrb[0].mxu0
    %v4340 = vadd.f32 %v1084, %v4339
    %4341 = vdwg.mxu0
    %4342 = vmatprep.subr.bf16.mxu0 %v2764
    %4343 = vmatpush1.bf16.msra.mxu0 %v2763
    %4344 = vmatprep.subr.bf16.mxu0 %v2772
    %4345 = vmatpush1.bf16.msra.mxu0 %v2771
    %4346 = vmatprep.subr.bf16.mxu0 %v2780
    %4347 = vmatpush1.bf16.msra.mxu0 %v2779
    %4348 = vmatprep.subr.bf16.mxu0 %v2788
    %4349 = vmatpush1.bf16.msra.mxu0 %v2787
    %4350 = vmatprep.subr.bf16.mxu0 %v2796
    %4351 = vmatpush1.bf16.msra.mxu0 %v2795
    %4352 = vmatprep.subr.bf16.mxu0 %v2804
    %4353 = vmatpush1.bf16.msra.mxu0 %v2803
    %4354 = vmatprep.subr.bf16.mxu0 %v2812
    %4355 = vmatpush1.bf16.msra.mxu0 %v2811
    %4356 = vmatprep.subr.bf16.mxu0 %v2820
    %4357 = vmatpush1.bf16.msra.mxu0 %v2819
    %4358 = vmatprep.subr.bf16.mxu0 %v2828
    %4359 = vmatpush1.bf16.msra.mxu0 %v2827
    %4360 = vmatprep.subr.bf16.mxu0 %v2836
    %4361 = vmatpush1.bf16.msra.mxu0 %v2835
    %4362 = vmatprep.subr.bf16.mxu0 %v2844
    %4363 = vmatpush1.bf16.msra.mxu0 %v2843
    %4364 = vmatprep.subr.bf16.mxu0 %v2852
    %4365 = vmatpush1.bf16.msra.mxu0 %v2851
    %4366 = vmatprep.subr.bf16.mxu0 %v2860
    %4367 = vmatpush1.bf16.msra.mxu0 %v2859
    %4368 = vmatprep.subr.bf16.mxu0 %v2868
    %4369 = vmatpush1.bf16.msra.mxu0 %v2867
    %4370 = vmatprep.subr.bf16.mxu0 %v2876
    %4371 = vmatpush1.bf16.msra.mxu0 %v2875
    %4372 = vmatprep.subr.bf16.mxu0 %v2884
    %4373 = vmatpush1.bf16.msra.mxu0 %v2883
    %4374 = vmatprep.mubr.bf16.mxu0 %v526
    %4375 = vmatmul.mubr.bf16.gmra.mrb[0].mxu0 %v525
    %v4376 = vpop.f32.mrb[0].mxu0
    %v4377 = vadd.f32 %v4324, %v4376
    %v4378 = vpop.f32.mrb[0].mxu0
    %v4379 = vadd.f32 %v4326, %v4378
    %v4380 = vpop.f32.mrb[0].mxu0
    %v4381 = vadd.f32 %v4328, %v4380
    %v4382 = vpop.f32.mrb[0].mxu0
    %v4383 = vadd.f32 %v4330, %v4382
    %4384 = vmatprep.mubr.bf16.mxu0 %v534
    %4385 = vmatmul.mubr.bf16.gmra.mrb[0].mxu0 %v533
    %v4386 = vpop.f32.mrb[0].mxu0
    %v4387 = vadd.f32 %v4334, %v4386
    %v4388 = vpop.f32.mrb[0].mxu0
    %v4389 = vadd.f32 %v4336, %v4388
    %v4390 = vpop.f32.mrb[0].mxu0
    %v4391 = vadd.f32 %v4338, %v4390
    %v4392 = vpop.f32.mrb[0].mxu0
    %v4393 = vadd.f32 %v4340, %v4392
    %4394 = vdwg.mxu0
    %4395 = vmatprep.subr.bf16.mxu0 %v2892
    %4396 = vmatpush1.bf16.msra.mxu0 %v2891
    %4397 = vmatprep.subr.bf16.mxu0 %v2900
    %4398 = vmatpush1.bf16.msra.mxu0 %v2899
    %4399 = vmatprep.subr.bf16.mxu0 %v2908
    %4400 = vmatpush1.bf16.msra.mxu0 %v2907
    %4401 = vmatprep.subr.bf16.mxu0 %v2916
    %4402 = vmatpush1.bf16.msra.mxu0 %v2915
    %4403 = vmatprep.subr.bf16.mxu0 %v2924
    %4404 = vmatpush1.bf16.msra.mxu0 %v2923
    %4405 = vmatprep.subr.bf16.mxu0 %v2932
    %4406 = vmatpush1.bf16.msra.mxu0 %v2931
    %4407 = vmatprep.subr.bf16.mxu0 %v2940
    %4408 = vmatpush1.bf16.msra.mxu0 %v2939
    %4409 = vmatprep.subr.bf16.mxu0 %v2948
    %4410 = vmatpush1.bf16.msra.mxu0 %v2947
    %4411 = vmatprep.subr.bf16.mxu0 %v2956
    %4412 = vmatpush1.bf16.msra.mxu0 %v2955
    %4413 = vmatprep.subr.bf16.mxu0 %v2964
    %4414 = vmatpush1.bf16.msra.mxu0 %v2963
    %4415 = vmatprep.subr.bf16.mxu0 %v2972
    %4416 = vmatpush1.bf16.msra.mxu0 %v2971
    %4417 = vmatprep.subr.bf16.mxu0 %v2980
    %4418 = vmatpush1.bf16.msra.mxu0 %v2979
    %4419 = vmatprep.subr.bf16.mxu0 %v2988
    %4420 = vmatpush1.bf16.msra.mxu0 %v2987
    %4421 = vmatprep.subr.bf16.mxu0 %v2996
    %4422 = vmatpush1.bf16.msra.mxu0 %v2995
    %4423 = vmatprep.subr.bf16.mxu0 %v3004
    %4424 = vmatpush1.bf16.msra.mxu0 %v3003
    %4425 = vmatprep.subr.bf16.mxu0 %v3012
    %4426 = vmatpush1.bf16.msra.mxu0 %v3011
    %4427 = vmatprep.mubr.bf16.mxu0 %v528
    %4428 = vmatmul.mubr.bf16.gmra.mrb[0].mxu0 %v527
    %v4429 = vpop.f32.mrb[0].mxu0
    %v4430 = vadd.f32 %v4377, %v4429
    %v4431 = vpop.f32.mrb[0].mxu0
    %v4432 = vadd.f32 %v4379, %v4431
    %v4433 = vpop.f32.mrb[0].mxu0
    %v4434 = vadd.f32 %v4381, %v4433
    %v4435 = vpop.f32.mrb[0].mxu0
    %v4436 = vadd.f32 %v4383, %v4435
    %4437 = vmatprep.mubr.bf16.mxu0 %v536
    %4438 = vmatmul.mubr.bf16.gmra.mrb[0].mxu0 %v535
    %v4439 = vpop.f32.mrb[0].mxu0
    %v4440 = vadd.f32 %v4387, %v4439
    %v4441 = vpop.f32.mrb[0].mxu0
    %v4442 = vadd.f32 %v4389, %v4441
    %v4443 = vpop.f32.mrb[0].mxu0
    %v4444 = vadd.f32 %v4391, %v4443
    %v4445 = vpop.f32.mrb[0].mxu0
    %v4446 = vadd.f32 %v4393, %v4445
    %4447 = vdwg.mxu0
    %4448 = vmatprep.subr.bf16.mxu0 %v3020
    %4449 = vmatpush1.bf16.msra.mxu0 %v3019
    %4450 = vmatprep.subr.bf16.mxu0 %v3028
    %4451 = vmatpush1.bf16.msra.mxu0 %v3027
    %4452 = vmatprep.subr.bf16.mxu0 %v3036
    %4453 = vmatpush1.bf16.msra.mxu0 %v3035
    %4454 = vmatprep.subr.bf16.mxu0 %v3044
    %4455 = vmatpush1.bf16.msra.mxu0 %v3043
    %4456 = vmatprep.subr.bf16.mxu0 %v3052
    %4457 = vmatpush1.bf16.msra.mxu0 %v3051
    %4458 = vmatprep.subr.bf16.mxu0 %v3060
    %4459 = vmatpush1.bf16.msra.mxu0 %v3059
    %4460 = vmatprep.subr.bf16.mxu0 %v3068
    %4461 = vmatpush1.bf16.msra.mxu0 %v3067
    %4462 = vmatprep.subr.bf16.mxu0 %v3076
    %4463 = vmatpush1.bf16.msra.mxu0 %v3075
    %4464 = vmatprep.subr.bf16.mxu0 %v3084
    %4465 = vmatpush1.bf16.msra.mxu0 %v3083
    %4466 = vmatprep.subr.bf16.mxu0 %v3092
    %4467 = vmatpush1.bf16.msra.mxu0 %v3091
    %4468 = vmatprep.subr.bf16.mxu0 %v3100
    %4469 = vmatpush1.bf16.msra.mxu0 %v3099
    %4470 = vmatprep.subr.bf16.mxu0 %v3108
    %4471 = vmatpush1.bf16.msra.mxu0 %v3107
    %4472 = vmatprep.subr.bf16.mxu0 %v3116
    %4473 = vmatpush1.bf16.msra.mxu0 %v3115
    %4474 = vmatprep.subr.bf16.mxu0 %v3124
    %4475 = vmatpush1.bf16.msra.mxu0 %v3123
    %4476 = vmatprep.subr.bf16.mxu0 %v3132
    %4477 = vmatpush1.bf16.msra.mxu0 %v3131
    %4478 = vmatprep.subr.bf16.mxu0 %v3140
    %4479 = vmatpush1.bf16.msra.mxu0 %v3139
    %4480 = vmatprep.mubr.bf16.mxu0 %v530
    %4481 = vmatmul.mubr.bf16.gmra.mrb[0].mxu0 %v529
    %v4482 = vpop.f32.mrb[0].mxu0
    %v4483 = vadd.f32 %v4430, %v4482
    %v4484 = vpop.f32.mrb[0].mxu0
    %v4485 = vadd.f32 %v4432, %v4484
    %v4486 = vpop.f32.mrb[0].mxu0
    %v4487 = vadd.f32 %v4434, %v4486
    %v4488 = vpop.f32.mrb[0].mxu0
    %v4489 = vadd.f32 %v4436, %v4488
    %4490 = vmatprep.mubr.bf16.mxu0 %v538
    %4491 = vmatmul.mubr.bf16.gmra.mrb[0].mxu0 %v537
    %v4492 = vpop.f32.mrb[0].mxu0
    %v4493 = vadd.f32 %v4440, %v4492
    %v4494 = vpop.f32.mrb[0].mxu0
    %v4495 = vadd.f32 %v4442, %v4494
    %v4496 = vpop.f32.mrb[0].mxu0
    %v4497 = vadd.f32 %v4444, %v4496
    %v4498 = vpop.f32.mrb[0].mxu0
    %v4499 = vadd.f32 %v4446, %v4498
    %4500 = vdwg.mxu0
    %vm4501 = vcmp.gt.f32.partialorder %v3847, 0.0
    %vm4502 = vcmp.gt.f32.partialorder %v3849, 0.0
    %vm4503 = vcmp.gt.f32.partialorder %v4059, 0.0
    %vm4504 = vcmp.gt.f32.partialorder %v4061, 0.0
    %vm4505 = vcmp.gt.f32.partialorder %v4271, 0.0
    %vm4506 = vcmp.gt.f32.partialorder %v4273, 0.0
    %vm4507 = vcmp.gt.f32.partialorder %v4483, 0.0
    %vm4508 = vcmp.gt.f32.partialorder %v4485, 0.0
    %vm4509 = vcmp.gt.f32.partialorder %v3851, 0.0
    %vm4510 = vcmp.gt.f32.partialorder %v3853, 0.0
    %vm4511 = vcmp.gt.f32.partialorder %v4063, 0.0
    %vm4512 = vcmp.gt.f32.partialorder %v4065, 0.0
    %vm4513 = vcmp.gt.f32.partialorder %v4275, 0.0
    %vm4514 = vcmp.gt.f32.partialorder %v4277, 0.0
    %vm4515 = vcmp.gt.f32.partialorder %v4487, 0.0
    %vm4516 = vcmp.gt.f32.partialorder %v4489, 0.0
    %vm4517 = vcmp.gt.f32.partialorder %v3857, 0.0
    %vm4518 = vcmp.gt.f32.partialorder %v3859, 0.0
    %vm4519 = vcmp.gt.f32.partialorder %v4069, 0.0
    %vm4520 = vcmp.gt.f32.partialorder %v4071, 0.0
    %vm4521 = vcmp.gt.f32.partialorder %v4281, 0.0
    %vm4522 = vcmp.gt.f32.partialorder %v4283, 0.0
    %vm4523 = vcmp.gt.f32.partialorder %v4493, 0.0
    %vm4524 = vcmp.gt.f32.partialorder %v4495, 0.0
    %vm4525 = vcmp.gt.f32.partialorder %v3861, 0.0
    %vm4526 = vcmp.gt.f32.partialorder %v3863, 0.0
    %vm4527 = vcmp.gt.f32.partialorder %v4073, 0.0
    %vm4528 = vcmp.gt.f32.partialorder %v4075, 0.0
    %vm4529 = vcmp.gt.f32.partialorder %v4285, 0.0
    %vm4530 = vcmp.gt.f32.partialorder %v4287, 0.0
    %vm4531 = vcmp.gt.f32.partialorder %v4497, 0.0
    %vm4532 = vcmp.gt.f32.partialorder %v4499, 0.0
    %v4533 = vmul.f32 %v3847, 0.01
    %v4534 = vmul.f32 %v3849, 0.01
    %v4535 = vmul.f32 %v4059, 0.01
    %v4536 = vmul.f32 %v4061, 0.01
    %v4537 = vmul.f32 %v4271, 0.01
    %v4538 = vmul.f32 %v4273, 0.01
    %v4539 = vmul.f32 %v4483, 0.01
    %v4540 = vmul.f32 %v4485, 0.01
    %v4541 = vmul.f32 %v3851, 0.01
    %v4542 = vmul.f32 %v3853, 0.01
    %v4543 = vmul.f32 %v4063, 0.01
    %v4544 = vmul.f32 %v4065, 0.01
    %v4545 = vmul.f32 %v4275, 0.01
    %v4546 = vmul.f32 %v4277, 0.01
    %v4547 = vmul.f32 %v4487, 0.01
    %v4548 = vmul.f32 %v4489, 0.01
    %v4549 = vmul.f32 %v3857, 0.01
    %v4550 = vmul.f32 %v3859, 0.01
    %v4551 = vmul.f32 %v4069, 0.01
    %v4552 = vmul.f32 %v4071, 0.01
    %v4553 = vmul.f32 %v4281, 0.01
    %v4554 = vmul.f32 %v4283, 0.01
    %v4555 = vmul.f32 %v4493, 0.01
    %v4556 = vmul.f32 %v4495, 0.01
    %v4557 = vmul.f32 %v3861, 0.01
    %v4558 = vmul.f32 %v3863, 0.01
    %v4559 = vmul.f32 %v4073, 0.01
    %v4560 = vmul.f32 %v4075, 0.01
    %v4561 = vmul.f32 %v4285, 0.01
    %v4562 = vmul.f32 %v4287, 0.01
    %v4563 = vmul.f32 %v4497, 0.01
    %v4564 = vmul.f32 %v4499, 0.01
    %v4565 = vsel %vm4501, %v3847, %v4533
    %v4566 = vsel %vm4502, %v3849, %v4534
    %v4567 = vsel %vm4503, %v4059, %v4535
    %v4568 = vsel %vm4504, %v4061, %v4536
    %v4569 = vsel %vm4505, %v4271, %v4537
    %v4570 = vsel %vm4506, %v4273, %v4538
    %v4571 = vsel %vm4507, %v4483, %v4539
    %v4572 = vsel %vm4508, %v4485, %v4540
    %v4573 = vsel %vm4509, %v3851, %v4541
    %v4574 = vsel %vm4510, %v3853, %v4542
    %v4575 = vsel %vm4511, %v4063, %v4543
    %v4576 = vsel %vm4512, %v4065, %v4544
    %v4577 = vsel %vm4513, %v4275, %v4545
    %v4578 = vsel %vm4514, %v4277, %v4546
    %v4579 = vsel %vm4515, %v4487, %v4547
    %v4580 = vsel %vm4516, %v4489, %v4548
    %v4581 = vsel %vm4517, %v3857, %v4549
    %v4582 = vsel %vm4518, %v3859, %v4550
    %v4583 = vsel %vm4519, %v4069, %v4551
    %v4584 = vsel %vm4520, %v4071, %v4552
    %v4585 = vsel %vm4521, %v4281, %v4553
    %v4586 = vsel %vm4522, %v4283, %v4554
    %v4587 = vsel %vm4523, %v4493, %v4555
    %v4588 = vsel %vm4524, %v4495, %v4556
    %v4589 = vsel %vm4525, %v3861, %v4557
    %v4590 = vsel %vm4526, %v3863, %v4558
    %v4591 = vsel %vm4527, %v4073, %v4559
    %v4592 = vsel %vm4528, %v4075, %v4560
    %v4593 = vsel %vm4529, %v4285, %v4561
    %v4594 = vsel %vm4530, %v4287, %v4562
    %v4595 = vsel %vm4531, %v4497, %v4563
    %v4596 = vsel %vm4532, %v4499, %v4564
    %v4597 = vpack.c.bf16 %v4573, %v4565
    %v4598 = vpack.c.bf16 %v4574, %v4566
    %v4599 = vpack.c.bf16 %v4575, %v4567
    %v4600 = vpack.c.bf16 %v4576, %v4568
    %v4601 = vpack.c.bf16 %v4577, %v4569
    %v4602 = vpack.c.bf16 %v4578, %v4570
    %v4603 = vpack.c.bf16 %v4579, %v4571
    %v4604 = vpack.c.bf16 %v4580, %v4572
    %v4605 = vpack.c.bf16 %v4589, %v4581
    %v4606 = vpack.c.bf16 %v4590, %v4582
    %v4607 = vpack.c.bf16 %v4591, %v4583
    %v4608 = vpack.c.bf16 %v4592, %v4584
    %v4609 = vpack.c.bf16 %v4593, %v4585
    %v4610 = vpack.c.bf16 %v4594, %v4586
    %v4611 = vpack.c.bf16 %v4595, %v4587
    %v4612 = vpack.c.bf16 %v4596, %v4588
    %v4613 = vld [vmem:[#allocation10] sm:$0xf]
    %v4614 = vld [vmem:[#allocation10 + $0x4] sm:$0xf]
    %v4615 = vld [vmem:[#allocation10 + $0x8] sm:$0xf]
    %v4616 = vld [vmem:[#allocation10 + $0xc] sm:$0xf]
    %v4617 = vld [vmem:[#allocation10 + $0x10] sm:$0xf]
    %v4618 = vld [vmem:[#allocation10 + $0x14] sm:$0xf]
    %v4619 = vld [vmem:[#allocation10 + $0x18] sm:$0xf]
    %v4620 = vld [vmem:[#allocation10 + $0x1c] sm:$0xf]
    %v4621 = vld [vmem:[#allocation10 + $0x20] sm:$0xf]
    %v4622 = vld [vmem:[#allocation10 + $0x24] sm:$0xf]
    %v4623 = vld [vmem:[#allocation10 + $0x28] sm:$0xf]
    %v4624 = vld [vmem:[#allocation10 + $0x2c] sm:$0xf]
    %v4625 = vld [vmem:[#allocation10 + $0x30] sm:$0xf]
    %v4626 = vld [vmem:[#allocation10 + $0x34] sm:$0xf]
    %v4627 = vld [vmem:[#allocation10 + $0x38] sm:$0xf]
    %v4628 = vld [vmem:[#allocation10 + $0x3c] sm:$0xf]
    %v4629 = vld [vmem:[#allocation10 + $0x40] sm:$0xf]
    %v4630 = vld [vmem:[#allocation10 + $0x44] sm:$0xf]
    %v4631 = vld [vmem:[#allocation10 + $0x48] sm:$0xf]
    %v4632 = vld [vmem:[#allocation10 + $0x4c] sm:$0xf]
    %v4633 = vld [vmem:[#allocation10 + $0x50] sm:$0xf]
    %v4634 = vld [vmem:[#allocation10 + $0x54] sm:$0xf]
    %v4635 = vld [vmem:[#allocation10 + $0x58] sm:$0xf]
    %v4636 = vld [vmem:[#allocation10 + $0x5c] sm:$0xf]
    %v4637 = vld [vmem:[#allocation10 + $0x60] sm:$0xf]
    %v4638 = vld [vmem:[#allocation10 + $0x64] sm:$0xf]
    %v4639 = vld [vmem:[#allocation10 + $0x68] sm:$0xf]
    %v4640 = vld [vmem:[#allocation10 + $0x6c] sm:$0xf]
    %v4641 = vld [vmem:[#allocation10 + $0x70] sm:$0xf]
    %v4642 = vld [vmem:[#allocation10 + $0x74] sm:$0xf]
    %v4643 = vld [vmem:[#allocation10 + $0x78] sm:$0xf]
    %v4644 = vld [vmem:[#allocation10 + $0x7c] sm:$0xf]
    %v4645 = vld [vmem:[#allocation10 + $0x80] sm:$0xf]
    %v4646 = vld [vmem:[#allocation10 + $0x84] sm:$0xf]
    %v4647 = vld [vmem:[#allocation10 + $0x88] sm:$0xf]
    %v4648 = vld [vmem:[#allocation10 + $0x8c] sm:$0xf]
    %v4649 = vld [vmem:[#allocation10 + $0x90] sm:$0xf]
    %v4650 = vld [vmem:[#allocation10 + $0x94] sm:$0xf]
    %v4651 = vld [vmem:[#allocation10 + $0x98] sm:$0xf]
    %v4652 = vld [vmem:[#allocation10 + $0x9c] sm:$0xf]
    %v4653 = vld [vmem:[#allocation10 + $0xa0] sm:$0xf]
    %v4654 = vld [vmem:[#allocation10 + $0xa4] sm:$0xf]
    %v4655 = vld [vmem:[#allocation10 + $0xa8] sm:$0xf]
    %v4656 = vld [vmem:[#allocation10 + $0xac] sm:$0xf]
    %v4657 = vld [vmem:[#allocation10 + $0xb0] sm:$0xf]
    %v4658 = vld [vmem:[#allocation10 + $0xb4] sm:$0xf]
    %v4659 = vld [vmem:[#allocation10 + $0xb8] sm:$0xf]
    %v4660 = vld [vmem:[#allocation10 + $0xbc] sm:$0xf]
    %v4661 = vld [vmem:[#allocation10 + $0xc0] sm:$0xf]
    %v4662 = vld [vmem:[#allocation10 + $0xc4] sm:$0xf]
    %v4663 = vld [vmem:[#allocation10 + $0xc8] sm:$0xf]
    %v4664 = vld [vmem:[#allocation10 + $0xcc] sm:$0xf]
    %v4665 = vld [vmem:[#allocation10 + $0xd0] sm:$0xf]
    %v4666 = vld [vmem:[#allocation10 + $0xd4] sm:$0xf]
    %v4667 = vld [vmem:[#allocation10 + $0xd8] sm:$0xf]
    %v4668 = vld [vmem:[#allocation10 + $0xdc] sm:$0xf]
    %v4669 = vld [vmem:[#allocation10 + $0xe0] sm:$0xf]
    %v4670 = vld [vmem:[#allocation10 + $0xe4] sm:$0xf]
    %v4671 = vld [vmem:[#allocation10 + $0xe8] sm:$0xf]
    %v4672 = vld [vmem:[#allocation10 + $0xec] sm:$0xf]
    %v4673 = vld [vmem:[#allocation10 + $0xf0] sm:$0xf]
    %v4674 = vld [vmem:[#allocation10 + $0xf4] sm:$0xf]
    %v4675 = vld [vmem:[#allocation10 + $0xf8] sm:$0xf]
    %v4676 = vld [vmem:[#allocation10 + $0xfc] sm:$0xf]
    %v4677 = vld [vmem:[#allocation10 + $0x100] sm:$0xf]
    %v4678 = vld [vmem:[#allocation10 + $0x104] sm:$0xf]
    %v4679 = vld [vmem:[#allocation10 + $0x108] sm:$0xf]
    %v4680 = vld [vmem:[#allocation10 + $0x10c] sm:$0xf]
    %v4681 = vld [vmem:[#allocation10 + $0x110] sm:$0xf]
    %v4682 = vld [vmem:[#allocation10 + $0x114] sm:$0xf]
    %v4683 = vld [vmem:[#allocation10 + $0x118] sm:$0xf]
    %v4684 = vld [vmem:[#allocation10 + $0x11c] sm:$0xf]
    %v4685 = vld [vmem:[#allocation10 + $0x120] sm:$0xf]
    %v4686 = vld [vmem:[#allocation10 + $0x124] sm:$0xf]
    %v4687 = vld [vmem:[#allocation10 + $0x128] sm:$0xf]
    %v4688 = vld [vmem:[#allocation10 + $0x12c] sm:$0xf]
    %v4689 = vld [vmem:[#allocation10 + $0x130] sm:$0xf]
    %v4690 = vld [vmem:[#allocation10 + $0x134] sm:$0xf]
    %v4691 = vld [vmem:[#allocation10 + $0x138] sm:$0xf]
    %v4692 = vld [vmem:[#allocation10 + $0x13c] sm:$0xf]
    %v4693 = vld [vmem:[#allocation10 + $0x140] sm:$0xf]
    %v4694 = vld [vmem:[#allocation10 + $0x144] sm:$0xf]
    %v4695 = vld [vmem:[#allocation10 + $0x148] sm:$0xf]
    %v4696 = vld [vmem:[#allocation10 + $0x14c] sm:$0xf]
    %v4697 = vld [vmem:[#allocation10 + $0x150] sm:$0xf]
    %v4698 = vld [vmem:[#allocation10 + $0x154] sm:$0xf]
    %v4699 = vld [vmem:[#allocation10 + $0x158] sm:$0xf]
    %v4700 = vld [vmem:[#allocation10 + $0x15c] sm:$0xf]
    %v4701 = vld [vmem:[#allocation10 + $0x160] sm:$0xf]
    %v4702 = vld [vmem:[#allocation10 + $0x164] sm:$0xf]
    %v4703 = vld [vmem:[#allocation10 + $0x168] sm:$0xf]
    %v4704 = vld [vmem:[#allocation10 + $0x16c] sm:$0xf]
    %v4705 = vld [vmem:[#allocation10 + $0x170] sm:$0xf]
    %v4706 = vld [vmem:[#allocation10 + $0x174] sm:$0xf]
    %v4707 = vld [vmem:[#allocation10 + $0x178] sm:$0xf]
    %v4708 = vld [vmem:[#allocation10 + $0x17c] sm:$0xf]
    %v4709 = vld [vmem:[#allocation10 + $0x180] sm:$0xf]
    %v4710 = vld [vmem:[#allocation10 + $0x184] sm:$0xf]
    %v4711 = vld [vmem:[#allocation10 + $0x188] sm:$0xf]
    %v4712 = vld [vmem:[#allocation10 + $0x18c] sm:$0xf]
    %v4713 = vld [vmem:[#allocation10 + $0x190] sm:$0xf]
    %v4714 = vld [vmem:[#allocation10 + $0x194] sm:$0xf]
    %v4715 = vld [vmem:[#allocation10 + $0x198] sm:$0xf]
    %v4716 = vld [vmem:[#allocation10 + $0x19c] sm:$0xf]
    %v4717 = vld [vmem:[#allocation10 + $0x1a0] sm:$0xf]
    %v4718 = vld [vmem:[#allocation10 + $0x1a4] sm:$0xf]
    %v4719 = vld [vmem:[#allocation10 + $0x1a8] sm:$0xf]
    %v4720 = vld [vmem:[#allocation10 + $0x1ac] sm:$0xf]
    %v4721 = vld [vmem:[#allocation10 + $0x1b0] sm:$0xf]
    %v4722 = vld [vmem:[#allocation10 + $0x1b4] sm:$0xf]
    %v4723 = vld [vmem:[#allocation10 + $0x1b8] sm:$0xf]
    %v4724 = vld [vmem:[#allocation10 + $0x1bc] sm:$0xf]
    %v4725 = vld [vmem:[#allocation10 + $0x1c0] sm:$0xf]
    %v4726 = vld [vmem:[#allocation10 + $0x1c4] sm:$0xf]
    %v4727 = vld [vmem:[#allocation10 + $0x1c8] sm:$0xf]
    %v4728 = vld [vmem:[#allocation10 + $0x1cc] sm:$0xf]
    %v4729 = vld [vmem:[#allocation10 + $0x1d0] sm:$0xf]
    %v4730 = vld [vmem:[#allocation10 + $0x1d4] sm:$0xf]
    %v4731 = vld [vmem:[#allocation10 + $0x1d8] sm:$0xf]
    %v4732 = vld [vmem:[#allocation10 + $0x1dc] sm:$0xf]
    %v4733 = vld [vmem:[#allocation10 + $0x1e0] sm:$0xf]
    %v4734 = vld [vmem:[#allocation10 + $0x1e4] sm:$0xf]
    %v4735 = vld [vmem:[#allocation10 + $0x1e8] sm:$0xf]
    %v4736 = vld [vmem:[#allocation10 + $0x1ec] sm:$0xf]
    %v4737 = vld [vmem:[#allocation10 + $0x1f0] sm:$0xf]
    %v4738 = vld [vmem:[#allocation10 + $0x1f4] sm:$0xf]
    %v4739 = vld [vmem:[#allocation10 + $0x1f8] sm:$0xf]
    %v4740 = vld [vmem:[#allocation10 + $0x1fc] sm:$0xf]
    %v4741 = vld [vmem:[#allocation11] sm:$0x1]
    %v4743 = vlaneseq
    %v4744 = vshrl.u32 %v4743, 7
    %v4745 = vsub.s32 0, %v4744
    %v4746 = vrot.slane %v4741, %v4745
    %v4876 = vunpack.c.l.b16 %v4613
    %v4877 = vunpack.c.l.b16 %v4614
    %v4878 = vunpack.c.l.b16 %v4615
    %v4879 = vunpack.c.l.b16 %v4616
    %v4880 = vunpack.c.l.b16 %v4617
    %v4881 = vunpack.c.l.b16 %v4618
    %v4882 = vunpack.c.l.b16 %v4619
    %v4883 = vunpack.c.l.b16 %v4620
    %v4884 = vunpack.c.l.b16 %v4621
    %v4885 = vunpack.c.l.b16 %v4622
    %v4886 = vunpack.c.l.b16 %v4623
    %v4887 = vunpack.c.l.b16 %v4624
    %v4888 = vunpack.c.l.b16 %v4625
    %v4889 = vunpack.c.l.b16 %v4626
    %v4890 = vunpack.c.l.b16 %v4627
    %v4891 = vunpack.c.l.b16 %v4628
    %v4892 = vunpack.c.l.b16 %v4629
    %v4893 = vunpack.c.l.b16 %v4630
    %v4894 = vunpack.c.l.b16 %v4631
    %v4895 = vunpack.c.l.b16 %v4632
    %v4896 = vunpack.c.l.b16 %v4633
    %v4897 = vunpack.c.l.b16 %v4634
    %v4898 = vunpack.c.l.b16 %v4635
    %v4899 = vunpack.c.l.b16 %v4636
    %v4900 = vunpack.c.l.b16 %v4637
    %v4901 = vunpack.c.l.b16 %v4638
    %v4902 = vunpack.c.l.b16 %v4639
    %v4903 = vunpack.c.l.b16 %v4640
    %v4904 = vunpack.c.l.b16 %v4641
    %v4905 = vunpack.c.l.b16 %v4642
    %v4906 = vunpack.c.l.b16 %v4643
    %v4907 = vunpack.c.l.b16 %v4644
    %v4908 = vunpack.c.l.b16 %v4645
    %v4909 = vunpack.c.l.b16 %v4646
    %v4910 = vunpack.c.l.b16 %v4647
    %v4911 = vunpack.c.l.b16 %v4648
    %v4912 = vunpack.c.l.b16 %v4649
    %v4913 = vunpack.c.l.b16 %v4650
    %v4914 = vunpack.c.l.b16 %v4651
    %v4915 = vunpack.c.l.b16 %v4652
    %v4916 = vunpack.c.l.b16 %v4653
    %v4917 = vunpack.c.l.b16 %v4654
    %v4918 = vunpack.c.l.b16 %v4655
    %v4919 = vunpack.c.l.b16 %v4656
    %v4920 = vunpack.c.l.b16 %v4657
    %v4921 = vunpack.c.l.b16 %v4658
    %v4922 = vunpack.c.l.b16 %v4659
    %v4923 = vunpack.c.l.b16 %v4660
    %v4924 = vunpack.c.l.b16 %v4661
    %v4925 = vunpack.c.l.b16 %v4662
    %v4926 = vunpack.c.l.b16 %v4663
    %v4927 = vunpack.c.l.b16 %v4664
    %v4928 = vunpack.c.l.b16 %v4665
    %v4929 = vunpack.c.l.b16 %v4666
    %v4930 = vunpack.c.l.b16 %v4667
    %v4931 = vunpack.c.l.b16 %v4668
    %v4932 = vunpack.c.l.b16 %v4669
    %v4933 = vunpack.c.l.b16 %v4670
    %v4934 = vunpack.c.l.b16 %v4671
    %v4935 = vunpack.c.l.b16 %v4672
    %v4936 = vunpack.c.l.b16 %v4673
    %v4937 = vunpack.c.l.b16 %v4674
    %v4938 = vunpack.c.l.b16 %v4675
    %v4939 = vunpack.c.l.b16 %v4676
    %v4940 = vunpack.c.l.b16 %v4677
    %v4941 = vunpack.c.l.b16 %v4678
    %v4942 = vunpack.c.l.b16 %v4679
    %v4943 = vunpack.c.l.b16 %v4680
    %v4944 = vunpack.c.l.b16 %v4681
    %v4945 = vunpack.c.l.b16 %v4682
    %v4946 = vunpack.c.l.b16 %v4683
    %v4947 = vunpack.c.l.b16 %v4684
    %v4948 = vunpack.c.l.b16 %v4685
    %v4949 = vunpack.c.l.b16 %v4686
    %v4950 = vunpack.c.l.b16 %v4687
    %v4951 = vunpack.c.l.b16 %v4688
    %v4952 = vunpack.c.l.b16 %v4689
    %v4953 = vunpack.c.l.b16 %v4690
    %v4954 = vunpack.c.l.b16 %v4691
    %v4955 = vunpack.c.l.b16 %v4692
    %v4956 = vunpack.c.l.b16 %v4693
    %v4957 = vunpack.c.l.b16 %v4694
    %v4958 = vunpack.c.l.b16 %v4695
    %v4959 = vunpack.c.l.b16 %v4696
    %v4960 = vunpack.c.l.b16 %v4697
    %v4961 = vunpack.c.l.b16 %v4698
    %v4962 = vunpack.c.l.b16 %v4699
    %v4963 = vunpack.c.l.b16 %v4700
    %v4964 = vunpack.c.l.b16 %v4701
    %v4965 = vunpack.c.l.b16 %v4702
    %v4966 = vunpack.c.l.b16 %v4703
    %v4967 = vunpack.c.l.b16 %v4704
    %v4968 = vunpack.c.l.b16 %v4705
    %v4969 = vunpack.c.l.b16 %v4706
    %v4970 = vunpack.c.l.b16 %v4707
    %v4971 = vunpack.c.l.b16 %v4708
    %v4972 = vunpack.c.l.b16 %v4709
    %v4973 = vunpack.c.l.b16 %v4710
    %v4974 = vunpack.c.l.b16 %v4711
    %v4975 = vunpack.c.l.b16 %v4712
    %v4976 = vunpack.c.l.b16 %v4713
    %v4977 = vunpack.c.l.b16 %v4714
    %v4978 = vunpack.c.l.b16 %v4715
    %v4979 = vunpack.c.l.b16 %v4716
    %v4980 = vunpack.c.l.b16 %v4717
    %v4981 = vunpack.c.l.b16 %v4718
    %v4982 = vunpack.c.l.b16 %v4719
    %v4983 = vunpack.c.l.b16 %v4720
    %v4984 = vunpack.c.l.b16 %v4721
    %v4985 = vunpack.c.l.b16 %v4722
    %v4986 = vunpack.c.l.b16 %v4723
    %v4987 = vunpack.c.l.b16 %v4724
    %v4988 = vunpack.c.l.b16 %v4725
    %v4989 = vunpack.c.l.b16 %v4726
    %v4990 = vunpack.c.l.b16 %v4727
    %v4991 = vunpack.c.l.b16 %v4728
    %v4992 = vunpack.c.l.b16 %v4729
    %v4993 = vunpack.c.l.b16 %v4730
    %v4994 = vunpack.c.l.b16 %v4731
    %v4995 = vunpack.c.l.b16 %v4732
    %v4996 = vunpack.c.l.b16 %v4733
    %v4997 = vunpack.c.l.b16 %v4734
    %v4998 = vunpack.c.l.b16 %v4735
    %v4999 = vunpack.c.l.b16 %v4736
    %v5000 = vunpack.c.l.b16 %v4737
    %v5001 = vunpack.c.l.b16 %v4738
    %v5002 = vunpack.c.l.b16 %v4739
    %v5003 = vunpack.c.l.b16 %v4740
    %v5004 = vpack.c.b16 %v4877, %v4876
    %v5005 = vpack.c.b16 %v4879, %v4878
    %v5006 = vpack.c.b16 %v4881, %v4880
    %v5007 = vpack.c.b16 %v4883, %v4882
    %v5008 = vpack.c.b16 %v4885, %v4884
    %v5009 = vpack.c.b16 %v4887, %v4886
    %v5010 = vpack.c.b16 %v4889, %v4888
    %v5011 = vpack.c.b16 %v4891, %v4890
    %v5012 = vpack.c.b16 %v4893, %v4892
    %v5013 = vpack.c.b16 %v4895, %v4894
    %v5014 = vpack.c.b16 %v4897, %v4896
    %v5015 = vpack.c.b16 %v4899, %v4898
    %v5016 = vpack.c.b16 %v4901, %v4900
    %v5017 = vpack.c.b16 %v4903, %v4902
    %v5018 = vpack.c.b16 %v4905, %v4904
    %v5019 = vpack.c.b16 %v4907, %v4906
    %v5020 = vpack.c.b16 %v4909, %v4908
    %v5021 = vpack.c.b16 %v4911, %v4910
    %v5022 = vpack.c.b16 %v4913, %v4912
    %v5023 = vpack.c.b16 %v4915, %v4914
    %v5024 = vpack.c.b16 %v4917, %v4916
    %v5025 = vpack.c.b16 %v4919, %v4918
    %v5026 = vpack.c.b16 %v4921, %v4920
    %v5027 = vpack.c.b16 %v4923, %v4922
    %v5028 = vpack.c.b16 %v4925, %v4924
    %v5029 = vpack.c.b16 %v4927, %v4926
    %v5030 = vpack.c.b16 %v4929, %v4928
    %v5031 = vpack.c.b16 %v4931, %v4930
    %v5032 = vpack.c.b16 %v4933, %v4932
    %v5033 = vpack.c.b16 %v4935, %v4934
    %v5034 = vpack.c.b16 %v4937, %v4936
    %v5035 = vpack.c.b16 %v4939, %v4938
    %v5036 = vpack.c.b16 %v4941, %v4940
    %v5037 = vpack.c.b16 %v4943, %v4942
    %v5038 = vpack.c.b16 %v4945, %v4944
    %v5039 = vpack.c.b16 %v4947, %v4946
    %v5040 = vpack.c.b16 %v4949, %v4948
    %v5041 = vpack.c.b16 %v4951, %v4950
    %v5042 = vpack.c.b16 %v4953, %v4952
    %v5043 = vpack.c.b16 %v4955, %v4954
    %v5044 = vpack.c.b16 %v4957, %v4956
    %v5045 = vpack.c.b16 %v4959, %v4958
    %v5046 = vpack.c.b16 %v4961, %v4960
    %v5047 = vpack.c.b16 %v4963, %v4962
    %v5048 = vpack.c.b16 %v4965, %v4964
    %v5049 = vpack.c.b16 %v4967, %v4966
    %v5050 = vpack.c.b16 %v4969, %v4968
    %v5051 = vpack.c.b16 %v4971, %v4970
    %v5052 = vpack.c.b16 %v4973, %v4972
    %v5053 = vpack.c.b16 %v4975, %v4974
    %v5054 = vpack.c.b16 %v4977, %v4976
    %v5055 = vpack.c.b16 %v4979, %v4978
    %v5056 = vpack.c.b16 %v4981, %v4980
    %v5057 = vpack.c.b16 %v4983, %v4982
    %v5058 = vpack.c.b16 %v4985, %v4984
    %v5059 = vpack.c.b16 %v4987, %v4986
    %v5060 = vpack.c.b16 %v4989, %v4988
    %v5061 = vpack.c.b16 %v4991, %v4990
    %v5062 = vpack.c.b16 %v4993, %v4992
    %v5063 = vpack.c.b16 %v4995, %v4994
    %v5064 = vpack.c.b16 %v4997, %v4996
    %v5065 = vpack.c.b16 %v4999, %v4998
    %v5066 = vpack.c.b16 %v5001, %v5000
    %v5067 = vpack.c.b16 %v5003, %v5002
    %5132 = vmatprep.subr.bf16.mxu0 0
    %5133 = vmatpush1.bf16.msra.mxu0 %v5004
    %5134 = vmatprep.subr.bf16.mxu0 0
    %5135 = vmatpush1.bf16.msra.mxu0 %v5005
    %5136 = vmatprep.subr.bf16.mxu0 0
    %5137 = vmatpush1.bf16.msra.mxu0 %v5006
    %5138 = vmatprep.subr.bf16.mxu0 0
    %5139 = vmatpush1.bf16.msra.mxu0 %v5007
    %5140 = vmatprep.subr.bf16.mxu0 0
    %5141 = vmatpush1.bf16.msra.mxu0 %v5008
    %5142 = vmatprep.subr.bf16.mxu0 0
    %5143 = vmatpush1.bf16.msra.mxu0 %v5009
    %5144 = vmatprep.subr.bf16.mxu0 0
    %5145 = vmatpush1.bf16.msra.mxu0 %v5010
    %5146 = vmatprep.subr.bf16.mxu0 0
    %5147 = vmatpush1.bf16.msra.mxu0 %v5011
    %5148 = vmatprep.subr.bf16.mxu0 0
    %5149 = vmatpush1.bf16.msra.mxu0 %v5012
    %5150 = vmatprep.subr.bf16.mxu0 0
    %5151 = vmatpush1.bf16.msra.mxu0 %v5013
    %5152 = vmatprep.subr.bf16.mxu0 0
    %5153 = vmatpush1.bf16.msra.mxu0 %v5014
    %5154 = vmatprep.subr.bf16.mxu0 0
    %5155 = vmatpush1.bf16.msra.mxu0 %v5015
    %5156 = vmatprep.subr.bf16.mxu0 0
    %5157 = vmatpush1.bf16.msra.mxu0 %v5016
    %5158 = vmatprep.subr.bf16.mxu0 0
    %5159 = vmatpush1.bf16.msra.mxu0 %v5017
    %5160 = vmatprep.subr.bf16.mxu0 0
    %5161 = vmatpush1.bf16.msra.mxu0 %v5018
    %5162 = vmatprep.subr.bf16.mxu0 0
    %5163 = vmatpush1.bf16.msra.mxu0 %v5019
    %5164 = vmatprep.mubr.bf16.mxu0 %v4598
    %5165 = vmatmul.mubr.bf16.gmra.mrb[0].mxu0 %v4597
    %v5166 = vpop.f32.mrb[0].mxu0
    %v5167 = vadd.f32 %v4746, %v5166
    %v5168 = vpop.f32.mrb[0].mxu0
    %v5169 = vpop.f32.mrb[0].mxu0
    %v5170 = vadd.f32 %v4746, %v5169
    %v5171 = vpop.f32.mrb[0].mxu0
    %5172 = vmatprep.mubr.bf16.mxu0 %v4606
    %5173 = vmatmul.mubr.bf16.gmra.mrb[0].mxu0 %v4605
    %v5174 = vpop.f32.mrb[0].mxu0
    %v5175 = vadd.f32 %v4746, %v5174
    %v5176 = vpop.f32.mrb[0].mxu0
    %v5177 = vpop.f32.mrb[0].mxu0
    %v5178 = vadd.f32 %v4746, %v5177
    %v5179 = vpop.f32.mrb[0].mxu0
    %5180 = vdwg.mxu0
    %5181 = vmatprep.subr.bf16.mxu0 0
    %5182 = vmatpush1.bf16.msra.mxu0 %v5020
    %5183 = vmatprep.subr.bf16.mxu0 0
    %5184 = vmatpush1.bf16.msra.mxu0 %v5021
    %5185 = vmatprep.subr.bf16.mxu0 0
    %5186 = vmatpush1.bf16.msra.mxu0 %v5022
    %5187 = vmatprep.subr.bf16.mxu0 0
    %5188 = vmatpush1.bf16.msra.mxu0 %v5023
    %5189 = vmatprep.subr.bf16.mxu0 0
    %5190 = vmatpush1.bf16.msra.mxu0 %v5024
    %5191 = vmatprep.subr.bf16.mxu0 0
    %5192 = vmatpush1.bf16.msra.mxu0 %v5025
    %5193 = vmatprep.subr.bf16.mxu0 0
    %5194 = vmatpush1.bf16.msra.mxu0 %v5026
    %5195 = vmatprep.subr.bf16.mxu0 0
    %5196 = vmatpush1.bf16.msra.mxu0 %v5027
    %5197 = vmatprep.subr.bf16.mxu0 0
    %5198 = vmatpush1.bf16.msra.mxu0 %v5028
    %5199 = vmatprep.subr.bf16.mxu0 0
    %5200 = vmatpush1.bf16.msra.mxu0 %v5029
    %5201 = vmatprep.subr.bf16.mxu0 0
    %5202 = vmatpush1.bf16.msra.mxu0 %v5030
    %5203 = vmatprep.subr.bf16.mxu0 0
    %5204 = vmatpush1.bf16.msra.mxu0 %v5031
    %5205 = vmatprep.subr.bf16.mxu0 0
    %5206 = vmatpush1.bf16.msra.mxu0 %v5032
    %5207 = vmatprep.subr.bf16.mxu0 0
    %5208 = vmatpush1.bf16.msra.mxu0 %v5033
    %5209 = vmatprep.subr.bf16.mxu0 0
    %5210 = vmatpush1.bf16.msra.mxu0 %v5034
    %5211 = vmatprep.subr.bf16.mxu0 0
    %5212 = vmatpush1.bf16.msra.mxu0 %v5035
    %5213 = vmatprep.mubr.bf16.mxu0 %v4600
    %5214 = vmatmul.mubr.bf16.gmra.mrb[0].mxu0 %v4599
    %v5215 = vpop.f32.mrb[0].mxu0
    %v5216 = vadd.f32 %v5167, %v5215
    %v5217 = vpop.f32.mrb[0].mxu0
    %v5218 = vpop.f32.mrb[0].mxu0
    %v5219 = vadd.f32 %v5170, %v5218
    %v5220 = vpop.f32.mrb[0].mxu0
    %5221 = vmatprep.mubr.bf16.mxu0 %v4608
    %5222 = vmatmul.mubr.bf16.gmra.mrb[0].mxu0 %v4607
    %v5223 = vpop.f32.mrb[0].mxu0
    %v5224 = vadd.f32 %v5175, %v5223
    %v5225 = vpop.f32.mrb[0].mxu0
    %v5226 = vpop.f32.mrb[0].mxu0
    %v5227 = vadd.f32 %v5178, %v5226
    %v5228 = vpop.f32.mrb[0].mxu0
    %5229 = vdwg.mxu0
    %5230 = vmatprep.subr.bf16.mxu0 0
    %5231 = vmatpush1.bf16.msra.mxu0 %v5036
    %5232 = vmatprep.subr.bf16.mxu0 0
    %5233 = vmatpush1.bf16.msra.mxu0 %v5037
    %5234 = vmatprep.subr.bf16.mxu0 0
    %5235 = vmatpush1.bf16.msra.mxu0 %v5038
    %5236 = vmatprep.subr.bf16.mxu0 0
    %5237 = vmatpush1.bf16.msra.mxu0 %v5039
    %5238 = vmatprep.subr.bf16.mxu0 0
    %5239 = vmatpush1.bf16.msra.mxu0 %v5040
    %5240 = vmatprep.subr.bf16.mxu0 0
    %5241 = vmatpush1.bf16.msra.mxu0 %v5041
    %5242 = vmatprep.subr.bf16.mxu0 0
    %5243 = vmatpush1.bf16.msra.mxu0 %v5042
    %5244 = vmatprep.subr.bf16.mxu0 0
    %5245 = vmatpush1.bf16.msra.mxu0 %v5043
    %5246 = vmatprep.subr.bf16.mxu0 0
    %5247 = vmatpush1.bf16.msra.mxu0 %v5044
    %5248 = vmatprep.subr.bf16.mxu0 0
    %5249 = vmatpush1.bf16.msra.mxu0 %v5045
    %5250 = vmatprep.subr.bf16.mxu0 0
    %5251 = vmatpush1.bf16.msra.mxu0 %v5046
    %5252 = vmatprep.subr.bf16.mxu0 0
    %5253 = vmatpush1.bf16.msra.mxu0 %v5047
    %5254 = vmatprep.subr.bf16.mxu0 0
    %5255 = vmatpush1.bf16.msra.mxu0 %v5048
    %5256 = vmatprep.subr.bf16.mxu0 0
    %5257 = vmatpush1.bf16.msra.mxu0 %v5049
    %5258 = vmatprep.subr.bf16.mxu0 0
    %5259 = vmatpush1.bf16.msra.mxu0 %v5050
    %5260 = vmatprep.subr.bf16.mxu0 0
    %5261 = vmatpush1.bf16.msra.mxu0 %v5051
    %5262 = vmatprep.mubr.bf16.mxu0 %v4602
    %5263 = vmatmul.mubr.bf16.gmra.mrb[0].mxu0 %v4601
    %v5264 = vpop.f32.mrb[0].mxu0
    %v5265 = vadd.f32 %v5216, %v5264
    %v5266 = vpop.f32.mrb[0].mxu0
    %v5267 = vpop.f32.mrb[0].mxu0
    %v5268 = vadd.f32 %v5219, %v5267
    %v5269 = vpop.f32.mrb[0].mxu0
    %5270 = vmatprep.mubr.bf16.mxu0 %v4610
    %5271 = vmatmul.mubr.bf16.gmra.mrb[0].mxu0 %v4609
    %v5272 = vpop.f32.mrb[0].mxu0
    %v5273 = vadd.f32 %v5224, %v5272
    %v5274 = vpop.f32.mrb[0].mxu0
    %v5275 = vpop.f32.mrb[0].mxu0
    %v5276 = vadd.f32 %v5227, %v5275
    %v5277 = vpop.f32.mrb[0].mxu0
    %5278 = vdwg.mxu0
    %5279 = vmatprep.subr.bf16.mxu0 0
    %5280 = vmatpush1.bf16.msra.mxu0 %v5052
    %5281 = vmatprep.subr.bf16.mxu0 0
    %5282 = vmatpush1.bf16.msra.mxu0 %v5053
    %5283 = vmatprep.subr.bf16.mxu0 0
    %5284 = vmatpush1.bf16.msra.mxu0 %v5054
    %5285 = vmatprep.subr.bf16.mxu0 0
    %5286 = vmatpush1.bf16.msra.mxu0 %v5055
    %5287 = vmatprep.subr.bf16.mxu0 0
    %5288 = vmatpush1.bf16.msra.mxu0 %v5056
    %5289 = vmatprep.subr.bf16.mxu0 0
    %5290 = vmatpush1.bf16.msra.mxu0 %v5057
    %5291 = vmatprep.subr.bf16.mxu0 0
    %5292 = vmatpush1.bf16.msra.mxu0 %v5058
    %5293 = vmatprep.subr.bf16.mxu0 0
    %5294 = vmatpush1.bf16.msra.mxu0 %v5059
    %5295 = vmatprep.subr.bf16.mxu0 0
    %5296 = vmatpush1.bf16.msra.mxu0 %v5060
    %5297 = vmatprep.subr.bf16.mxu0 0
    %5298 = vmatpush1.bf16.msra.mxu0 %v5061
    %5299 = vmatprep.subr.bf16.mxu0 0
    %5300 = vmatpush1.bf16.msra.mxu0 %v5062
    %5301 = vmatprep.subr.bf16.mxu0 0
    %5302 = vmatpush1.bf16.msra.mxu0 %v5063
    %5303 = vmatprep.subr.bf16.mxu0 0
    %5304 = vmatpush1.bf16.msra.mxu0 %v5064
    %5305 = vmatprep.subr.bf16.mxu0 0
    %5306 = vmatpush1.bf16.msra.mxu0 %v5065
    %5307 = vmatprep.subr.bf16.mxu0 0
    %5308 = vmatpush1.bf16.msra.mxu0 %v5066
    %5309 = vmatprep.subr.bf16.mxu0 0
    %5310 = vmatpush1.bf16.msra.mxu0 %v5067
    %5311 = vmatprep.mubr.bf16.mxu0 %v4604
    %5312 = vmatmul.mubr.bf16.gmra.mrb[0].mxu0 %v4603
    %v5313 = vpop.f32.mrb[0].mxu0
    %v5314 = vadd.f32 %v5265, %v5313
    %v5315 = vpop.f32.mrb[0].mxu0
    %v5316 = vpop.f32.mrb[0].mxu0
    %v5317 = vadd.f32 %v5268, %v5316
    %v5318 = vpop.f32.mrb[0].mxu0
    %5319 = vmatprep.mubr.bf16.mxu0 %v4612
    %5320 = vmatmul.mubr.bf16.gmra.mrb[0].mxu0 %v4611
    %v5321 = vpop.f32.mrb[0].mxu0
    %v5322 = vadd.f32 %v5273, %v5321
    %v5323 = vpop.f32.mrb[0].mxu0
    %v5324 = vpop.f32.mrb[0].mxu0
    %v5325 = vadd.f32 %v5276, %v5324
    %v5326 = vpop.f32.mrb[0].mxu0
    %5327 = vdwg.mxu0
    %5328 = vst [vmem:[#allocation13] sm:$0xff] %v5314
    %5329 = vst [vmem:[#allocation13 + $0x8] sm:$0xff] %v5317
    %5330 = vst [vmem:[#allocation13 + $0x10] sm:$0xff] %v5322
    %5331 = vst [vmem:[#allocation13 + $0x18] sm:$0xff] %v5325
    // Predicated region
    $region54: #{tpu_custom_call.1} parent=1 // pred_check
      _
    $region55: #{tpu_custom_call.1} parent=1 // pred_check_branch
      %5333 = sbr.rel (0) target = $region57
    $region56: #{tpu_custom_call.1} parent=1 // pred_region
      %s5335 = ssub.s32 512, 512
      %5336 = vsyncadd [#allocation4], %s5335
      %s5337 = sshll.u32 [#allocation13], 4
      %s5338 = int_to_ptr.vmem [resolvable:$true] %s5337
      %5343 = dma.vmem_to_hbm [thread:$0]  %s5338, 512, %s7, [#allocation4], 128, 128, 8
    $region57: #{tpu_custom_call.1} parent=1 // pred_fallthru
      _
    // Predicated region
    $region58: #{tpu_custom_call.1} parent=1 // pred_check
      _
    $region59: #{tpu_custom_call.1} parent=1 // pred_check_branch
      %5345 = sbr.rel (0) target = $region61
    $region60: #{tpu_custom_call.1} parent=1 // pred_region
      %5346 = dma.done [#allocation4], 512
    $region61: #{tpu_custom_call.1} parent=1 // pred_fallthru
      _
    %5347 = vsyncpa [#allocation3], 1
    %5348 = vsyncpa [#allocation6], 1
    %5349 = vsyncpa [#allocation9], 1
    %5350 = vsyncpa [#allocation12], 1
    %5351 = vsyncpa [#allocation4], 1

</llo_original>
